<compile_context>
chip_gen: v6e
topology: v6e:2x2x1
jax: 0.10.0
libtpu: 0.0.40
codegen_flags: <defaults>
</compile_context>

<pallas_src>
import jax
import jax.numpy as jnp
from jax.experimental import pallas as pl
from jax.experimental.pallas import tpu as pltpu


def _round_up(x, m):
    return ((x + m - 1) // m) * m


def _pick_row_tile(N, H, W, Cin, CP, Cout, budget_bytes):
    """Largest legal divisor of H whose per-tile VMEM working set fits the budget.

    Legal: TH divides H and (TH == H or TH*W % 128 == 0) so the flat-spatial
    channel-major output block satisfies the (8,128) lane constraint.
    """
    LANE, SUB = 128, 8
    Wi = _round_up(W + 2, SUB)
    Kin = 9 * Cin

    def tile_bytes(th):
        hi = th + 2
        xin = 2 * hi * Wi * _round_up(Kin, LANE) * 2                   # bf16 im2col block, x2 buf
        out = 2 * _round_up(Cout, SUB) * _round_up(th * W, LANE) * 4   # f32 NCHW out block, x2 buf
        scr = hi * Wi * CP * 2                                         # bf16 intermediate scratch
        acc = hi * Wi * CP * 4 + 2 * th * W * CP * 4                   # f32 accumulators + transpose
        wts = 2 * (_round_up(Kin, SUB) * CP * 2 + 9 * CP * CP * 2 + 4 * SUB * LANE * 4)
        return int(1.3 * (xin + out + scr + acc + wts))                # ~30% compiler headroom

    cands = [d for d in range(1, H + 1)
             if H % d == 0 and (d == H or (d * W) % LANE == 0)]
    fitting = [d for d in cands if tile_bytes(d) <= budget_bytes]
    if not fitting:
        # TODO(synk): awkward H (e.g. 572) can leave only tiny legal tiles; a cdiv
        # grid with a masked tail tile would be more robust than divisor tiles.
        return min(cands)
    if N == 1:  # v7x: keep >= 2 row tiles so both TensorCores get work
        multi = [d for d in fitting if H // d >= 2]
        if multi:
            return max(multi)
    return max(fitting)


def _fold_bn(conv_bias, gamma, beta, mean, var, c_pad, eps=1e-5):
    """Fold conv bias + BN(eval) into per-channel scale/shift, lane-padded to c_pad."""
    scale = gamma / jnp.sqrt(var + eps)
    shift = scale * (conv_bias - mean) + beta
    pad = c_pad - scale.shape[0]
    if pad > 0:
        scale = jnp.pad(scale, (0, pad))
        shift = jnp.pad(shift, (0, pad))
    return (scale.reshape(1, -1).astype(jnp.float32),
            shift.reshape(1, -1).astype(jnp.float32))


def _prep_w1(w_oihw, c_pad):
    """(Cout, Cin, 3, 3) -> (9*Cin, c_pad) bf16; row index = (kh*3+kw)*Cin + ci."""
    cout, cin = w_oihw.shape[0], w_oihw.shape[1]
    w = jnp.transpose(w_oihw, (2, 3, 1, 0))                  # (kh, kw, Cin, Cout)
    w = jnp.pad(w, ((0, 0), (0, 0), (0, 0), (0, c_pad - cout)))
    return w.reshape(9 * cin, c_pad).astype(jnp.bfloat16)


def _prep_w2(w_oihw, c_pad):
    """(Cout, Cmid, 3, 3) -> (9, c_pad, c_pad) bf16; tap index = kh*3+kw."""
    cout, cmid = w_oihw.shape[0], w_oihw.shape[1]
    w = jnp.transpose(w_oihw, (2, 3, 1, 0))                  # (kh, kw, Cmid, Cout)
    w = jnp.pad(w, ((0, 0), (0, 0), (0, c_pad - cmid), (0, c_pad - cout)))
    return w.reshape(9, c_pad, c_pad).astype(jnp.bfloat16)


def inconv_forward(x_nchw, params, *, eps=1e-5, vmem_budget_bytes=32 * 1024 * 1024):
    """inconv.forward(x) == double_conv(x), fused into one Pallas kernel per row tile."""
    N, Cin, H, W = x_nchw.shape
    Cout = params["w1"].shape[0]

    LANE, SUB = 128, 8
    CP = _round_up(Cout, LANE)          # lane-padded channels for both conv stages
    Wi = _round_up(W + 2, SUB)          # intermediate (conv1) width incl. halo
    Wp = Wi + 2                         # padded input width

    TH = _pick_row_tile(N, H, W, Cin, CP, Cout, vmem_budget_bytes)
    n_tiles = H // TH
    Hi = TH + 2                         # intermediate rows incl. 1-row halo

    # ---------------- wrapper-side data prep (pure JAX glue) ----------------
    # Cast to bf16 ONCE and build the 3x3 im2col taps here so the kernel's conv1
    # is a single deep-K matmul (K = 9*Cin) with no per-tap casts.
    x = jnp.transpose(x_nchw, (0, 2, 3, 1)).astype(jnp.bfloat16)       # NHWC bf16
    xpad = jnp.pad(x, ((0, 0), (2, 2), (2, Wp - 2 - W), (0, 0)))       # (N, H+4, Wp, Cin)
    taps = [xpad[:, kh:kh + H + 2, kw:kw + Wi, :]
            for kh in range(3) for kw in range(3)]
    xcol = jnp.concatenate(taps, axis=-1)                              # (N, H+2, Wi, 9*Cin)
    starts = jnp.arange(n_tiles) * TH
    win = starts[:, None] + jnp.arange(Hi)[None, :]                    # (n_tiles, Hi)
    xt = xcol[:, win]                                                  # (N, n_tiles, Hi, Wi, 9*Cin)

    w1 = _prep_w1(params["w1"], CP)
    s1, h1 = _fold_bn(params["b1"], params["bn1"]["gamma"], params["bn1"]["beta"],
                      params["bn1"]["mean"], params["bn1"]["var"], CP, eps)
    w2 = _prep_w2(params["w2"], CP)
    s2, h2 = _fold_bn(params["b2"], params["bn2"]["gamma"], params["bn2"]["beta"],
                      params["bn2"]["mean"], params["bn2"]["var"], CP, eps)

    # ------------------------------- kernel ---------------------------------
    def kernel(x_ref, w1_ref, s1_ref, h1_ref, w2_ref, s2_ref, h2_ref, o_ref, y1_ref):
        t = pl.program_id(1)

        # ---- conv1: ONE deep-K (9*Cin) bf16 matmul + folded BN + ReLU ----
        lhs1 = x_ref[...].reshape(Hi * Wi, 9 * Cin)
        acc1 = jnp.dot(lhs1, w1_ref[...], preferred_element_type=jnp.float32)
        a1 = jnp.maximum(acc1 * s1_ref[...] + h1_ref[...], 0.0).reshape(Hi, Wi, CP)

        # Zero the out-of-image halo ring (== conv2's zero padding), computed
        # in-kernel from the grid position (no HBM mask input, no extra DMA).
        row = t * TH - 1 + jax.lax.broadcasted_iota(jnp.int32, (Hi, Wi, 1), 0)
        col = jax.lax.broadcasted_iota(jnp.int32, (Hi, Wi, 1), 1)
        valid = (row >= 0) & (row < H) & (col >= 1) & (col <= W)
        y1_ref[...] = jnp.where(valid, a1, 0.0).astype(jnp.bfloat16)

        # ---- conv2: 9 K=CP bf16 matmuls from shifted bf16 VMEM-scratch windows ----
        acc2 = jnp.zeros((TH * W, CP), jnp.float32)
        for kh in range(3):
            for kw in range(3):
                lhs2 = y1_ref[kh:kh + TH, kw:kw + W, :].reshape(TH * W, CP)
                acc2 = acc2 + jnp.dot(lhs2, w2_ref[kh * 3 + kw],
                                      preferred_element_type=jnp.float32)
        y2 = jnp.maximum(acc2 * s2_ref[...] + h2_ref[...], 0.0)

        # Channel-major store of exactly the unpadded result: the output array is
        # already NCHW (flat spatial), so no post-kernel slice/transpose HBM pass.
        o_ref[...] = jnp.transpose(y2)[:Cout, :].astype(o_ref.dtype)

    out = pl.pallas_call(
        kernel,
        # f32 output to match the PyTorch module; switch to bf16 here if the
        # consumer accepts it (halves output HBM traffic on v6e/v7x).
        out_shape=jax.ShapeDtypeStruct((N, Cout, H * W), jnp.float32),
        grid_spec=pltpu.PrefetchScalarGridSpec(
            num_scalar_prefetch=0,
            grid=(N, n_tiles),
            in_specs=[
                pl.BlockSpec((None, None, Hi, Wi, 9 * Cin), lambda n, t: (n, t, 0, 0, 0)),
                pl.BlockSpec((9 * Cin, CP), lambda n, t: (0, 0)),
                pl.BlockSpec((1, CP), lambda n, t: (0, 0)),
                pl.BlockSpec((1, CP), lambda n, t: (0, 0)),
                pl.BlockSpec((9, CP, CP), lambda n, t: (0, 0, 0)),
                pl.BlockSpec((1, CP), lambda n, t: (0, 0)),
                pl.BlockSpec((1, CP), lambda n, t: (0, 0)),
            ],
            out_specs=pl.BlockSpec((None, Cout, TH * W), lambda n, t: (n, 0, t)),
            scratch_shapes=[pltpu.VMEM((Hi, Wi, CP), jnp.bfloat16)],
        ),
        compiler_params=pltpu.CompilerParams(
            dimension_semantics=("parallel", "parallel"),
            vmem_limit_bytes=48 * 1024 * 1024,   # leaves headroom inside v7x's 64 MiB/TC
        ),
    )(xt, w1, s1, h1, w2, s2, h2)

    return out.reshape(N, Cout, H, W)            # free (contiguous) reshape, already NCHW


# -------------------------- reference & test setup --------------------------
def _reference_double_conv(x_nchw, params, eps=1e-5):
    """Pure-JAX reference: Conv3x3(pad=1) + BN(eval) + ReLU, twice (f32 accurate)."""
    def block(x, w, bias, bn):
        y = jax.lax.conv_general_dilated(
            x, w, window_strides=(1, 1), padding=((1, 1), (1, 1)),
            dimension_numbers=("NCHW", "OIHW", "NCHW"),
            precision=jax.lax.Precision.HIGHEST)
        y = y + bias[None, :, None, None]
        inv = (bn["gamma"] / jnp.sqrt(bn["var"] + eps))[None, :, None, None]
        y = (y - bn["mean"][None, :, None, None]) * inv + bn["beta"][None, :, None, None]
        return jnp.maximum(y, 0.0)
    y = block(x_nchw, params["w1"], params["b1"], params["bn1"])
    y = block(y, params["w2"], params["b2"], params["bn2"])
    return y


def init_inconv_params(key, in_ch, out_ch):
    """Deterministic init of double_conv params (conv1 + bn1 + conv2 + bn2)."""
    k = jax.random.split(key, 4)
    w1 = jax.random.normal(k[0], (out_ch, in_ch, 3, 3), jnp.float32) * 0.1
    b1 = jax.random.normal(k[1], (out_ch,), jnp.float32) * 0.1
    w2 = jax.random.normal(k[2], (out_ch, out_ch, 3, 3), jnp.float32) * 0.1
    b2 = jax.random.normal(k[3], (out_ch,), jnp.float32) * 0.1
    bn1 = dict(gamma=jnp.ones((out_ch,)), beta=jnp.zeros((out_ch,)),
               mean=jnp.zeros((out_ch,)), var=jnp.ones((out_ch,)))
    bn2 = dict(gamma=jnp.ones((out_ch,)), beta=jnp.zeros((out_ch,)),
               mean=jnp.zeros((out_ch,)), var=jnp.ones((out_ch,)))
    return dict(w1=w1, b1=b1, bn1=bn1, w2=w2, b2=b2, bn2=bn2)


if __name__ == "__main__":
    key = jax.random.PRNGKey(0)
    kx, kp = jax.random.split(key)

    N, in_ch, out_ch, H, W = 2, 4, 8, 16, 16
    x = jax.random.normal(kx, (N, in_ch, H, W), jnp.float32)
    params = init_inconv_params(kp, in_ch, out_ch)

    y = jax.jit(inconv_forward)(x, params)
    y = jax.block_until_ready(y)
    assert y.shape == (N, out_ch, H, W), y.shape

    y_ref = _reference_double_conv(x, params)
    err = float(jnp.max(jnp.abs(y - y_ref)))
    assert err < 5e-2, f"kernel mismatch vs reference, max abs err = {err}"
    print("KERNEL_OK")
</pallas_src>

<mosaic_0001>
module attributes {stable_mosaic.version = 11 : i64} {
  func.func @kernel(%arg0: i32, %arg1: i32, %arg2: memref<1x1x18x24x36xbf16, #tpu.memory_space<vmem>>, %arg3: memref<36x128xbf16, #tpu.memory_space<vmem>>, %arg4: memref<1x128xf32, #tpu.memory_space<vmem>>, %arg5: memref<1x128xf32, #tpu.memory_space<vmem>>, %arg6: memref<9x128x128xbf16, #tpu.memory_space<vmem>>, %arg7: memref<1x128xf32, #tpu.memory_space<vmem>>, %arg8: memref<1x128xf32, #tpu.memory_space<vmem>>, %arg9: memref<1x8x256xf32, #tpu.memory_space<vmem>>, %arg10: memref<18x24x128xbf16, #tpu.memory_space<vmem>>) attributes {dimension_semantics = [#tpu.dimension_semantics<parallel>, #tpu.dimension_semantics<parallel>], iteration_bounds = array<i64: 2, 1>, scalar_prefetch = 0 : i64, scratch_operands = 1 : i64, tpu.core_type = #tpu.core_type<tc>, window_params = [{transform_indices = @transform_0, window_bounds = array<i64: 1, 1, 18, 24, 36>}, {pipeline_mode = #tpu.pipeline_mode<synchronous>, transform_indices = @transform_1, window_bounds = array<i64: 36, 128>}, {pipeline_mode = #tpu.pipeline_mode<synchronous>, transform_indices = @transform_2, window_bounds = array<i64: 1, 128>}, {pipeline_mode = #tpu.pipeline_mode<synchronous>, transform_indices = @transform_3, window_bounds = array<i64: 1, 128>}, {pipeline_mode = #tpu.pipeline_mode<synchronous>, transform_indices = @transform_4, window_bounds = array<i64: 9, 128, 128>}, {pipeline_mode = #tpu.pipeline_mode<synchronous>, transform_indices = @transform_5, window_bounds = array<i64: 1, 128>}, {pipeline_mode = #tpu.pipeline_mode<synchronous>, transform_indices = @transform_6, window_bounds = array<i64: 1, 128>}, {transform_indices = @transform_7, window_bounds = array<i64: 1, 8, 256>}]} {
    %c0 = arith.constant 0 : index
    %c0_0 = arith.constant 0 : index
    %c0_1 = arith.constant 0 : index
    %c0_2 = arith.constant 0 : index
    %c0_3 = arith.constant 0 : index
    %0 = vector.load %arg2[%c0, %c0_0, %c0_1, %c0_2, %c0_3] : memref<1x1x18x24x36xbf16, #tpu.memory_space<vmem>>, vector<1x1x18x24x36xbf16>
    %1 = vector.shape_cast %0 : vector<1x1x18x24x36xbf16> to vector<18x24x36xbf16>
    %2 = vector.shape_cast %1 : vector<18x24x36xbf16> to vector<432x36xbf16>
    %c0_4 = arith.constant 0 : index
    %c0_5 = arith.constant 0 : index
    %3 = vector.load %arg3[%c0_4, %c0_5] : memref<36x128xbf16, #tpu.memory_space<vmem>>, vector<36x128xbf16>
    %cst = arith.constant dense<0.000000e+00> : vector<432x128xf32>
    %4 = tpu.matmul %2, %3, %cst {dimension_numbers = #tpu.dot_dimension_numbers<[1], [0], [0], [1], [0, 0, 1, 1], [], []>} : vector<432x36xbf16>, vector<36x128xbf16>, vector<432x128xf32> -> vector<432x128xf32>
    %c0_6 = arith.constant 0 : index
    %c0_7 = arith.constant 0 : index
    %5 = vector.load %arg4[%c0_6, %c0_7] : memref<1x128xf32, #tpu.memory_space<vmem>>, vector<1x128xf32>
    %6 = vector.broadcast %5 : vector<1x128xf32> to vector<432x128xf32>
    %7 = arith.mulf %4, %6 : vector<432x128xf32>
    %c0_8 = arith.constant 0 : index
    %c0_9 = arith.constant 0 : index
    %8 = vector.load %arg5[%c0_8, %c0_9] : memref<1x128xf32, #tpu.memory_space<vmem>>, vector<1x128xf32>
    %9 = vector.broadcast %8 : vector<1x128xf32> to vector<432x128xf32>
    %10 = arith.addf %7, %9 : vector<432x128xf32>
    %cst_10 = arith.constant 0.000000e+00 : f32
    %11 = vector.broadcast %cst_10 : f32 to vector<432x128xf32>
    %12 = arith.maximumf %10, %11 : vector<432x128xf32>
    %13 = vector.shape_cast %12 : vector<432x128xf32> to vector<18x24x128xf32>
    %c16_i32 = arith.constant 16 : i32
    %14 = arith.muli %arg1, %c16_i32 : i32
    %c1_i32 = arith.constant 1 : i32
    %15 = arith.subi %14, %c1_i32 : i32
    %16 = tpu.iota {dimensions = array<i32: 0>} : vector<18x24x1xi32>
    %17 = vector.broadcast %15 : i32 to vector<18x24x1xi32>
    %18 = arith.addi %17, %16 : vector<18x24x1xi32>
    %19 = tpu.iota {dimensions = array<i32: 1>} : vector<18x24x1xi32>
    %c0_i32 = arith.constant 0 : i32
    %20 = vector.broadcast %c0_i32 : i32 to vector<18x24x1xi32>
    %21 = arith.cmpi sge, %18, %20 : vector<18x24x1xi32>
    %c16_i32_11 = arith.constant 16 : i32
    %22 = vector.broadcast %c16_i32_11 : i32 to vector<18x24x1xi32>
    %23 = arith.cmpi slt, %18, %22 : vector<18x24x1xi32>
    %24 = arith.andi %21, %23 : vector<18x24x1xi1>
    %c1_i32_12 = arith.constant 1 : i32
    %25 = vector.broadcast %c1_i32_12 : i32 to vector<18x24x1xi32>
    %26 = arith.cmpi sge, %19, %25 : vector<18x24x1xi32>
    %27 = arith.andi %24, %26 : vector<18x24x1xi1>
    %c16_i32_13 = arith.constant 16 : i32
    %28 = vector.broadcast %c16_i32_13 : i32 to vector<18x24x1xi32>
    %29 = arith.cmpi sle, %19, %28 : vector<18x24x1xi32>
    %30 = arith.andi %27, %29 : vector<18x24x1xi1>
    %cst_14 = arith.constant 0.000000e+00 : f32
    %31 = vector.shape_cast %30 : vector<18x24x1xi1> to vector<18x24x1xi1>
    %32 = vector.broadcast %31 : vector<18x24x1xi1> to vector<18x24x128xi1>
    %33 = vector.broadcast %cst_14 : f32 to vector<18x24x128xf32>
    %34 = arith.select %32, %13, %33 : vector<18x24x128xi1>, vector<18x24x128xf32>
    %35 = arith.truncf %34 : vector<18x24x128xf32> to vector<18x24x128xbf16>
    %c0_15 = arith.constant 0 : index
    %c0_16 = arith.constant 0 : index
    %c0_17 = arith.constant 0 : index
    %36 = vector.load %arg10[%c0_15, %c0_16, %c0_17] : memref<18x24x128xbf16, #tpu.memory_space<vmem>>, vector<18x24x128xbf16>
    tpu.vector_store %arg10[%c0_15, %c0_16, %c0_17], %35 {strides = array<i32>} : memref<18x24x128xbf16, #tpu.memory_space<vmem>>, vector<18x24x128xbf16>,
    %cst_18 = arith.constant 0.000000e+00 : f32
    %37 = vector.broadcast %cst_18 : f32 to vector<256x128xf32>
    %c0_19 = arith.constant 0 : index
    %c0_20 = arith.constant 0 : index
    %c0_21 = arith.constant 0 : index
    %38 = vector.load %arg10[%c0_19, %c0_20, %c0_21] : memref<18x24x128xbf16, #tpu.memory_space<vmem>>, vector<16x16x128xbf16>
    %39 = vector.shape_cast %38 : vector<16x16x128xbf16> to vector<256x128xbf16>
    %c0_22 = arith.constant 0 : index
    %c0_23 = arith.constant 0 : index
    %c0_24 = arith.constant 0 : index
    %40 = vector.load %arg6[%c0_22, %c0_23, %c0_24] : memref<9x128x128xbf16, #tpu.memory_space<vmem>>, vector<1x128x128xbf16>
    %41 = vector.shape_cast %40 : vector<1x128x128xbf16> to vector<128x128xbf16>
    %cst_25 = arith.constant dense<0.000000e+00> : vector<256x128xf32>
    %42 = tpu.matmul %39, %41, %cst_25 {dimension_numbers = #tpu.dot_dimension_numbers<[1], [0], [0], [1], [0, 0, 1, 1], [], []>} : vector<256x128xbf16>, vector<128x128xbf16>, vector<256x128xf32> -> vector<256x128xf32>
    %43 = arith.addf %37, %42 : vector<256x128xf32>
    %c0_26 = arith.constant 0 : index
    %c1 = arith.constant 1 : index
    %c0_27 = arith.constant 0 : index
    %44 = vector.load %arg10[%c0_26, %c1, %c0_27] : memref<18x24x128xbf16, #tpu.memory_space<vmem>>, vector<16x16x128xbf16>
    %45 = vector.shape_cast %44 : vector<16x16x128xbf16> to vector<256x128xbf16>
    %c1_28 = arith.constant 1 : index
    %c0_29 = arith.constant 0 : index
    %c0_30 = arith.constant 0 : index
    %46 = vector.load %arg6[%c1_28, %c0_29, %c0_30] : memref<9x128x128xbf16, #tpu.memory_space<vmem>>, vector<1x128x128xbf16>
    %47 = vector.shape_cast %46 : vector<1x128x128xbf16> to vector<128x128xbf16>
    %cst_31 = arith.constant dense<0.000000e+00> : vector<256x128xf32>
    %48 = tpu.matmul %45, %47, %cst_31 {dimension_numbers = #tpu.dot_dimension_numbers<[1], [0], [0], [1], [0, 0, 1, 1], [], []>} : vector<256x128xbf16>, vector<128x128xbf16>, vector<256x128xf32> -> vector<256x128xf32>
    %49 = arith.addf %43, %48 : vector<256x128xf32>
    %c0_32 = arith.constant 0 : index
    %c2 = arith.constant 2 : index
    %c0_33 = arith.constant 0 : index
    %50 = vector.load %arg10[%c0_32, %c2, %c0_33] : memref<18x24x128xbf16, #tpu.memory_space<vmem>>, vector<16x16x128xbf16>
    %51 = vector.shape_cast %50 : vector<16x16x128xbf16> to vector<256x128xbf16>
    %c2_34 = arith.constant 2 : index
    %c0_35 = arith.constant 0 : index
    %c0_36 = arith.constant 0 : index
    %52 = vector.load %arg6[%c2_34, %c0_35, %c0_36] : memref<9x128x128xbf16, #tpu.memory_space<vmem>>, vector<1x128x128xbf16>
    %53 = vector.shape_cast %52 : vector<1x128x128xbf16> to vector<128x128xbf16>
    %cst_37 = arith.constant dense<0.000000e+00> : vector<256x128xf32>
    %54 = tpu.matmul %51, %53, %cst_37 {dimension_numbers = #tpu.dot_dimension_numbers<[1], [0], [0], [1], [0, 0, 1, 1], [], []>} : vector<256x128xbf16>, vector<128x128xbf16>, vector<256x128xf32> -> vector<256x128xf32>
    %55 = arith.addf %49, %54 : vector<256x128xf32>
    %c1_38 = arith.constant 1 : index
    %c0_39 = arith.constant 0 : index
    %c0_40 = arith.constant 0 : index
    %56 = vector.load %arg10[%c1_38, %c0_39, %c0_40] : memref<18x24x128xbf16, #tpu.memory_space<vmem>>, vector<16x16x128xbf16>
    %57 = vector.shape_cast %56 : vector<16x16x128xbf16> to vector<256x128xbf16>
    %c3 = arith.constant 3 : index
    %c0_41 = arith.constant 0 : index
    %c0_42 = arith.constant 0 : index
    %58 = vector.load %arg6[%c3, %c0_41, %c0_42] : memref<9x128x128xbf16, #tpu.memory_space<vmem>>, vector<1x128x128xbf16>
    %59 = vector.shape_cast %58 : vector<1x128x128xbf16> to vector<128x128xbf16>
    %cst_43 = arith.constant dense<0.000000e+00> : vector<256x128xf32>
    %60 = tpu.matmul %57, %59, %cst_43 {dimension_numbers = #tpu.dot_dimension_numbers<[1], [0], [0], [1], [0, 0, 1, 1], [], []>} : vector<256x128xbf16>, vector<128x128xbf16>, vector<256x128xf32> -> vector<256x128xf32>
    %61 = arith.addf %55, %60 : vector<256x128xf32>
    %c1_44 = arith.constant 1 : index
    %c1_45 = arith.constant 1 : index
    %c0_46 = arith.constant 0 : index
    %62 = vector.load %arg10[%c1_44, %c1_45, %c0_46] : memref<18x24x128xbf16, #tpu.memory_space<vmem>>, vector<16x16x128xbf16>
    %63 = vector.shape_cast %62 : vector<16x16x128xbf16> to vector<256x128xbf16>
    %c4 = arith.constant 4 : index
    %c0_47 = arith.constant 0 : index
    %c0_48 = arith.constant 0 : index
    %64 = vector.load %arg6[%c4, %c0_47, %c0_48] : memref<9x128x128xbf16, #tpu.memory_space<vmem>>, vector<1x128x128xbf16>
    %65 = vector.shape_cast %64 : vector<1x128x128xbf16> to vector<128x128xbf16>
    %cst_49 = arith.constant dense<0.000000e+00> : vector<256x128xf32>
    %66 = tpu.matmul %63, %65, %cst_49 {dimension_numbers = #tpu.dot_dimension_numbers<[1], [0], [0], [1], [0, 0, 1, 1], [], []>} : vector<256x128xbf16>, vector<128x128xbf16>, vector<256x128xf32> -> vector<256x128xf32>
    %67 = arith.addf %61, %66 : vector<256x128xf32>
    %c1_50 = arith.constant 1 : index
    %c2_51 = arith.constant 2 : index
    %c0_52 = arith.constant 0 : index
    %68 = vector.load %arg10[%c1_50, %c2_51, %c0_52] : memref<18x24x128xbf16, #tpu.memory_space<vmem>>, vector<16x16x128xbf16>
    %69 = vector.shape_cast %68 : vector<16x16x128xbf16> to vector<256x128xbf16>
    %c5 = arith.constant 5 : index
    %c0_53 = arith.constant 0 : index
    %c0_54 = arith.constant 0 : index
    %70 = vector.load %arg6[%c5, %c0_53, %c0_54] : memref<9x128x128xbf16, #tpu.memory_space<vmem>>, vector<1x128x128xbf16>
    %71 = vector.shape_cast %70 : vector<1x128x128xbf16> to vector<128x128xbf16>
    %cst_55 = arith.constant dense<0.000000e+00> : vector<256x128xf32>
    %72 = tpu.matmul %69, %71, %cst_55 {dimension_numbers = #tpu.dot_dimension_numbers<[1], [0], [0], [1], [0, 0, 1, 1], [], []>} : vector<256x128xbf16>, vector<128x128xbf16>, vector<256x128xf32> -> vector<256x128xf32>
    %73 = arith.addf %67, %72 : vector<256x128xf32>
    %c2_56 = arith.constant 2 : index
    %c0_57 = arith.constant 0 : index
    %c0_58 = arith.constant 0 : index
    %74 = vector.load %arg10[%c2_56, %c0_57, %c0_58] : memref<18x24x128xbf16, #tpu.memory_space<vmem>>, vector<16x16x128xbf16>
    %75 = vector.shape_cast %74 : vector<16x16x128xbf16> to vector<256x128xbf16>
    %c6 = arith.constant 6 : index
    %c0_59 = arith.constant 0 : index
    %c0_60 = arith.constant 0 : index
    %76 = vector.load %arg6[%c6, %c0_59, %c0_60] : memref<9x128x128xbf16, #tpu.memory_space<vmem>>, vector<1x128x128xbf16>
    %77 = vector.shape_cast %76 : vector<1x128x128xbf16> to vector<128x128xbf16>
    %cst_61 = arith.constant dense<0.000000e+00> : vector<256x128xf32>
    %78 = tpu.matmul %75, %77, %cst_61 {dimension_numbers = #tpu.dot_dimension_numbers<[1], [0], [0], [1], [0, 0, 1, 1], [], []>} : vector<256x128xbf16>, vector<128x128xbf16>, vector<256x128xf32> -> vector<256x128xf32>
    %79 = arith.addf %73, %78 : vector<256x128xf32>
    %c2_62 = arith.constant 2 : index
    %c1_63 = arith.constant 1 : index
    %c0_64 = arith.constant 0 : index
    %80 = vector.load %arg10[%c2_62, %c1_63, %c0_64] : memref<18x24x128xbf16, #tpu.memory_space<vmem>>, vector<16x16x128xbf16>
    %81 = vector.shape_cast %80 : vector<16x16x128xbf16> to vector<256x128xbf16>
    %c7 = arith.constant 7 : index
    %c0_65 = arith.constant 0 : index
    %c0_66 = arith.constant 0 : index
    %82 = vector.load %arg6[%c7, %c0_65, %c0_66] : memref<9x128x128xbf16, #tpu.memory_space<vmem>>, vector<1x128x128xbf16>
    %83 = vector.shape_cast %82 : vector<1x128x128xbf16> to vector<128x128xbf16>
    %cst_67 = arith.constant dense<0.000000e+00> : vector<256x128xf32>
    %84 = tpu.matmul %81, %83, %cst_67 {dimension_numbers = #tpu.dot_dimension_numbers<[1], [0], [0], [1], [0, 0, 1, 1], [], []>} : vector<256x128xbf16>, vector<128x128xbf16>, vector<256x128xf32> -> vector<256x128xf32>
    %85 = arith.addf %79, %84 : vector<256x128xf32>
    %c2_68 = arith.constant 2 : index
    %c2_69 = arith.constant 2 : index
    %c0_70 = arith.constant 0 : index
    %86 = vector.load %arg10[%c2_68, %c2_69, %c0_70] : memref<18x24x128xbf16, #tpu.memory_space<vmem>>, vector<16x16x128xbf16>
    %87 = vector.shape_cast %86 : vector<16x16x128xbf16> to vector<256x128xbf16>
    %c8 = arith.constant 8 : index
    %c0_71 = arith.constant 0 : index
    %c0_72 = arith.constant 0 : index
    %88 = vector.load %arg6[%c8, %c0_71, %c0_72] : memref<9x128x128xbf16, #tpu.memory_space<vmem>>, vector<1x128x128xbf16>
    %89 = vector.shape_cast %88 : vector<1x128x128xbf16> to vector<128x128xbf16>
    %cst_73 = arith.constant dense<0.000000e+00> : vector<256x128xf32>
    %90 = tpu.matmul %87, %89, %cst_73 {dimension_numbers = #tpu.dot_dimension_numbers<[1], [0], [0], [1], [0, 0, 1, 1], [], []>} : vector<256x128xbf16>, vector<128x128xbf16>, vector<256x128xf32> -> vector<256x128xf32>
    %91 = arith.addf %85, %90 : vector<256x128xf32>
    %c0_74 = arith.constant 0 : index
    %c0_75 = arith.constant 0 : index
    %92 = vector.load %arg7[%c0_74, %c0_75] : memref<1x128xf32, #tpu.memory_space<vmem>>, vector<1x128xf32>
    %93 = vector.broadcast %92 : vector<1x128xf32> to vector<256x128xf32>
    %94 = arith.mulf %91, %93 : vector<256x128xf32>
    %c0_76 = arith.constant 0 : index
    %c0_77 = arith.constant 0 : index
    %95 = vector.load %arg8[%c0_76, %c0_77] : memref<1x128xf32, #tpu.memory_space<vmem>>, vector<1x128xf32>
    %96 = vector.broadcast %95 : vector<1x128xf32> to vector<256x128xf32>
    %97 = arith.addf %94, %96 : vector<256x128xf32>
    %cst_78 = arith.constant 0.000000e+00 : f32
    %98 = vector.broadcast %cst_78 : f32 to vector<256x128xf32>
    %99 = arith.maximumf %97, %98 : vector<256x128xf32>
    %100 = tpu.transpose %99, [1, 0] : vector<256x128xf32> -> vector<128x256xf32>
    %101 = vector.extract_strided_slice %100 {offsets = [0, 0], sizes = [8, 256], strides = [1, 1]} : vector<128x256xf32> to vector<8x256xf32>
    %c0_79 = arith.constant 0 : index
    %c0_80 = arith.constant 0 : index
    %c0_81 = arith.constant 0 : index
    %102 = vector.load %arg9[%c0_79, %c0_80, %c0_81] : memref<1x8x256xf32, #tpu.memory_space<vmem>>, vector<1x8x256xf32>
    %103 = vector.shape_cast %102 : vector<1x8x256xf32> to vector<8x256xf32>
    %104 = vector.shape_cast %101 : vector<8x256xf32> to vector<1x8x256xf32>
    tpu.vector_store %arg9[%c0_79, %c0_80, %c0_81], %104 {strides = array<i32>} : memref<1x8x256xf32, #tpu.memory_space<vmem>>, vector<1x8x256xf32>,
    return
  }
  func.func @transform_0(%arg0: i32, %arg1: i32) -> (i32, i32, i32, i32, i32) {
    %c0_i32 = arith.constant 0 : i32
    %c0_i32_0 = arith.constant 0 : i32
    %c0_i32_1 = arith.constant 0 : i32
    %c0_i32_2 = arith.constant 0 : i32
    return %arg0, %arg1, %c0_i32, %c0_i32_0, %c0_i32_1 : i32, i32, i32, i32, i32
  }
  func.func @transform_1(%arg0: i32, %arg1: i32) -> (i32, i32) {
    %c0_i32 = arith.constant 0 : i32
    %c0_i32_0 = arith.constant 0 : i32
    %c0_i32_1 = arith.constant 0 : i32
    return %c0_i32, %c0_i32_0 : i32, i32
  }
  func.func @transform_2(%arg0: i32, %arg1: i32) -> (i32, i32) {
    %c0_i32 = arith.constant 0 : i32
    %c0_i32_0 = arith.constant 0 : i32
    %c0_i32_1 = arith.constant 0 : i32
    return %c0_i32, %c0_i32_0 : i32, i32
  }
  func.func @transform_3(%arg0: i32, %arg1: i32) -> (i32, i32) {
    %c0_i32 = arith.constant 0 : i32
    %c0_i32_0 = arith.constant 0 : i32
    %c0_i32_1 = arith.constant 0 : i32
    return %c0_i32, %c0_i32_0 : i32, i32
  }
  func.func @transform_4(%arg0: i32, %arg1: i32) -> (i32, i32, i32) {
    %c0_i32 = arith.constant 0 : i32
    %c0_i32_0 = arith.constant 0 : i32
    %c0_i32_1 = arith.constant 0 : i32
    %c0_i32_2 = arith.constant 0 : i32
    return %c0_i32, %c0_i32_0, %c0_i32_1 : i32, i32, i32
  }
  func.func @transform_5(%arg0: i32, %arg1: i32) -> (i32, i32) {
    %c0_i32 = arith.constant 0 : i32
    %c0_i32_0 = arith.constant 0 : i32
    %c0_i32_1 = arith.constant 0 : i32
    return %c0_i32, %c0_i32_0 : i32, i32
  }
  func.func @transform_6(%arg0: i32, %arg1: i32) -> (i32, i32) {
    %c0_i32 = arith.constant 0 : i32
    %c0_i32_0 = arith.constant 0 : i32
    %c0_i32_1 = arith.constant 0 : i32
    return %c0_i32, %c0_i32_0 : i32, i32
  }
  func.func @transform_7(%arg0: i32, %arg1: i32) -> (i32, i32, i32) {
    %c0_i32 = arith.constant 0 : i32
    %c0_i32_0 = arith.constant 0 : i32
    return %arg0, %c0_i32, %arg1 : i32, i32, i32
  }
}

</mosaic_0001>

<llo_original>
// kernel: inconv_forward.1
$region0: #{inconv_forward.1}
  #allocation0 [shape = 'u32[]', space=smem, size = 0x4, offset = 0x4, fixed_abs, tag = 'smem constant byte address 0x4 - core index']
  #allocation1 [shape = 'u32[144,128]{1,0:T(1,128)}', space=vmem, size = 0x12000, scoped, tag = 'internal scratch']
  #allocation2 [shape = 'bf16[18,24,128]{2,1,0:T(8,128)(2,1)}', space=vmem, size = 0x1b000, scoped, tag = 'scratch operand']
  %s0 = inlined_call_operand.vmem [shape: bf16[2,1,18,24,36], index: 0, kind: input, shape index: {}]
  %s1 = inlined_call_operand.vmem [shape: bf16[36,128], index: 1, kind: input, shape index: {}]
  %s2 = inlined_call_operand.vmem [shape: f32[1,128], index: 2, kind: input, shape index: {}]
  %s3 = inlined_call_operand.vmem [shape: f32[1,128], index: 3, kind: input, shape index: {}]
  %s4 = inlined_call_operand.vmem [shape: bf16[9,128,128], index: 4, kind: input, shape index: {}]
  %s5 = inlined_call_operand.vmem [shape: f32[1,128], index: 5, kind: input, shape index: {}]
  %s6 = inlined_call_operand.vmem [shape: f32[1,128], index: 6, kind: input, shape index: {}]
  %s7 = inlined_call_operand.vmem [shape: f32[2,8,256], index: 7, kind: output, shape index: {}]
  %s8 = sld [smem:[#allocation0]]
  $region61: #{inconv_forward.1} parent=0
    _
  %s10 = ssub.s32 1, %s8
  %s11 = scalar_select 0, %s10, %s8
  loop: start=0, step=1, limit=4
  $region2: #{inconv_forward.1} parent=0 // loop_pre_header
    _
  $region3: #{inconv_forward.1} parent=0 // loop_header
    %s13 = sphi 0, %s17
    %p14 = scmp.ge.s32.totalorder %s13, 4
    %s20 = sphi 0, %s32
    %s21 = sphi 0, %s28
    %s22 = sphi 0, %s20
    %s23 = sphi 0, %s21
    %s24 = sphi 0, %s22
    %s25 = sphi 0, %s23
    %s37 = sphi 0, %s39
    %s40 = sphi 0, %s37
    %s41 = sphi 0, %s40
    %s57 = sphi 0, %s41
    %s61 = sphi 0, %s61
    %s63 = sphi 0, %s61
    %s64 = sphi 0, %s63
    %s78 = sphi 0, %s64
    %s82 = sphi 0, %s82
    %s84 = sphi 0, %s82
    %s85 = sphi 0, %s84
    %s99 = sphi 0, %s85
    %s103 = sphi 0, %s103
    %s105 = sphi 0, %s103
    %s106 = sphi 0, %s105
    %s120 = sphi 0, %s106
    %s124 = sphi 0, %s124
    %s126 = sphi 0, %s124
    %s127 = sphi 0, %s126
    %s141 = sphi 0, %s127
    %s145 = sphi 0, %s145
    %s147 = sphi 0, %s145
    %s148 = sphi 0, %s147
    %s162 = sphi 0, %s148
    %s166 = sphi 0, %s166
    %s168 = sphi 0, %s166
    %s169 = sphi 0, %s168
    %s183 = sphi 0, %s169
    %s191 = sphi 0, %s193
    %s194 = sphi 0, %s191
    %s195 = sphi 0, %s194
    %s211 = sphi 0, %s195
  $region4: #{inconv_forward.1} parent=0 // loop_header_branch
    %16 = sbr.rel (%p14) target = $region8
  $region5: #{inconv_forward.1} parent=0 // loop_body
    %s18 = ssub.s32 %s13, 1
    %s19 = ssub.s32 %s13, 2
    %s26 = sadd.s32 1, %s21
    %p27 = scmp.ge.s32.totalorder %s26, 1
    %s28 = scalar_select %p27, 0, %s26
    %s29 = sadd.s32 1, %s20
    %s30 = scalar_select %p27, %s29, %s20
    %p31 = scmp.ge.s32.totalorder %s30, 2
    %s32 = scalar_select %p31, 0, %s30
    %s33 = ssub.s32 %s20, %s32
    %s34 = ssub.s32 %s21, %s28
    %s35 = sor.u32 %s33, %s34
    %p36 = scmp.eq.s32.totalorder %s35, 0
    %s38 = sadd.s32 %s37, 1
    %s39 = scalar_select %p36, %s37, %s38
    %p42 = pneg %p36
    %p43 = scmp.eq.s32.totalorder %s13, 1
    %p44 = por %p42, %p43
    %p45 = scmp.ne.s32.totalorder %s37, %s40
    %p46 = scmp.eq.s32.totalorder %s13, 0
    %p47 = por %p45, %p46
    %p48 = scmp.ne.s32.totalorder %s37, %s40
    %p49 = scmp.eq.s32.totalorder %s18, 1
    %p50 = por %p48, %p49
    %p51 = scmp.ne.s32.totalorder %s40, %s41
    %p52 = scmp.eq.s32.totalorder %s18, 0
    %p53 = por %p51, %p52
    %p54 = scmp.ne.s32.totalorder %s40, %s41
    %p55 = scmp.eq.s32.totalorder %s19, 1
    %p56 = por %p54, %p55
    %p58 = scmp.ne.s32.totalorder %s41, %s57
    %p59 = scmp.eq.s32.totalorder %s19, 0
    %p60 = por %p58, %p59
    %s62 = sadd.s32 %s61, 1
    %p65 = scmp.eq.s32.totalorder %s13, 1
    %p66 = scmp.ne.s32.totalorder %s61, %s63
    %p67 = scmp.eq.s32.totalorder %s13, 0
    %p68 = por %p66, %p67
    %p69 = scmp.ne.s32.totalorder %s61, %s63
    %p70 = scmp.eq.s32.totalorder %s18, 1
    %p71 = por %p69, %p70
    %p72 = scmp.ne.s32.totalorder %s63, %s64
    %p73 = scmp.eq.s32.totalorder %s18, 0
    %p74 = por %p72, %p73
    %p75 = scmp.ne.s32.totalorder %s63, %s64
    %p76 = scmp.eq.s32.totalorder %s19, 1
    %p77 = por %p75, %p76
    %p79 = scmp.ne.s32.totalorder %s64, %s78
    %p80 = scmp.eq.s32.totalorder %s19, 0
    %p81 = por %p79, %p80
    %s83 = sadd.s32 %s82, 1
    %p86 = scmp.eq.s32.totalorder %s13, 1
    %p87 = scmp.ne.s32.totalorder %s82, %s84
    %p88 = scmp.eq.s32.totalorder %s13, 0
    %p89 = por %p87, %p88
    %p90 = scmp.ne.s32.totalorder %s82, %s84
    %p91 = scmp.eq.s32.totalorder %s18, 1
    %p92 = por %p90, %p91
    %p93 = scmp.ne.s32.totalorder %s84, %s85
    %p94 = scmp.eq.s32.totalorder %s18, 0
    %p95 = por %p93, %p94
    %p96 = scmp.ne.s32.totalorder %s84, %s85
    %p97 = scmp.eq.s32.totalorder %s19, 1
    %p98 = por %p96, %p97
    %p100 = scmp.ne.s32.totalorder %s85, %s99
    %p101 = scmp.eq.s32.totalorder %s19, 0
    %p102 = por %p100, %p101
    %s104 = sadd.s32 %s103, 1
    %p107 = scmp.eq.s32.totalorder %s13, 1
    %p108 = scmp.ne.s32.totalorder %s103, %s105
    %p109 = scmp.eq.s32.totalorder %s13, 0
    %p110 = por %p108, %p109
    %p111 = scmp.ne.s32.totalorder %s103, %s105
    %p112 = scmp.eq.s32.totalorder %s18, 1
    %p113 = por %p111, %p112
    %p114 = scmp.ne.s32.totalorder %s105, %s106
    %p115 = scmp.eq.s32.totalorder %s18, 0
    %p116 = por %p114, %p115
    %p117 = scmp.ne.s32.totalorder %s105, %s106
    %p118 = scmp.eq.s32.totalorder %s19, 1
    %p119 = por %p117, %p118
    %p121 = scmp.ne.s32.totalorder %s106, %s120
    %p122 = scmp.eq.s32.totalorder %s19, 0
    %p123 = por %p121, %p122
    %s125 = sadd.s32 %s124, 1
    %p128 = scmp.eq.s32.totalorder %s13, 1
    %p129 = scmp.ne.s32.totalorder %s124, %s126
    %p130 = scmp.eq.s32.totalorder %s13, 0
    %p131 = por %p129, %p130
    %p132 = scmp.ne.s32.totalorder %s124, %s126
    %p133 = scmp.eq.s32.totalorder %s18, 1
    %p134 = por %p132, %p133
    %p135 = scmp.ne.s32.totalorder %s126, %s127
    %p136 = scmp.eq.s32.totalorder %s18, 0
    %p137 = por %p135, %p136
    %p138 = scmp.ne.s32.totalorder %s126, %s127
    %p139 = scmp.eq.s32.totalorder %s19, 1
    %p140 = por %p138, %p139
    %p142 = scmp.ne.s32.totalorder %s127, %s141
    %p143 = scmp.eq.s32.totalorder %s19, 0
    %p144 = por %p142, %p143
    %s146 = sadd.s32 %s145, 1
    %p149 = scmp.eq.s32.totalorder %s13, 1
    %p150 = scmp.ne.s32.totalorder %s145, %s147
    %p151 = scmp.eq.s32.totalorder %s13, 0
    %p152 = por %p150, %p151
    %p153 = scmp.ne.s32.totalorder %s145, %s147
    %p154 = scmp.eq.s32.totalorder %s18, 1
    %p155 = por %p153, %p154
    %p156 = scmp.ne.s32.totalorder %s147, %s148
    %p157 = scmp.eq.s32.totalorder %s18, 0
    %p158 = por %p156, %p157
    %p159 = scmp.ne.s32.totalorder %s147, %s148
    %p160 = scmp.eq.s32.totalorder %s19, 1
    %p161 = por %p159, %p160
    %p163 = scmp.ne.s32.totalorder %s148, %s162
    %p164 = scmp.eq.s32.totalorder %s19, 0
    %p165 = por %p163, %p164
    %s167 = sadd.s32 %s166, 1
    %p170 = scmp.eq.s32.totalorder %s13, 1
    %p171 = scmp.ne.s32.totalorder %s166, %s168
    %p172 = scmp.eq.s32.totalorder %s13, 0
    %p173 = por %p171, %p172
    %p174 = scmp.ne.s32.totalorder %s166, %s168
    %p175 = scmp.eq.s32.totalorder %s18, 1
    %p176 = por %p174, %p175
    %p177 = scmp.ne.s32.totalorder %s168, %s169
    %p178 = scmp.eq.s32.totalorder %s18, 0
    %p179 = por %p177, %p178
    %p180 = scmp.ne.s32.totalorder %s168, %s169
    %p181 = scmp.eq.s32.totalorder %s19, 1
    %p182 = por %p180, %p181
    %p184 = scmp.ne.s32.totalorder %s169, %s183
    %p185 = scmp.eq.s32.totalorder %s19, 0
    %p186 = por %p184, %p185
    %s187 = ssub.s32 %s20, %s32
    %s188 = ssub.s32 %s21, %s28
    %s189 = sor.u32 %s187, %s188
    %p190 = scmp.eq.s32.totalorder %s189, 0
    %s192 = sadd.s32 %s191, 1
    %s193 = scalar_select %p190, %s191, %s192
    %p196 = pneg %p190
    %p197 = scmp.eq.s32.totalorder %s13, 1
    %p198 = por %p196, %p197
    %p199 = scmp.ne.s32.totalorder %s191, %s194
    %p200 = scmp.eq.s32.totalorder %s13, 0
    %p201 = por %p199, %p200
    %p202 = scmp.ne.s32.totalorder %s191, %s194
    %p203 = scmp.eq.s32.totalorder %s18, 1
    %p204 = por %p202, %p203
    %p205 = scmp.ne.s32.totalorder %s194, %s195
    %p206 = scmp.eq.s32.totalorder %s18, 0
    %p207 = por %p205, %p206
    %p208 = scmp.ne.s32.totalorder %s194, %s195
    %p209 = scmp.eq.s32.totalorder %s19, 1
    %p210 = por %p208, %p209
    %p212 = scmp.ne.s32.totalorder %s195, %s211
    %p213 = scmp.eq.s32.totalorder %s19, 0
    %p214 = por %p212, %p213
    %p215 = scmp.le.s32.totalorder 1, %s13
    %p216 = scmp.lt.s32.totalorder %s13, 3
    %p217 = pnand %p215, %p216
    %p218 = pneg %p217
    // Predicated region
    $region9: #{inconv_forward.1} parent=5 // pred_check
      _
    $region10: #{inconv_forward.1} parent=5 // pred_check_branch
      %220 = sbr.rel (%p217) target = $region12
    $region11: #{inconv_forward.1} parent=5 // pred_region
      %s221 = ssub.s32 %s13, 1
      // Predicated region
      $region13: #{inconv_forward.1} parent=11 // pred_check
        %p222 = pneg %p74
      $region14: #{inconv_forward.1} parent=11 // pred_check_branch
        %224 = sbr.rel (%p222) target = $region16
      $region15: #{inconv_forward.1} parent=11 // pred_region
        _
      $region16: #{inconv_forward.1} parent=11 // pred_fallthru
        _
      // Predicated region
      $region17: #{inconv_forward.1} parent=11 // pred_check
        %p225 = pneg %p95
      $region18: #{inconv_forward.1} parent=11 // pred_check_branch
        %227 = sbr.rel (%p225) target = $region20
      $region19: #{inconv_forward.1} parent=11 // pred_region
        _
      $region20: #{inconv_forward.1} parent=11 // pred_fallthru
        _
      // Predicated region
      $region21: #{inconv_forward.1} parent=11 // pred_check
        %p228 = pneg %p116
      $region22: #{inconv_forward.1} parent=11 // pred_check_branch
        %230 = sbr.rel (%p228) target = $region24
      $region23: #{inconv_forward.1} parent=11 // pred_region
        _
      $region24: #{inconv_forward.1} parent=11 // pred_fallthru
        _
      // Predicated region
      $region25: #{inconv_forward.1} parent=11 // pred_check
        %p231 = pneg %p137
      $region26: #{inconv_forward.1} parent=11 // pred_check_branch
        %233 = sbr.rel (%p231) target = $region28
      $region27: #{inconv_forward.1} parent=11 // pred_region
        _
      $region28: #{inconv_forward.1} parent=11 // pred_fallthru
        _
      // Predicated region
      $region29: #{inconv_forward.1} parent=11 // pred_check
        %p234 = pneg %p158
      $region30: #{inconv_forward.1} parent=11 // pred_check_branch
        %236 = sbr.rel (%p234) target = $region32
      $region31: #{inconv_forward.1} parent=11 // pred_region
        _
      $region32: #{inconv_forward.1} parent=11 // pred_fallthru
        _
      // Predicated region
      $region33: #{inconv_forward.1} parent=11 // pred_check
        %p237 = pneg %p179
      $region34: #{inconv_forward.1} parent=11 // pred_check_branch
        %239 = sbr.rel (%p237) target = $region36
      $region35: #{inconv_forward.1} parent=11 // pred_region
        _
      $region36: #{inconv_forward.1} parent=11 // pred_fallthru
        _
    $region12: #{inconv_forward.1} parent=5 // pred_fallthru
      _
    %p240 = scmp.lt.s32.totalorder %s13, 2
    // Predicated region
    $region37: #{inconv_forward.1} parent=5 // pred_check
      %p241 = pneg %p240
    $region38: #{inconv_forward.1} parent=5 // pred_check_branch
      %243 = sbr.rel (%p241) target = $region40
    $region39: #{inconv_forward.1} parent=5 // pred_region
      // Predicated region
      $region41: #{inconv_forward.1} parent=39 // pred_check
        %p244 = pneg %p47
      $region42: #{inconv_forward.1} parent=39 // pred_check_branch
        %246 = sbr.rel (%p244) target = $region44
      $region43: #{inconv_forward.1} parent=39 // pred_region
        %p247 = scmp.lt.s32.totalorder %s20, 1
        %s248 = scalar_select %p247, %s20, 1
        %p249 = scmp.lt.s32.totalorder %s21, 0
        %s250 = scalar_select %p249, %s21, 0
        %s251 = smul.addr %s250, 54
        %s252 = smul.addr %s248, 54
        %s253 = sadd.s32 %s251, %s252
        %s254 = smul.addr %s253, 4
        %s255 = scalar_lea.vmem %s0, %s254
      $region44: #{inconv_forward.1} parent=39 // pred_fallthru
        _
    $region40: #{inconv_forward.1} parent=5 // pred_fallthru
      _
    %p256 = scmp.le.s32.totalorder 1, %s13
    %p257 = scmp.lt.s32.totalorder %s13, 3
    %p258 = pnand %p256, %p257
    %p259 = pneg %p258
    // Predicated region
    $region45: #{inconv_forward.1} parent=5 // pred_check
      _
    $region46: #{inconv_forward.1} parent=5 // pred_check_branch
      %261 = sbr.rel (%p258) target = $region48
    $region47: #{inconv_forward.1} parent=5 // pred_region
      %s262 = ssub.s32 %s13, 1
      %p263 = scmp.lt.s32.totalorder %s22, 1
      %s264 = scalar_select %p263, %s22, 1
      %p265 = scmp.lt.s32.totalorder %s23, 0
      %s266 = scalar_select %p265, %s23, 0
      %s267 = smul.addr %s266, 54
      %s268 = smul.addr %s264, 54
      %s269 = sadd.s32 %s267, %s268
      %s270 = smul.addr %s269, 4
      %s271 = scalar_lea.vmem %s0, %s270
      %p272 = pneg %p53
      %p273 = pneg %p50
      %p274 = pneg %p74
      %p275 = pneg %p71
      %p276 = pneg %p95
      %p277 = pneg %p92
      %p278 = pneg %p116
      %p279 = pneg %p113
      %p280 = pneg %p137
      %p281 = pneg %p134
      %p282 = pneg %p158
      %p283 = pneg %p155
      %p284 = pneg %p179
      %p285 = pneg %p176
      %p286 = pneg %p207
      %p287 = pneg %p204
      %s288 = smul.u32 2, %s23
      %p289 = scmp.lt.s32.totalorder %s22, 1
      %s290 = scalar_select %p289, %s22, 1
      %p291 = scmp.lt.s32.totalorder %s288, 1
      %s292 = scalar_select %p291, %s288, 1
      %s293 = smul.addr %s290, 2
      %s294 = sadd.s32 %s292, %s293
      %s295 = smul.addr %s294, 8
      %s296 = scalar_lea.vmem %s7, %s295
      %p297 = scmp.lt.s32.totalorder %s22, 1
      %s298 = scalar_select %p297, %s22, 1
      %p299 = scmp.lt.s32.totalorder %s23, 0
      %s300 = scalar_select %p299, %s23, 0
      %s301 = smul.addr %s300, 54
      %s302 = smul.addr %s298, 54
      %s303 = sadd.s32 %s301, %s302
      %s304 = smul.addr %s303, 4
      %s305 = scalar_lea.vmem %s0, %s304
      %s306 = smul.u32 2, %s23
      %p307 = scmp.lt.s32.totalorder %s22, 1
      %s308 = scalar_select %p307, %s22, 1
      %p309 = scmp.lt.s32.totalorder %s306, 1
      %s310 = scalar_select %p309, %s306, 1
      %s311 = smul.addr %s308, 2
      %s312 = sadd.s32 %s310, %s311
      %s313 = smul.addr %s312, 8
      %s314 = scalar_lea.vmem %s7, %s313
      %s315 = smul.u32 2, %s23
      %v317 = vld [vmem:[%s305] sm:$0xf]
      %v318 = vld [vmem:[%s305 + $0x4] sm:$0xf]
      %v319 = vld [vmem:[%s305 + $0x8] sm:$0xf]
      %v320 = vld [vmem:[%s305 + $0xc] sm:$0xf]
      %v321 = vld [vmem:[%s305 + $0x10] sm:$0xf]
      %v322 = vld [vmem:[%s305 + $0x14] sm:$0xf]
      %v323 = vld [vmem:[%s305 + $0x18] sm:$0xf]
      %v324 = vld [vmem:[%s305 + $0x1c] sm:$0xf]
      %v325 = vld [vmem:[%s305 + $0x20] sm:$0xf]
      %v326 = vld [vmem:[%s305 + $0x24] sm:$0xf]
      %v327 = vld [vmem:[%s305 + $0x28] sm:$0xf]
      %v328 = vld [vmem:[%s305 + $0x2c] sm:$0xf]
      %v329 = vld [vmem:[%s305 + $0x30] sm:$0xf]
      %v330 = vld [vmem:[%s305 + $0x34] sm:$0xf]
      %v331 = vld [vmem:[%s305 + $0x38] sm:$0xf]
      %v332 = vld [vmem:[%s305 + $0x3c] sm:$0xf]
      %v333 = vld [vmem:[%s305 + $0x40] sm:$0xf]
      %v334 = vld [vmem:[%s305 + $0x44] sm:$0xf]
      %v335 = vld [vmem:[%s305 + $0x48] sm:$0xf]
      %v336 = vld [vmem:[%s305 + $0x4c] sm:$0xf]
      %v337 = vld [vmem:[%s305 + $0x50] sm:$0xf]
      %v338 = vld [vmem:[%s305 + $0x54] sm:$0xf]
      %v339 = vld [vmem:[%s305 + $0x58] sm:$0xf]
      %v340 = vld [vmem:[%s305 + $0x5c] sm:$0xf]
      %v341 = vld [vmem:[%s305 + $0x60] sm:$0xf]
      %v342 = vld [vmem:[%s305 + $0x64] sm:$0xf]
      %v343 = vld [vmem:[%s305 + $0x68] sm:$0xf]
      %v344 = vld [vmem:[%s305 + $0x6c] sm:$0xf]
      %v345 = vld [vmem:[%s305 + $0x70] sm:$0xf]
      %v346 = vld [vmem:[%s305 + $0x74] sm:$0xf]
      %v347 = vld [vmem:[%s305 + $0x78] sm:$0xf]
      %v348 = vld [vmem:[%s305 + $0x7c] sm:$0xf]
      %v349 = vld [vmem:[%s305 + $0x80] sm:$0xf]
      %v350 = vld [vmem:[%s305 + $0x84] sm:$0xf]
      %v351 = vld [vmem:[%s305 + $0x88] sm:$0xf]
      %v352 = vld [vmem:[%s305 + $0x8c] sm:$0xf]
      %v353 = vld [vmem:[%s305 + $0x90] sm:$0xf]
      %v354 = vld [vmem:[%s305 + $0x94] sm:$0xf]
      %v355 = vld [vmem:[%s305 + $0x98] sm:$0xf]
      %v356 = vld [vmem:[%s305 + $0x9c] sm:$0xf]
      %v357 = vld [vmem:[%s305 + $0xa0] sm:$0xf]
      %v358 = vld [vmem:[%s305 + $0xa4] sm:$0xf]
      %v359 = vld [vmem:[%s305 + $0xa8] sm:$0xf]
      %v360 = vld [vmem:[%s305 + $0xac] sm:$0xf]
      %v361 = vld [vmem:[%s305 + $0xb0] sm:$0xf]
      %v362 = vld [vmem:[%s305 + $0xb4] sm:$0xf]
      %v363 = vld [vmem:[%s305 + $0xb8] sm:$0xf]
      %v364 = vld [vmem:[%s305 + $0xbc] sm:$0xf]
      %v365 = vld [vmem:[%s305 + $0xc0] sm:$0xf]
      %v366 = vld [vmem:[%s305 + $0xc4] sm:$0xf]
      %v367 = vld [vmem:[%s305 + $0xc8] sm:$0xf]
      %v368 = vld [vmem:[%s305 + $0xcc] sm:$0xf]
      %v369 = vld [vmem:[%s305 + $0xd0] sm:$0xf]
      %v370 = vld [vmem:[%s305 + $0xd4] sm:$0xf]
      %v371 = vld [vmem:[%s1] sm:$0xf]
      %v372 = vld [vmem:[%s1 + $0x4] sm:$0xf]
      %v373 = vld [vmem:[%s1 + $0x8] sm:$0xf]
      %v374 = vld [vmem:[%s1 + $0xc] sm:$0xf]
      %v375 = vld [vmem:[%s1 + $0x10] sm:$0x3]
      %v430 = vunpack.c.l.b16 %v317
      %v431 = vunpack.c.l.b16 %v318
      %v432 = vunpack.c.l.b16 %v319
      %v433 = vunpack.c.l.b16 %v320
      %v434 = vunpack.c.l.b16 %v321
      %v435 = vunpack.c.l.b16 %v322
      %v436 = vunpack.c.l.b16 %v323
      %v437 = vunpack.c.l.b16 %v324
      %v438 = vunpack.c.l.b16 %v325
      %v439 = vunpack.c.l.b16 %v326
      %v440 = vunpack.c.l.b16 %v327
      %v441 = vunpack.c.l.b16 %v328
      %v442 = vunpack.c.l.b16 %v329
      %v443 = vunpack.c.l.b16 %v330
      %v444 = vunpack.c.l.b16 %v331
      %v445 = vunpack.c.l.b16 %v332
      %v446 = vunpack.c.l.b16 %v333
      %v447 = vunpack.c.l.b16 %v334
      %v448 = vunpack.c.l.b16 %v335
      %v449 = vunpack.c.l.b16 %v336
      %v450 = vunpack.c.l.b16 %v337
      %v451 = vunpack.c.l.b16 %v338
      %v452 = vunpack.c.l.b16 %v339
      %v453 = vunpack.c.l.b16 %v340
      %v454 = vunpack.c.l.b16 %v341
      %v455 = vunpack.c.l.b16 %v342
      %v456 = vunpack.c.l.b16 %v343
      %v457 = vunpack.c.l.b16 %v344
      %v458 = vunpack.c.l.b16 %v345
      %v459 = vunpack.c.l.b16 %v346
      %v460 = vunpack.c.l.b16 %v347
      %v461 = vunpack.c.l.b16 %v348
      %v462 = vunpack.c.l.b16 %v349
      %v463 = vunpack.c.l.b16 %v350
      %v464 = vunpack.c.l.b16 %v351
      %v465 = vunpack.c.l.b16 %v352
      %v466 = vunpack.c.l.b16 %v353
      %v467 = vunpack.c.l.b16 %v354
      %v468 = vunpack.c.l.b16 %v355
      %v469 = vunpack.c.l.b16 %v356
      %v470 = vunpack.c.l.b16 %v357
      %v471 = vunpack.c.l.b16 %v358
      %v472 = vunpack.c.l.b16 %v359
      %v473 = vunpack.c.l.b16 %v360
      %v474 = vunpack.c.l.b16 %v361
      %v475 = vunpack.c.l.b16 %v362
      %v476 = vunpack.c.l.b16 %v363
      %v477 = vunpack.c.l.b16 %v364
      %v478 = vunpack.c.l.b16 %v365
      %v479 = vunpack.c.l.b16 %v366
      %v480 = vunpack.c.l.b16 %v367
      %v481 = vunpack.c.l.b16 %v368
      %v482 = vunpack.c.l.b16 %v369
      %v483 = vunpack.c.l.b16 %v370
      %v484 = vpack.c.b16 %v431, %v430
      %v485 = vpack.c.b16 %v433, %v432
      %v486 = vpack.c.b16 %v435, %v434
      %v487 = vpack.c.b16 %v437, %v436
      %v488 = vpack.c.b16 %v439, %v438
      %v489 = vpack.c.b16 %v441, %v440
      %v490 = vpack.c.b16 %v443, %v442
      %v491 = vpack.c.b16 %v445, %v444
      %v492 = vpack.c.b16 %v447, %v446
      %v493 = vpack.c.b16 %v449, %v448
      %v494 = vpack.c.b16 %v451, %v450
      %v495 = vpack.c.b16 %v453, %v452
      %v496 = vpack.c.b16 %v455, %v454
      %v497 = vpack.c.b16 %v457, %v456
      %v498 = vpack.c.b16 %v459, %v458
      %v499 = vpack.c.b16 %v461, %v460
      %v500 = vpack.c.b16 %v463, %v462
      %v501 = vpack.c.b16 %v465, %v464
      %v502 = vpack.c.b16 %v467, %v466
      %v503 = vpack.c.b16 %v469, %v468
      %v504 = vpack.c.b16 %v471, %v470
      %v505 = vpack.c.b16 %v473, %v472
      %v506 = vpack.c.b16 %v475, %v474
      %v507 = vpack.c.b16 %v477, %v476
      %v508 = vpack.c.b16 %v479, %v478
      %v509 = vpack.c.b16 %v481, %v480
      %v510 = vpack.c.b16 %v483, %v482
      %v516 = vunpack.c.l.b16 %v371
      %v517 = vunpack.c.l.b16 %v372
      %v518 = vunpack.c.l.b16 %v373
      %v519 = vunpack.c.l.b16 %v374
      %v520 = vunpack.c.l.b16 %v375
      %v521 = vpack.c.b16 %v517, %v516
      %v522 = vpack.c.b16 %v519, %v518
      %v523 = vpack.c.b16 %v520, %v520
      %vm526 = vcmask 293888
      %v528 = vsel %vm526, %v484, 0
      %v531 = vsel %vm526, %v485, 0
      %v534 = vsel %vm526, %v486, 0
      %v537 = vsel %vm526, %v487, 0
      %v540 = vsel %vm526, %v488, 0
      %v543 = vsel %vm526, %v489, 0
      %v546 = vsel %vm526, %v490, 0
      %v549 = vsel %vm526, %v491, 0
      %v552 = vsel %vm526, %v492, 0
      %v555 = vsel %vm526, %v493, 0
      %v558 = vsel %vm526, %v494, 0
      %v561 = vsel %vm526, %v495, 0
      %v564 = vsel %vm526, %v496, 0
      %v567 = vsel %vm526, %v497, 0
      %v570 = vsel %vm526, %v498, 0
      %v573 = vsel %vm526, %v499, 0
      %v576 = vsel %vm526, %v500, 0
      %v579 = vsel %vm526, %v501, 0
      %v582 = vsel %vm526, %v502, 0
      %v585 = vsel %vm526, %v503, 0
      %v588 = vsel %vm526, %v504, 0
      %v591 = vsel %vm526, %v505, 0
      %v594 = vsel %vm526, %v506, 0
      %v597 = vsel %vm526, %v507, 0
      %v600 = vsel %vm526, %v508, 0
      %v603 = vsel %vm526, %v509, 0
      %v606 = vsel %vm526, %v510, 0
      %vm608 = vcmask 1041408
      %v610 = vsel %vm608, %v523, 0
      %612 = vmatprep.subr.bf16.mxu0 0
      %613 = vmatpush1.bf16.msra.mxu0 0
      %614 = vmatprep.subr.bf16.mxu0 0
      %615 = vmatpush1.bf16.msra.mxu0 0
      %616 = vmatprep.subr.bf16.mxu0 0
      %617 = vmatpush1.bf16.msra.mxu0 0
      %618 = vmatprep.subr.bf16.mxu0 0
      %619 = vmatpush1.bf16.msra.mxu0 0
      %620 = vmatprep.subr.bf16.mxu0 0
      %621 = vmatpush1.bf16.msra.mxu0 0
      %622 = vmatprep.subr.bf16.mxu0 0
      %623 = vmatpush1.bf16.msra.mxu0 %v610
      %624 = vmatprep.subr.bf16.mxu0 0
      %625 = vmatpush1.bf16.msra.mxu0 %v522
      %626 = vmatprep.subr.bf16.mxu0 0
      %627 = vmatpush1.bf16.msra.mxu0 %v521
      %628 = vmatprep.subr.bf16.mxu0 0
      %629 = vmatpush2.bf16.msra.mxu0 0
      %630 = vmatprep.subr.bf16.mxu0 0
      %631 = vmatpush2.bf16.msra.mxu0 0
      %632 = vmatprep.subr.bf16.mxu0 0
      %633 = vmatpush2.bf16.msra.mxu0 0
      %634 = vmatprep.subr.bf16.mxu0 0
      %635 = vmatpush2.bf16.msra.mxu0 0
      %636 = vmatprep.subr.bf16.mxu0 0
      %637 = vmatpush2.bf16.msra.mxu0 0
      %638 = vmatprep.subr.bf16.mxu0 0
      %639 = vmatpush2.bf16.msra.mxu0 0
      %640 = vmatprep.subr.bf16.mxu0 0
      %641 = vmatpush2.bf16.msra.mxu0 0
      %642 = vmatprep.subr.bf16.mxu0 0
      %643 = vmatpush2.bf16.msra.mxu0 0
      %644 = vmatprep.mubr.bf16.mxu0 0
      %645 = vmatmul.mubr.bf16.gmra.mxu0 %v528
      %v646 = vpop.f32.mrf.mxu0
      %v647 = vadd.f32 0.0, %v646
      %v648 = vpop.f32.mrf.mxu0
      %v649 = vpop.f32.mrf.mxu0
      %v650 = vadd.f32 0.0, %v649
      %v651 = vpop.f32.mrf.mxu0
      %652 = vmatprep.mubr.bf16.mxu0 0
      %653 = vmatmul.mubr.bf16.gmra.mxu0 %v531
      %v654 = vpop.f32.mrf.mxu0
      %v655 = vadd.f32 0.0, %v654
      %v656 = vpop.f32.mrf.mxu0
      %v657 = vpop.f32.mrf.mxu0
      %v658 = vadd.f32 0.0, %v657
      %v659 = vpop.f32.mrf.mxu0
      %660 = vmatprep.mubr.bf16.mxu0 0
      %661 = vmatmul.mubr.bf16.gmra.mxu0 %v534
      %v662 = vpop.f32.mrf.mxu0
      %v663 = vadd.f32 0.0, %v662
      %v664 = vpop.f32.mrf.mxu0
      %v665 = vpop.f32.mrf.mxu0
      %v666 = vadd.f32 0.0, %v665
      %v667 = vpop.f32.mrf.mxu0
      %668 = vmatprep.mubr.bf16.mxu0 0
      %669 = vmatmul.mubr.bf16.gmra.mxu0 %v537
      %v670 = vpop.f32.mrf.mxu0
      %v671 = vadd.f32 0.0, %v670
      %v672 = vpop.f32.mrf.mxu0
      %v673 = vpop.f32.mrf.mxu0
      %v674 = vadd.f32 0.0, %v673
      %v675 = vpop.f32.mrf.mxu0
      %676 = vmatprep.mubr.bf16.mxu0 0
      %677 = vmatmul.mubr.bf16.gmra.mxu0 %v540
      %v678 = vpop.f32.mrf.mxu0
      %v679 = vadd.f32 0.0, %v678
      %v680 = vpop.f32.mrf.mxu0
      %v681 = vpop.f32.mrf.mxu0
      %v682 = vadd.f32 0.0, %v681
      %v683 = vpop.f32.mrf.mxu0
      %684 = vmatprep.mubr.bf16.mxu0 0
      %685 = vmatmul.mubr.bf16.gmra.mxu0 %v543
      %v686 = vpop.f32.mrf.mxu0
      %v687 = vadd.f32 0.0, %v686
      %v688 = vpop.f32.mrf.mxu0
      %v689 = vpop.f32.mrf.mxu0
      %v690 = vadd.f32 0.0, %v689
      %v691 = vpop.f32.mrf.mxu0
      %692 = vmatprep.mubr.bf16.mxu0 0
      %693 = vmatmul.mubr.bf16.gmra.mxu0 %v546
      %v694 = vpop.f32.mrf.mxu0
      %v695 = vadd.f32 0.0, %v694
      %v696 = vpop.f32.mrf.mxu0
      %v697 = vpop.f32.mrf.mxu0
      %v698 = vadd.f32 0.0, %v697
      %v699 = vpop.f32.mrf.mxu0
      %700 = vmatprep.mubr.bf16.mxu0 0
      %701 = vmatmul.mubr.bf16.gmra.mxu0 %v549
      %v702 = vpop.f32.mrf.mxu0
      %v703 = vadd.f32 0.0, %v702
      %v704 = vpop.f32.mrf.mxu0
      %v705 = vpop.f32.mrf.mxu0
      %v706 = vadd.f32 0.0, %v705
      %v707 = vpop.f32.mrf.mxu0
      %708 = vmatprep.mubr.bf16.mxu0 0
      %709 = vmatmul.mubr.bf16.gmra.mxu0 %v552
      %v710 = vpop.f32.mrf.mxu0
      %v711 = vadd.f32 0.0, %v710
      %v712 = vpop.f32.mrf.mxu0
      %v713 = vpop.f32.mrf.mxu0
      %v714 = vadd.f32 0.0, %v713
      %v715 = vpop.f32.mrf.mxu0
      %716 = vmatprep.mubr.bf16.mxu0 0
      %717 = vmatmul.mubr.bf16.gmra.mxu0 %v555
      %v718 = vpop.f32.mrf.mxu0
      %v719 = vadd.f32 0.0, %v718
      %v720 = vpop.f32.mrf.mxu0
      %v721 = vpop.f32.mrf.mxu0
      %v722 = vadd.f32 0.0, %v721
      %v723 = vpop.f32.mrf.mxu0
      %724 = vmatprep.mubr.bf16.mxu0 0
      %725 = vmatmul.mubr.bf16.gmra.mxu0 %v558
      %v726 = vpop.f32.mrf.mxu0
      %v727 = vadd.f32 0.0, %v726
      %v728 = vpop.f32.mrf.mxu0
      %v729 = vpop.f32.mrf.mxu0
      %v730 = vadd.f32 0.0, %v729
      %v731 = vpop.f32.mrf.mxu0
      %732 = vmatprep.mubr.bf16.mxu0 0
      %733 = vmatmul.mubr.bf16.gmra.mxu0 %v561
      %v734 = vpop.f32.mrf.mxu0
      %v735 = vadd.f32 0.0, %v734
      %v736 = vpop.f32.mrf.mxu0
      %v737 = vpop.f32.mrf.mxu0
      %v738 = vadd.f32 0.0, %v737
      %v739 = vpop.f32.mrf.mxu0
      %740 = vmatprep.mubr.bf16.mxu0 0
      %741 = vmatmul.mubr.bf16.gmra.mxu0 %v564
      %v742 = vpop.f32.mrf.mxu0
      %v743 = vadd.f32 0.0, %v742
      %v744 = vpop.f32.mrf.mxu0
      %v745 = vpop.f32.mrf.mxu0
      %v746 = vadd.f32 0.0, %v745
      %v747 = vpop.f32.mrf.mxu0
      %748 = vmatprep.mubr.bf16.mxu0 0
      %749 = vmatmul.mubr.bf16.gmra.mxu0 %v567
      %v750 = vpop.f32.mrf.mxu0
      %v751 = vadd.f32 0.0, %v750
      %v752 = vpop.f32.mrf.mxu0
      %v753 = vpop.f32.mrf.mxu0
      %v754 = vadd.f32 0.0, %v753
      %v755 = vpop.f32.mrf.mxu0
      %756 = vmatprep.mubr.bf16.mxu0 0
      %757 = vmatmul.mubr.bf16.gmra.mxu0 %v570
      %v758 = vpop.f32.mrf.mxu0
      %v759 = vadd.f32 0.0, %v758
      %v760 = vpop.f32.mrf.mxu0
      %v761 = vpop.f32.mrf.mxu0
      %v762 = vadd.f32 0.0, %v761
      %v763 = vpop.f32.mrf.mxu0
      %764 = vmatprep.mubr.bf16.mxu0 0
      %765 = vmatmul.mubr.bf16.gmra.mxu0 %v573
      %v766 = vpop.f32.mrf.mxu0
      %v767 = vadd.f32 0.0, %v766
      %v768 = vpop.f32.mrf.mxu0
      %v769 = vpop.f32.mrf.mxu0
      %v770 = vadd.f32 0.0, %v769
      %v771 = vpop.f32.mrf.mxu0
      %772 = vmatprep.mubr.bf16.mxu0 0
      %773 = vmatmul.mubr.bf16.gmra.mxu0 %v576
      %v774 = vpop.f32.mrf.mxu0
      %v775 = vadd.f32 0.0, %v774
      %v776 = vpop.f32.mrf.mxu0
      %v777 = vpop.f32.mrf.mxu0
      %v778 = vadd.f32 0.0, %v777
      %v779 = vpop.f32.mrf.mxu0
      %780 = vmatprep.mubr.bf16.mxu0 0
      %781 = vmatmul.mubr.bf16.gmra.mxu0 %v579
      %v782 = vpop.f32.mrf.mxu0
      %v783 = vadd.f32 0.0, %v782
      %v784 = vpop.f32.mrf.mxu0
      %v785 = vpop.f32.mrf.mxu0
      %v786 = vadd.f32 0.0, %v785
      %v787 = vpop.f32.mrf.mxu0
      %788 = vmatprep.mubr.bf16.mxu0 0
      %789 = vmatmul.mubr.bf16.gmra.mxu0 %v582
      %v790 = vpop.f32.mrf.mxu0
      %v791 = vadd.f32 0.0, %v790
      %v792 = vpop.f32.mrf.mxu0
      %v793 = vpop.f32.mrf.mxu0
      %v794 = vadd.f32 0.0, %v793
      %v795 = vpop.f32.mrf.mxu0
      %796 = vmatprep.mubr.bf16.mxu0 0
      %797 = vmatmul.mubr.bf16.gmra.mxu0 %v585
      %v798 = vpop.f32.mrf.mxu0
      %v799 = vadd.f32 0.0, %v798
      %v800 = vpop.f32.mrf.mxu0
      %v801 = vpop.f32.mrf.mxu0
      %v802 = vadd.f32 0.0, %v801
      %v803 = vpop.f32.mrf.mxu0
      %804 = vmatprep.mubr.bf16.mxu0 0
      %805 = vmatmul.mubr.bf16.gmra.mxu0 %v588
      %v806 = vpop.f32.mrf.mxu0
      %v807 = vadd.f32 0.0, %v806
      %v808 = vpop.f32.mrf.mxu0
      %v809 = vpop.f32.mrf.mxu0
      %v810 = vadd.f32 0.0, %v809
      %v811 = vpop.f32.mrf.mxu0
      %812 = vmatprep.mubr.bf16.mxu0 0
      %813 = vmatmul.mubr.bf16.gmra.mxu0 %v591
      %v814 = vpop.f32.mrf.mxu0
      %v815 = vadd.f32 0.0, %v814
      %v816 = vpop.f32.mrf.mxu0
      %v817 = vpop.f32.mrf.mxu0
      %v818 = vadd.f32 0.0, %v817
      %v819 = vpop.f32.mrf.mxu0
      %820 = vmatprep.mubr.bf16.mxu0 0
      %821 = vmatmul.mubr.bf16.gmra.mxu0 %v594
      %v822 = vpop.f32.mrf.mxu0
      %v823 = vadd.f32 0.0, %v822
      %v824 = vpop.f32.mrf.mxu0
      %v825 = vpop.f32.mrf.mxu0
      %v826 = vadd.f32 0.0, %v825
      %v827 = vpop.f32.mrf.mxu0
      %828 = vmatprep.mubr.bf16.mxu0 0
      %829 = vmatmul.mubr.bf16.gmra.mxu0 %v597
      %v830 = vpop.f32.mrf.mxu0
      %v831 = vadd.f32 0.0, %v830
      %v832 = vpop.f32.mrf.mxu0
      %v833 = vpop.f32.mrf.mxu0
      %v834 = vadd.f32 0.0, %v833
      %v835 = vpop.f32.mrf.mxu0
      %836 = vmatprep.mubr.bf16.mxu0 0
      %837 = vmatmul.mubr.bf16.gmra.mxu0 %v600
      %v838 = vpop.f32.mrf.mxu0
      %v839 = vadd.f32 0.0, %v838
      %v840 = vpop.f32.mrf.mxu0
      %v841 = vpop.f32.mrf.mxu0
      %v842 = vadd.f32 0.0, %v841
      %v843 = vpop.f32.mrf.mxu0
      %844 = vmatprep.mubr.bf16.mxu0 0
      %845 = vmatmul.mubr.bf16.gmra.mxu0 %v603
      %v846 = vpop.f32.mrf.mxu0
      %v847 = vadd.f32 0.0, %v846
      %v848 = vpop.f32.mrf.mxu0
      %v849 = vpop.f32.mrf.mxu0
      %v850 = vadd.f32 0.0, %v849
      %v851 = vpop.f32.mrf.mxu0
      %852 = vmatprep.mubr.bf16.mxu0 0
      %853 = vmatmul.mubr.bf16.gmra.mxu0 %v606
      %v854 = vpop.f32.mrf.mxu0
      %v855 = vadd.f32 0.0, %v854
      %v856 = vpop.f32.mrf.mxu0
      %v857 = vpop.f32.mrf.mxu0
      %v858 = vadd.f32 0.0, %v857
      %v859 = vpop.f32.mrf.mxu0
      %860 = vdwg.mxu0
      %v861 = vld [vmem:[%s2] sm:$0x1]
      %v863 = vlaneseq
      %v864 = vshrl.u32 %v863, 7
      %v865 = vsub.s32 0, %v864
      %v866 = vrot.slane %v861, %v865
      %v868 = vmul.f32 %v647, %v866
      %v869 = vmul.f32 %v650, %v866
      %v870 = vmul.f32 %v655, %v866
      %v871 = vmul.f32 %v658, %v866
      %v872 = vmul.f32 %v663, %v866
      %v873 = vmul.f32 %v666, %v866
      %v874 = vmul.f32 %v671, %v866
      %v875 = vmul.f32 %v674, %v866
      %v876 = vmul.f32 %v679, %v866
      %v877 = vmul.f32 %v682, %v866
      %v878 = vmul.f32 %v687, %v866
      %v879 = vmul.f32 %v690, %v866
      %v880 = vmul.f32 %v695, %v866
      %v881 = vmul.f32 %v698, %v866
      %v882 = vmul.f32 %v703, %v866
      %v883 = vmul.f32 %v706, %v866
      %v884 = vmul.f32 %v711, %v866
      %v885 = vmul.f32 %v714, %v866
      %v886 = vmul.f32 %v719, %v866
      %v887 = vmul.f32 %v722, %v866
      %v888 = vmul.f32 %v727, %v866
      %v889 = vmul.f32 %v730, %v866
      %v890 = vmul.f32 %v735, %v866
      %v891 = vmul.f32 %v738, %v866
      %v892 = vmul.f32 %v743, %v866
      %v893 = vmul.f32 %v746, %v866
      %v894 = vmul.f32 %v751, %v866
      %v895 = vmul.f32 %v754, %v866
      %v896 = vmul.f32 %v759, %v866
      %v897 = vmul.f32 %v762, %v866
      %v898 = vmul.f32 %v767, %v866
      %v899 = vmul.f32 %v770, %v866
      %v900 = vmul.f32 %v775, %v866
      %v901 = vmul.f32 %v778, %v866
      %v902 = vmul.f32 %v783, %v866
      %v903 = vmul.f32 %v786, %v866
      %v904 = vmul.f32 %v791, %v866
      %v905 = vmul.f32 %v794, %v866
      %v906 = vmul.f32 %v799, %v866
      %v907 = vmul.f32 %v802, %v866
      %v908 = vmul.f32 %v807, %v866
      %v909 = vmul.f32 %v810, %v866
      %v910 = vmul.f32 %v815, %v866
      %v911 = vmul.f32 %v818, %v866
      %v912 = vmul.f32 %v823, %v866
      %v913 = vmul.f32 %v826, %v866
      %v914 = vmul.f32 %v831, %v866
      %v915 = vmul.f32 %v834, %v866
      %v916 = vmul.f32 %v839, %v866
      %v917 = vmul.f32 %v842, %v866
      %v918 = vmul.f32 %v847, %v866
      %v919 = vmul.f32 %v850, %v866
      %v920 = vmul.f32 %v855, %v866
      %v921 = vmul.f32 %v858, %v866
      %v922 = vld [vmem:[%s3] sm:$0x1]
      %v924 = vlaneseq
      %v925 = vshrl.u32 %v924, 7
      %v926 = vsub.s32 0, %v925
      %v927 = vrot.slane %v922, %v926
      %v929 = vadd.f32 %v868, %v927
      %v930 = vadd.f32 %v869, %v927
      %v931 = vadd.f32 %v870, %v927
      %v932 = vadd.f32 %v871, %v927
      %v933 = vadd.f32 %v872, %v927
      %v934 = vadd.f32 %v873, %v927
      %v935 = vadd.f32 %v874, %v927
      %v936 = vadd.f32 %v875, %v927
      %v937 = vadd.f32 %v876, %v927
      %v938 = vadd.f32 %v877, %v927
      %v939 = vadd.f32 %v878, %v927
      %v940 = vadd.f32 %v879, %v927
      %v941 = vadd.f32 %v880, %v927
      %v942 = vadd.f32 %v881, %v927
      %v943 = vadd.f32 %v882, %v927
      %v944 = vadd.f32 %v883, %v927
      %v945 = vadd.f32 %v884, %v927
      %v946 = vadd.f32 %v885, %v927
      %v947 = vadd.f32 %v886, %v927
      %v948 = vadd.f32 %v887, %v927
      %v949 = vadd.f32 %v888, %v927
      %v950 = vadd.f32 %v889, %v927
      %v951 = vadd.f32 %v890, %v927
      %v952 = vadd.f32 %v891, %v927
      %v953 = vadd.f32 %v892, %v927
      %v954 = vadd.f32 %v893, %v927
      %v955 = vadd.f32 %v894, %v927
      %v956 = vadd.f32 %v895, %v927
      %v957 = vadd.f32 %v896, %v927
      %v958 = vadd.f32 %v897, %v927
      %v959 = vadd.f32 %v898, %v927
      %v960 = vadd.f32 %v899, %v927
      %v961 = vadd.f32 %v900, %v927
      %v962 = vadd.f32 %v901, %v927
      %v963 = vadd.f32 %v902, %v927
      %v964 = vadd.f32 %v903, %v927
      %v965 = vadd.f32 %v904, %v927
      %v966 = vadd.f32 %v905, %v927
      %v967 = vadd.f32 %v906, %v927
      %v968 = vadd.f32 %v907, %v927
      %v969 = vadd.f32 %v908, %v927
      %v970 = vadd.f32 %v909, %v927
      %v971 = vadd.f32 %v910, %v927
      %v972 = vadd.f32 %v911, %v927
      %v973 = vadd.f32 %v912, %v927
      %v974 = vadd.f32 %v913, %v927
      %v975 = vadd.f32 %v914, %v927
      %v976 = vadd.f32 %v915, %v927
      %v977 = vadd.f32 %v916, %v927
      %v978 = vadd.f32 %v917, %v927
      %v979 = vadd.f32 %v918, %v927
      %v980 = vadd.f32 %v919, %v927
      %v981 = vadd.f32 %v920, %v927
      %v982 = vadd.f32 %v921, %v927
      %v983 = vmax.f32 %v929, 0.0
      %v984 = vmax.f32 %v930, 0.0
      %v985 = vmax.f32 %v931, 0.0
      %v986 = vmax.f32 %v932, 0.0
      %v987 = vmax.f32 %v933, 0.0
      %v988 = vmax.f32 %v934, 0.0
      %v989 = vmax.f32 %v935, 0.0
      %v990 = vmax.f32 %v936, 0.0
      %v991 = vmax.f32 %v937, 0.0
      %v992 = vmax.f32 %v938, 0.0
      %v993 = vmax.f32 %v939, 0.0
      %v994 = vmax.f32 %v940, 0.0
      %v995 = vmax.f32 %v941, 0.0
      %v996 = vmax.f32 %v942, 0.0
      %v997 = vmax.f32 %v943, 0.0
      %v998 = vmax.f32 %v944, 0.0
      %v999 = vmax.f32 %v945, 0.0
      %v1000 = vmax.f32 %v946, 0.0
      %v1001 = vmax.f32 %v947, 0.0
      %v1002 = vmax.f32 %v948, 0.0
      %v1003 = vmax.f32 %v949, 0.0
      %v1004 = vmax.f32 %v950, 0.0
      %v1005 = vmax.f32 %v951, 0.0
      %v1006 = vmax.f32 %v952, 0.0
      %v1007 = vmax.f32 %v953, 0.0
      %v1008 = vmax.f32 %v954, 0.0
      %v1009 = vmax.f32 %v955, 0.0
      %v1010 = vmax.f32 %v956, 0.0
      %v1011 = vmax.f32 %v957, 0.0
      %v1012 = vmax.f32 %v958, 0.0
      %v1013 = vmax.f32 %v959, 0.0
      %v1014 = vmax.f32 %v960, 0.0
      %v1015 = vmax.f32 %v961, 0.0
      %v1016 = vmax.f32 %v962, 0.0
      %v1017 = vmax.f32 %v963, 0.0
      %v1018 = vmax.f32 %v964, 0.0
      %v1019 = vmax.f32 %v965, 0.0
      %v1020 = vmax.f32 %v966, 0.0
      %v1021 = vmax.f32 %v967, 0.0
      %v1022 = vmax.f32 %v968, 0.0
      %v1023 = vmax.f32 %v969, 0.0
      %v1024 = vmax.f32 %v970, 0.0
      %v1025 = vmax.f32 %v971, 0.0
      %v1026 = vmax.f32 %v972, 0.0
      %v1027 = vmax.f32 %v973, 0.0
      %v1028 = vmax.f32 %v974, 0.0
      %v1029 = vmax.f32 %v975, 0.0
      %v1030 = vmax.f32 %v976, 0.0
      %v1031 = vmax.f32 %v977, 0.0
      %v1032 = vmax.f32 %v978, 0.0
      %v1033 = vmax.f32 %v979, 0.0
      %v1034 = vmax.f32 %v980, 0.0
      %v1035 = vmax.f32 %v981, 0.0
      %v1036 = vmax.f32 %v982, 0.0
      %s1037 = smul.u32 %s23, 16
      %s1038 = ssub.s32 %s1037, 1
      %v1039 = vstv %s1038
      %v1040 = vadd.s32 %v1039, 1
      %v1041 = vadd.s32 %v1039, 2
      %v1042 = vadd.s32 %v1039, 3
      %v1043 = vadd.s32 %v1039, 4
      %v1044 = vadd.s32 %v1039, 5
      %v1045 = vadd.s32 %v1039, 6
      %v1046 = vadd.s32 %v1039, 7
      %v1047 = vadd.s32 %v1039, 8
      %v1048 = vadd.s32 %v1039, 9
      %v1049 = vadd.s32 %v1039, 10
      %v1050 = vadd.s32 %v1039, 11
      %v1051 = vadd.s32 %v1039, 12
      %v1052 = vadd.s32 %v1039, 13
      %v1053 = vadd.s32 %v1039, 14
      %v1054 = vadd.s32 %v1039, 15
      %v1055 = vadd.s32 %v1039, 16
      %v1056 = vadd.s32 %v1039, 17
      %v1057 = vlaneseq
      %v1058 = vshrl.u32 %v1057, 7
      %v1059 = vadd.s32 %v1058, 8
      %v1060 = vadd.s32 %v1058, 16
      %vm1061 = vcmp.ge.s32.totalorder %v1039, 0
      %vm1062 = vcmp.ge.s32.totalorder %v1040, 0
      %vm1063 = vcmp.ge.s32.totalorder %v1041, 0
      %vm1064 = vcmp.ge.s32.totalorder %v1042, 0
      %vm1065 = vcmp.ge.s32.totalorder %v1043, 0
      %vm1066 = vcmp.ge.s32.totalorder %v1044, 0
      %vm1067 = vcmp.ge.s32.totalorder %v1045, 0
      %vm1068 = vcmp.ge.s32.totalorder %v1046, 0
      %vm1069 = vcmp.ge.s32.totalorder %v1047, 0
      %vm1070 = vcmp.ge.s32.totalorder %v1048, 0
      %vm1071 = vcmp.ge.s32.totalorder %v1049, 0
      %vm1072 = vcmp.ge.s32.totalorder %v1050, 0
      %vm1073 = vcmp.ge.s32.totalorder %v1051, 0
      %vm1074 = vcmp.ge.s32.totalorder %v1052, 0
      %vm1075 = vcmp.ge.s32.totalorder %v1053, 0
      %vm1076 = vcmp.ge.s32.totalorder %v1054, 0
      %vm1077 = vcmp.ge.s32.totalorder %v1055, 0
      %vm1078 = vcmp.ge.s32.totalorder %v1056, 0
      %vm1079 = vcmp.lt.s32.totalorder %v1039, 16
      %vm1080 = vcmp.lt.s32.totalorder %v1040, 16
      %vm1081 = vcmp.lt.s32.totalorder %v1041, 16
      %vm1082 = vcmp.lt.s32.totalorder %v1042, 16
      %vm1083 = vcmp.lt.s32.totalorder %v1043, 16
      %vm1084 = vcmp.lt.s32.totalorder %v1044, 16
      %vm1085 = vcmp.lt.s32.totalorder %v1045, 16
      %vm1086 = vcmp.lt.s32.totalorder %v1046, 16
      %vm1087 = vcmp.lt.s32.totalorder %v1047, 16
      %vm1088 = vcmp.lt.s32.totalorder %v1048, 16
      %vm1089 = vcmp.lt.s32.totalorder %v1049, 16
      %vm1090 = vcmp.lt.s32.totalorder %v1050, 16
      %vm1091 = vcmp.lt.s32.totalorder %v1051, 16
      %vm1092 = vcmp.lt.s32.totalorder %v1052, 16
      %vm1093 = vcmp.lt.s32.totalorder %v1053, 16
      %vm1094 = vcmp.lt.s32.totalorder %v1054, 16
      %vm1095 = vcmp.lt.s32.totalorder %v1055, 16
      %vm1096 = vcmp.lt.s32.totalorder %v1056, 16
      %vm1097 = vmand %vm1061, %vm1079
      %vm1098 = vmand %vm1062, %vm1080
      %vm1099 = vmand %vm1063, %vm1081
      %vm1100 = vmand %vm1064, %vm1082
      %vm1101 = vmand %vm1065, %vm1083
      %vm1102 = vmand %vm1066, %vm1084
      %vm1103 = vmand %vm1067, %vm1085
      %vm1104 = vmand %vm1068, %vm1086
      %vm1105 = vmand %vm1069, %vm1087
      %vm1106 = vmand %vm1070, %vm1088
      %vm1107 = vmand %vm1071, %vm1089
      %vm1108 = vmand %vm1072, %vm1090
      %vm1109 = vmand %vm1073, %vm1091
      %vm1110 = vmand %vm1074, %vm1092
      %vm1111 = vmand %vm1075, %vm1093
      %vm1112 = vmand %vm1076, %vm1094
      %vm1113 = vmand %vm1077, %vm1095
      %vm1114 = vmand %vm1078, %vm1096
      %vm1115 = vcmp.ge.s32.totalorder %v1058, 1
      %vm1116 = vcmp.ge.s32.totalorder %v1059, 1
      %vm1117 = vcmp.ge.s32.totalorder %v1060, 1
      %vm1118 = vmand %vm1097, %vm1115
      %vm1119 = vmand %vm1097, %vm1116
      %vm1120 = vmand %vm1097, %vm1117
      %vm1121 = vmand %vm1098, %vm1115
      %vm1122 = vmand %vm1098, %vm1116
      %vm1123 = vmand %vm1098, %vm1117
      %vm1124 = vmand %vm1099, %vm1115
      %vm1125 = vmand %vm1099, %vm1116
      %vm1126 = vmand %vm1099, %vm1117
      %vm1127 = vmand %vm1100, %vm1115
      %vm1128 = vmand %vm1100, %vm1116
      %vm1129 = vmand %vm1100, %vm1117
      %vm1130 = vmand %vm1101, %vm1115
      %vm1131 = vmand %vm1101, %vm1116
      %vm1132 = vmand %vm1101, %vm1117
      %vm1133 = vmand %vm1102, %vm1115
      %vm1134 = vmand %vm1102, %vm1116
      %vm1135 = vmand %vm1102, %vm1117
      %vm1136 = vmand %vm1103, %vm1115
      %vm1137 = vmand %vm1103, %vm1116
      %vm1138 = vmand %vm1103, %vm1117
      %vm1139 = vmand %vm1104, %vm1115
      %vm1140 = vmand %vm1104, %vm1116
      %vm1141 = vmand %vm1104, %vm1117
      %vm1142 = vmand %vm1105, %vm1115
      %vm1143 = vmand %vm1105, %vm1116
      %vm1144 = vmand %vm1105, %vm1117
      %vm1145 = vmand %vm1106, %vm1115
      %vm1146 = vmand %vm1106, %vm1116
      %vm1147 = vmand %vm1106, %vm1117
      %vm1148 = vmand %vm1107, %vm1115
      %vm1149 = vmand %vm1107, %vm1116
      %vm1150 = vmand %vm1107, %vm1117
      %vm1151 = vmand %vm1108, %vm1115
      %vm1152 = vmand %vm1108, %vm1116
      %vm1153 = vmand %vm1108, %vm1117
      %vm1154 = vmand %vm1109, %vm1115
      %vm1155 = vmand %vm1109, %vm1116
      %vm1156 = vmand %vm1109, %vm1117
      %vm1157 = vmand %vm1110, %vm1115
      %vm1158 = vmand %vm1110, %vm1116
      %vm1159 = vmand %vm1110, %vm1117
      %vm1160 = vmand %vm1111, %vm1115
      %vm1161 = vmand %vm1111, %vm1116
      %vm1162 = vmand %vm1111, %vm1117
      %vm1163 = vmand %vm1112, %vm1115
      %vm1164 = vmand %vm1112, %vm1116
      %vm1165 = vmand %vm1112, %vm1117
      %vm1166 = vmand %vm1113, %vm1115
      %vm1167 = vmand %vm1113, %vm1116
      %vm1168 = vmand %vm1113, %vm1117
      %vm1169 = vmand %vm1114, %vm1115
      %vm1170 = vmand %vm1114, %vm1116
      %vm1171 = vmand %vm1114, %vm1117
      %vm1172 = vcmp.le.s32.totalorder %v1058, 16
      %vm1173 = vcmp.le.s32.totalorder %v1059, 16
      %vm1174 = vcmp.le.s32.totalorder %v1060, 16
      %vm1175 = vmand %vm1118, %vm1172
      %vm1176 = vmand %vm1119, %vm1173
      %vm1177 = vmand %vm1120, %vm1174
      %vm1178 = vmand %vm1121, %vm1172
      %vm1179 = vmand %vm1122, %vm1173
      %vm1180 = vmand %vm1123, %vm1174
      %vm1181 = vmand %vm1124, %vm1172
      %vm1182 = vmand %vm1125, %vm1173
      %vm1183 = vmand %vm1126, %vm1174
      %vm1184 = vmand %vm1127, %vm1172
      %vm1185 = vmand %vm1128, %vm1173
      %vm1186 = vmand %vm1129, %vm1174
      %vm1187 = vmand %vm1130, %vm1172
      %vm1188 = vmand %vm1131, %vm1173
      %vm1189 = vmand %vm1132, %vm1174
      %vm1190 = vmand %vm1133, %vm1172
      %vm1191 = vmand %vm1134, %vm1173
      %vm1192 = vmand %vm1135, %vm1174
      %vm1193 = vmand %vm1136, %vm1172
      %vm1194 = vmand %vm1137, %vm1173
      %vm1195 = vmand %vm1138, %vm1174
      %vm1196 = vmand %vm1139, %vm1172
      %vm1197 = vmand %vm1140, %vm1173
      %vm1198 = vmand %vm1141, %vm1174
      %vm1199 = vmand %vm1142, %vm1172
      %vm1200 = vmand %vm1143, %vm1173
      %vm1201 = vmand %vm1144, %vm1174
      %vm1202 = vmand %vm1145, %vm1172
      %vm1203 = vmand %vm1146, %vm1173
      %vm1204 = vmand %vm1147, %vm1174
      %vm1205 = vmand %vm1148, %vm1172
      %vm1206 = vmand %vm1149, %vm1173
      %vm1207 = vmand %vm1150, %vm1174
      %vm1208 = vmand %vm1151, %vm1172
      %vm1209 = vmand %vm1152, %vm1173
      %vm1210 = vmand %vm1153, %vm1174
      %vm1211 = vmand %vm1154, %vm1172
      %vm1212 = vmand %vm1155, %vm1173
      %vm1213 = vmand %vm1156, %vm1174
      %vm1214 = vmand %vm1157, %vm1172
      %vm1215 = vmand %vm1158, %vm1173
      %vm1216 = vmand %vm1159, %vm1174
      %vm1217 = vmand %vm1160, %vm1172
      %vm1218 = vmand %vm1161, %vm1173
      %vm1219 = vmand %vm1162, %vm1174
      %vm1220 = vmand %vm1163, %vm1172
      %vm1221 = vmand %vm1164, %vm1173
      %vm1222 = vmand %vm1165, %vm1174
      %vm1223 = vmand %vm1166, %vm1172
      %vm1224 = vmand %vm1167, %vm1173
      %vm1225 = vmand %vm1168, %vm1174
      %vm1226 = vmand %vm1169, %vm1172
      %vm1227 = vmand %vm1170, %vm1173
      %vm1228 = vmand %vm1171, %vm1174
      %v1229 = vsel %vm1175, 1, 0
      %v1230 = vsel %vm1176, 1, 0
      %v1231 = vsel %vm1177, 1, 0
      %v1232 = vsel %vm1178, 1, 0
      %v1233 = vsel %vm1179, 1, 0
      %v1234 = vsel %vm1180, 1, 0
      %v1235 = vsel %vm1181, 1, 0
      %v1236 = vsel %vm1182, 1, 0
      %v1237 = vsel %vm1183, 1, 0
      %v1238 = vsel %vm1184, 1, 0
      %v1239 = vsel %vm1185, 1, 0
      %v1240 = vsel %vm1186, 1, 0
      %v1241 = vsel %vm1187, 1, 0
      %v1242 = vsel %vm1188, 1, 0
      %v1243 = vsel %vm1189, 1, 0
      %v1244 = vsel %vm1190, 1, 0
      %v1245 = vsel %vm1191, 1, 0
      %v1246 = vsel %vm1192, 1, 0
      %v1247 = vsel %vm1193, 1, 0
      %v1248 = vsel %vm1194, 1, 0
      %v1249 = vsel %vm1195, 1, 0
      %v1250 = vsel %vm1196, 1, 0
      %v1251 = vsel %vm1197, 1, 0
      %v1252 = vsel %vm1198, 1, 0
      %v1253 = vsel %vm1199, 1, 0
      %v1254 = vsel %vm1200, 1, 0
      %v1255 = vsel %vm1201, 1, 0
      %v1256 = vsel %vm1202, 1, 0
      %v1257 = vsel %vm1203, 1, 0
      %v1258 = vsel %vm1204, 1, 0
      %v1259 = vsel %vm1205, 1, 0
      %v1260 = vsel %vm1206, 1, 0
      %v1261 = vsel %vm1207, 1, 0
      %v1262 = vsel %vm1208, 1, 0
      %v1263 = vsel %vm1209, 1, 0
      %v1264 = vsel %vm1210, 1, 0
      %v1265 = vsel %vm1211, 1, 0
      %v1266 = vsel %vm1212, 1, 0
      %v1267 = vsel %vm1213, 1, 0
      %v1268 = vsel %vm1214, 1, 0
      %v1269 = vsel %vm1215, 1, 0
      %v1270 = vsel %vm1216, 1, 0
      %v1271 = vsel %vm1217, 1, 0
      %v1272 = vsel %vm1218, 1, 0
      %v1273 = vsel %vm1219, 1, 0
      %v1274 = vsel %vm1220, 1, 0
      %v1275 = vsel %vm1221, 1, 0
      %v1276 = vsel %vm1222, 1, 0
      %v1277 = vsel %vm1223, 1, 0
      %v1278 = vsel %vm1224, 1, 0
      %v1279 = vsel %vm1225, 1, 0
      %v1280 = vsel %vm1226, 1, 0
      %v1281 = vsel %vm1227, 1, 0
      %v1282 = vsel %vm1228, 1, 0
      %vm1283 = vcmp.eq.s32.totalorder %v1229, 1
      %vm1284 = vcmp.eq.s32.totalorder %v1230, 1
      %vm1285 = vcmp.eq.s32.totalorder %v1231, 1
      %vm1286 = vcmp.eq.s32.totalorder %v1232, 1
      %vm1287 = vcmp.eq.s32.totalorder %v1233, 1
      %vm1288 = vcmp.eq.s32.totalorder %v1234, 1
      %vm1289 = vcmp.eq.s32.totalorder %v1235, 1
      %vm1290 = vcmp.eq.s32.totalorder %v1236, 1
      %vm1291 = vcmp.eq.s32.totalorder %v1237, 1
      %vm1292 = vcmp.eq.s32.totalorder %v1238, 1
      %vm1293 = vcmp.eq.s32.totalorder %v1239, 1
      %vm1294 = vcmp.eq.s32.totalorder %v1240, 1
      %vm1295 = vcmp.eq.s32.totalorder %v1241, 1
      %vm1296 = vcmp.eq.s32.totalorder %v1242, 1
      %vm1297 = vcmp.eq.s32.totalorder %v1243, 1
      %vm1298 = vcmp.eq.s32.totalorder %v1244, 1
      %vm1299 = vcmp.eq.s32.totalorder %v1245, 1
      %vm1300 = vcmp.eq.s32.totalorder %v1246, 1
      %vm1301 = vcmp.eq.s32.totalorder %v1247, 1
      %vm1302 = vcmp.eq.s32.totalorder %v1248, 1
      %vm1303 = vcmp.eq.s32.totalorder %v1249, 1
      %vm1304 = vcmp.eq.s32.totalorder %v1250, 1
      %vm1305 = vcmp.eq.s32.totalorder %v1251, 1
      %vm1306 = vcmp.eq.s32.totalorder %v1252, 1
      %vm1307 = vcmp.eq.s32.totalorder %v1253, 1
      %vm1308 = vcmp.eq.s32.totalorder %v1254, 1
      %vm1309 = vcmp.eq.s32.totalorder %v1255, 1
      %vm1310 = vcmp.eq.s32.totalorder %v1256, 1
      %vm1311 = vcmp.eq.s32.totalorder %v1257, 1
      %vm1312 = vcmp.eq.s32.totalorder %v1258, 1
      %vm1313 = vcmp.eq.s32.totalorder %v1259, 1
      %vm1314 = vcmp.eq.s32.totalorder %v1260, 1
      %vm1315 = vcmp.eq.s32.totalorder %v1261, 1
      %vm1316 = vcmp.eq.s32.totalorder %v1262, 1
      %vm1317 = vcmp.eq.s32.totalorder %v1263, 1
      %vm1318 = vcmp.eq.s32.totalorder %v1264, 1
      %vm1319 = vcmp.eq.s32.totalorder %v1265, 1
      %vm1320 = vcmp.eq.s32.totalorder %v1266, 1
      %vm1321 = vcmp.eq.s32.totalorder %v1267, 1
      %vm1322 = vcmp.eq.s32.totalorder %v1268, 1
      %vm1323 = vcmp.eq.s32.totalorder %v1269, 1
      %vm1324 = vcmp.eq.s32.totalorder %v1270, 1
      %vm1325 = vcmp.eq.s32.totalorder %v1271, 1
      %vm1326 = vcmp.eq.s32.totalorder %v1272, 1
      %vm1327 = vcmp.eq.s32.totalorder %v1273, 1
      %vm1328 = vcmp.eq.s32.totalorder %v1274, 1
      %vm1329 = vcmp.eq.s32.totalorder %v1275, 1
      %vm1330 = vcmp.eq.s32.totalorder %v1276, 1
      %vm1331 = vcmp.eq.s32.totalorder %v1277, 1
      %vm1332 = vcmp.eq.s32.totalorder %v1278, 1
      %vm1333 = vcmp.eq.s32.totalorder %v1279, 1
      %vm1334 = vcmp.eq.s32.totalorder %v1280, 1
      %vm1335 = vcmp.eq.s32.totalorder %v1281, 1
      %vm1336 = vcmp.eq.s32.totalorder %v1282, 1
      %v1337 = vsel %vm1283, %v983, 0.0
      %v1338 = vsel %vm1284, %v984, 0.0
      %v1339 = vsel %vm1285, %v985, 0.0
      %v1340 = vsel %vm1286, %v986, 0.0
      %v1341 = vsel %vm1287, %v987, 0.0
      %v1342 = vsel %vm1288, %v988, 0.0
      %v1343 = vsel %vm1289, %v989, 0.0
      %v1344 = vsel %vm1290, %v990, 0.0
      %v1345 = vsel %vm1291, %v991, 0.0
      %v1346 = vsel %vm1292, %v992, 0.0
      %v1347 = vsel %vm1293, %v993, 0.0
      %v1348 = vsel %vm1294, %v994, 0.0
      %v1349 = vsel %vm1295, %v995, 0.0
      %v1350 = vsel %vm1296, %v996, 0.0
      %v1351 = vsel %vm1297, %v997, 0.0
      %v1352 = vsel %vm1298, %v998, 0.0
      %v1353 = vsel %vm1299, %v999, 0.0
      %v1354 = vsel %vm1300, %v1000, 0.0
      %v1355 = vsel %vm1301, %v1001, 0.0
      %v1356 = vsel %vm1302, %v1002, 0.0
      %v1357 = vsel %vm1303, %v1003, 0.0
      %v1358 = vsel %vm1304, %v1004, 0.0
      %v1359 = vsel %vm1305, %v1005, 0.0
      %v1360 = vsel %vm1306, %v1006, 0.0
      %v1361 = vsel %vm1307, %v1007, 0.0
      %v1362 = vsel %vm1308, %v1008, 0.0
      %v1363 = vsel %vm1309, %v1009, 0.0
      %v1364 = vsel %vm1310, %v1010, 0.0
      %v1365 = vsel %vm1311, %v1011, 0.0
      %v1366 = vsel %vm1312, %v1012, 0.0
      %v1367 = vsel %vm1313, %v1013, 0.0
      %v1368 = vsel %vm1314, %v1014, 0.0
      %v1369 = vsel %vm1315, %v1015, 0.0
      %v1370 = vsel %vm1316, %v1016, 0.0
      %v1371 = vsel %vm1317, %v1017, 0.0
      %v1372 = vsel %vm1318, %v1018, 0.0
      %v1373 = vsel %vm1319, %v1019, 0.0
      %v1374 = vsel %vm1320, %v1020, 0.0
      %v1375 = vsel %vm1321, %v1021, 0.0
      %v1376 = vsel %vm1322, %v1022, 0.0
      %v1377 = vsel %vm1323, %v1023, 0.0
      %v1378 = vsel %vm1324, %v1024, 0.0
      %v1379 = vsel %vm1325, %v1025, 0.0
      %v1380 = vsel %vm1326, %v1026, 0.0
      %v1381 = vsel %vm1327, %v1027, 0.0
      %v1382 = vsel %vm1328, %v1028, 0.0
      %v1383 = vsel %vm1329, %v1029, 0.0
      %v1384 = vsel %vm1330, %v1030, 0.0
      %v1385 = vsel %vm1331, %v1031, 0.0
      %v1386 = vsel %vm1332, %v1032, 0.0
      %v1387 = vsel %vm1333, %v1033, 0.0
      %v1388 = vsel %vm1334, %v1034, 0.0
      %v1389 = vsel %vm1335, %v1035, 0.0
      %v1390 = vsel %vm1336, %v1036, 0.0
      %v1391 = vpack.c.bf16 %v1338, %v1337
      %v1392 = vpack.c.bf16 %v1339, %v1339
      %v1393 = vpack.c.bf16 %v1341, %v1340
      %v1394 = vpack.c.bf16 %v1342, %v1342
      %v1395 = vpack.c.bf16 %v1344, %v1343
      %v1396 = vpack.c.bf16 %v1345, %v1345
      %v1397 = vpack.c.bf16 %v1347, %v1346
      %v1398 = vpack.c.bf16 %v1348, %v1348
      %v1399 = vpack.c.bf16 %v1350, %v1349
      %v1400 = vpack.c.bf16 %v1351, %v1351
      %v1401 = vpack.c.bf16 %v1353, %v1352
      %v1402 = vpack.c.bf16 %v1354, %v1354
      %v1403 = vpack.c.bf16 %v1356, %v1355
      %v1404 = vpack.c.bf16 %v1357, %v1357
      %v1405 = vpack.c.bf16 %v1359, %v1358
      %v1406 = vpack.c.bf16 %v1360, %v1360
      %v1407 = vpack.c.bf16 %v1362, %v1361
      %v1408 = vpack.c.bf16 %v1363, %v1363
      %v1409 = vpack.c.bf16 %v1365, %v1364
      %v1410 = vpack.c.bf16 %v1366, %v1366
      %v1411 = vpack.c.bf16 %v1368, %v1367
      %v1412 = vpack.c.bf16 %v1369, %v1369
      %v1413 = vpack.c.bf16 %v1371, %v1370
      %v1414 = vpack.c.bf16 %v1372, %v1372
      %v1415 = vpack.c.bf16 %v1374, %v1373
      %v1416 = vpack.c.bf16 %v1375, %v1375
      %v1417 = vpack.c.bf16 %v1377, %v1376
      %v1418 = vpack.c.bf16 %v1378, %v1378
      %v1419 = vpack.c.bf16 %v1380, %v1379
      %v1420 = vpack.c.bf16 %v1381, %v1381
      %v1421 = vpack.c.bf16 %v1383, %v1382
      %v1422 = vpack.c.bf16 %v1384, %v1384
      %v1423 = vpack.c.bf16 %v1386, %v1385
      %v1424 = vpack.c.bf16 %v1387, %v1387
      %v1425 = vpack.c.bf16 %v1389, %v1388
      %v1426 = vpack.c.bf16 %v1390, %v1390
      %v1463 = vunpack.c.l.b16 %v1391
      %v1464 = vunpack.c.h.b16 %v1391
      %v1465 = vunpack.c.l.b16 %v1392
      %v1466 = vunpack.c.l.b16 %v1393
      %v1467 = vunpack.c.h.b16 %v1393
      %v1468 = vunpack.c.l.b16 %v1394
      %v1469 = vunpack.c.l.b16 %v1395
      %v1470 = vunpack.c.h.b16 %v1395
      %v1471 = vunpack.c.l.b16 %v1396
      %v1472 = vunpack.c.l.b16 %v1397
      %v1473 = vunpack.c.h.b16 %v1397
      %v1474 = vunpack.c.l.b16 %v1398
      %v1475 = vunpack.c.l.b16 %v1399
      %v1476 = vunpack.c.h.b16 %v1399
      %v1477 = vunpack.c.l.b16 %v1400
      %v1478 = vunpack.c.l.b16 %v1401
      %v1479 = vunpack.c.h.b16 %v1401
      %v1480 = vunpack.c.l.b16 %v1402
      %v1481 = vunpack.c.l.b16 %v1403
      %v1482 = vunpack.c.h.b16 %v1403
      %v1483 = vunpack.c.l.b16 %v1404
      %v1484 = vunpack.c.l.b16 %v1405
      %v1485 = vunpack.c.h.b16 %v1405
      %v1486 = vunpack.c.l.b16 %v1406
      %v1487 = vunpack.c.l.b16 %v1407
      %v1488 = vunpack.c.h.b16 %v1407
      %v1489 = vunpack.c.l.b16 %v1408
      %v1490 = vunpack.c.l.b16 %v1409
      %v1491 = vunpack.c.h.b16 %v1409
      %v1492 = vunpack.c.l.b16 %v1410
      %v1493 = vunpack.c.l.b16 %v1411
      %v1494 = vunpack.c.h.b16 %v1411
      %v1495 = vunpack.c.l.b16 %v1412
      %v1496 = vunpack.c.l.b16 %v1413
      %v1497 = vunpack.c.h.b16 %v1413
      %v1498 = vunpack.c.l.b16 %v1414
      %v1499 = vunpack.c.l.b16 %v1415
      %v1500 = vunpack.c.h.b16 %v1415
      %v1501 = vunpack.c.l.b16 %v1416
      %v1502 = vunpack.c.l.b16 %v1417
      %v1503 = vunpack.c.h.b16 %v1417
      %v1504 = vunpack.c.l.b16 %v1418
      %v1505 = vunpack.c.l.b16 %v1419
      %v1506 = vunpack.c.h.b16 %v1419
      %v1507 = vunpack.c.l.b16 %v1420
      %v1508 = vunpack.c.l.b16 %v1421
      %v1509 = vunpack.c.h.b16 %v1421
      %v1510 = vunpack.c.l.b16 %v1422
      %v1511 = vunpack.c.l.b16 %v1423
      %v1512 = vunpack.c.h.b16 %v1423
      %v1513 = vunpack.c.l.b16 %v1424
      %v1514 = vunpack.c.l.b16 %v1425
      %v1515 = vunpack.c.h.b16 %v1425
      %v1516 = vunpack.c.l.b16 %v1426
      %v1517 = vpack.c.b16 %v1463, %v1463
      %v1518 = vpack.c.b16 %v1464, %v1464
      %v1519 = vpack.c.b16 %v1465, %v1465
      %v1520 = vpack.c.b16 %v1466, %v1466
      %v1521 = vpack.c.b16 %v1467, %v1467
      %v1522 = vpack.c.b16 %v1468, %v1468
      %v1523 = vpack.c.b16 %v1469, %v1469
      %v1524 = vpack.c.b16 %v1470, %v1470
      %v1525 = vpack.c.b16 %v1471, %v1471
      %v1526 = vpack.c.b16 %v1472, %v1472
      %v1527 = vpack.c.b16 %v1473, %v1473
      %v1528 = vpack.c.b16 %v1474, %v1474
      %v1529 = vpack.c.b16 %v1475, %v1475
      %v1530 = vpack.c.b16 %v1476, %v1476
      %v1531 = vpack.c.b16 %v1477, %v1477
      %v1532 = vpack.c.b16 %v1478, %v1478
      %v1533 = vpack.c.b16 %v1479, %v1479
      %v1534 = vpack.c.b16 %v1480, %v1480
      %v1535 = vpack.c.b16 %v1481, %v1481
      %v1536 = vpack.c.b16 %v1482, %v1482
      %v1537 = vpack.c.b16 %v1483, %v1483
      %v1538 = vpack.c.b16 %v1484, %v1484
      %v1539 = vpack.c.b16 %v1485, %v1485
      %v1540 = vpack.c.b16 %v1486, %v1486
      %v1541 = vpack.c.b16 %v1487, %v1487
      %v1542 = vpack.c.b16 %v1488, %v1488
      %v1543 = vpack.c.b16 %v1489, %v1489
      %v1544 = vpack.c.b16 %v1490, %v1490
      %v1545 = vpack.c.b16 %v1491, %v1491
      %v1546 = vpack.c.b16 %v1492, %v1492
      %v1547 = vpack.c.b16 %v1493, %v1493
      %v1548 = vpack.c.b16 %v1494, %v1494
      %v1549 = vpack.c.b16 %v1495, %v1495
      %v1550 = vpack.c.b16 %v1496, %v1496
      %v1551 = vpack.c.b16 %v1497, %v1497
      %v1552 = vpack.c.b16 %v1498, %v1498
      %v1553 = vpack.c.b16 %v1499, %v1499
      %v1554 = vpack.c.b16 %v1500, %v1500
      %v1555 = vpack.c.b16 %v1501, %v1501
      %v1556 = vpack.c.b16 %v1502, %v1502
      %v1557 = vpack.c.b16 %v1503, %v1503
      %v1558 = vpack.c.b16 %v1504, %v1504
      %v1559 = vpack.c.b16 %v1505, %v1505
      %v1560 = vpack.c.b16 %v1506, %v1506
      %v1561 = vpack.c.b16 %v1507, %v1507
      %v1562 = vpack.c.b16 %v1508, %v1508
      %v1563 = vpack.c.b16 %v1509, %v1509
      %v1564 = vpack.c.b16 %v1510, %v1510
      %v1565 = vpack.c.b16 %v1511, %v1511
      %v1566 = vpack.c.b16 %v1512, %v1512
      %v1567 = vpack.c.b16 %v1513, %v1513
      %v1568 = vpack.c.b16 %v1514, %v1514
      %v1569 = vpack.c.b16 %v1515, %v1515
      %v1570 = vpack.c.b16 %v1516, %v1516
      %1625 = vst [vmem:[#allocation2] sm:$0xf] %v1517
      %1626 = vst [vmem:[#allocation2 + $0x4] sm:$0xf] %v1518
      %1627 = vst [vmem:[#allocation2 + $0x8] sm:$0xf] %v1519
      %1628 = vst [vmem:[#allocation2 + $0xc] sm:$0xf] %v1520
      %1629 = vst [vmem:[#allocation2 + $0x10] sm:$0xf] %v1521
      %1630 = vst [vmem:[#allocation2 + $0x14] sm:$0xf] %v1522
      %1631 = vst [vmem:[#allocation2 + $0x18] sm:$0xf] %v1523
      %1632 = vst [vmem:[#allocation2 + $0x1c] sm:$0xf] %v1524
      %1633 = vst [vmem:[#allocation2 + $0x20] sm:$0xf] %v1525
      %1634 = vst [vmem:[#allocation2 + $0x24] sm:$0xf] %v1526
      %1635 = vst [vmem:[#allocation2 + $0x28] sm:$0xf] %v1527
      %1636 = vst [vmem:[#allocation2 + $0x2c] sm:$0xf] %v1528
      %1637 = vst [vmem:[#allocation2 + $0x30] sm:$0xf] %v1529
      %1638 = vst [vmem:[#allocation2 + $0x34] sm:$0xf] %v1530
      %1639 = vst [vmem:[#allocation2 + $0x38] sm:$0xf] %v1531
      %1640 = vst [vmem:[#allocation2 + $0x3c] sm:$0xf] %v1532
      %1641 = vst [vmem:[#allocation2 + $0x40] sm:$0xf] %v1533
      %1642 = vst [vmem:[#allocation2 + $0x44] sm:$0xf] %v1534
      %1643 = vst [vmem:[#allocation2 + $0x48] sm:$0xf] %v1535
      %1644 = vst [vmem:[#allocation2 + $0x4c] sm:$0xf] %v1536
      %1645 = vst [vmem:[#allocation2 + $0x50] sm:$0xf] %v1537
      %1646 = vst [vmem:[#allocation2 + $0x54] sm:$0xf] %v1538
      %1647 = vst [vmem:[#allocation2 + $0x58] sm:$0xf] %v1539
      %1648 = vst [vmem:[#allocation2 + $0x5c] sm:$0xf] %v1540
      %1649 = vst [vmem:[#allocation2 + $0x60] sm:$0xf] %v1541
      %1650 = vst [vmem:[#allocation2 + $0x64] sm:$0xf] %v1542
      %1651 = vst [vmem:[#allocation2 + $0x68] sm:$0xf] %v1543
      %1652 = vst [vmem:[#allocation2 + $0x6c] sm:$0xf] %v1544
      %1653 = vst [vmem:[#allocation2 + $0x70] sm:$0xf] %v1545
      %1654 = vst [vmem:[#allocation2 + $0x74] sm:$0xf] %v1546
      %1655 = vst [vmem:[#allocation2 + $0x78] sm:$0xf] %v1547
      %1656 = vst [vmem:[#allocation2 + $0x7c] sm:$0xf] %v1548
      %1657 = vst [vmem:[#allocation2 + $0x80] sm:$0xf] %v1549
      %1658 = vst [vmem:[#allocation2 + $0x84] sm:$0xf] %v1550
      %1659 = vst [vmem:[#allocation2 + $0x88] sm:$0xf] %v1551
      %1660 = vst [vmem:[#allocation2 + $0x8c] sm:$0xf] %v1552
      %1661 = vst [vmem:[#allocation2 + $0x90] sm:$0xf] %v1553
      %1662 = vst [vmem:[#allocation2 + $0x94] sm:$0xf] %v1554
      %1663 = vst [vmem:[#allocation2 + $0x98] sm:$0xf] %v1555
      %1664 = vst [vmem:[#allocation2 + $0x9c] sm:$0xf] %v1556
      %1665 = vst [vmem:[#allocation2 + $0xa0] sm:$0xf] %v1557
      %1666 = vst [vmem:[#allocation2 + $0xa4] sm:$0xf] %v1558
      %1667 = vst [vmem:[#allocation2 + $0xa8] sm:$0xf] %v1559
      %1668 = vst [vmem:[#allocation2 + $0xac] sm:$0xf] %v1560
      %1669 = vst [vmem:[#allocation2 + $0xb0] sm:$0xf] %v1561
      %1670 = vst [vmem:[#allocation2 + $0xb4] sm:$0xf] %v1562
      %1671 = vst [vmem:[#allocation2 + $0xb8] sm:$0xf] %v1563
      %1672 = vst [vmem:[#allocation2 + $0xbc] sm:$0xf] %v1564
      %1673 = vst [vmem:[#allocation2 + $0xc0] sm:$0xf] %v1565
      %1674 = vst [vmem:[#allocation2 + $0xc4] sm:$0xf] %v1566
      %1675 = vst [vmem:[#allocation2 + $0xc8] sm:$0xf] %v1567
      %1676 = vst [vmem:[#allocation2 + $0xcc] sm:$0xf] %v1568
      %1677 = vst [vmem:[#allocation2 + $0xd0] sm:$0xf] %v1569
      %1678 = vst [vmem:[#allocation2 + $0xd4] sm:$0xf] %v1570
      %v1679 = vld [vmem:[#allocation2] sm:$0xf]
      %v1680 = vld [vmem:[#allocation2 + $0x4] sm:$0xf]
      %v1681 = vld [vmem:[#allocation2 + $0xc] sm:$0xf]
      %v1682 = vld [vmem:[#allocation2 + $0x10] sm:$0xf]
      %v1683 = vld [vmem:[#allocation2 + $0x18] sm:$0xf]
      %v1684 = vld [vmem:[#allocation2 + $0x1c] sm:$0xf]
      %v1685 = vld [vmem:[#allocation2 + $0x24] sm:$0xf]
      %v1686 = vld [vmem:[#allocation2 + $0x28] sm:$0xf]
      %v1687 = vld [vmem:[#allocation2 + $0x30] sm:$0xf]
      %v1688 = vld [vmem:[#allocation2 + $0x34] sm:$0xf]
      %v1689 = vld [vmem:[#allocation2 + $0x3c] sm:$0xf]
      %v1690 = vld [vmem:[#allocation2 + $0x40] sm:$0xf]
      %v1691 = vld [vmem:[#allocation2 + $0x48] sm:$0xf]
      %v1692 = vld [vmem:[#allocation2 + $0x4c] sm:$0xf]
      %v1693 = vld [vmem:[#allocation2 + $0x54] sm:$0xf]
      %v1694 = vld [vmem:[#allocation2 + $0x58] sm:$0xf]
      %v1695 = vld [vmem:[#allocation2 + $0x60] sm:$0xf]
      %v1696 = vld [vmem:[#allocation2 + $0x64] sm:$0xf]
      %v1697 = vld [vmem:[#allocation2 + $0x6c] sm:$0xf]
      %v1698 = vld [vmem:[#allocation2 + $0x70] sm:$0xf]
      %v1699 = vld [vmem:[#allocation2 + $0x78] sm:$0xf]
      %v1700 = vld [vmem:[#allocation2 + $0x7c] sm:$0xf]
      %v1701 = vld [vmem:[#allocation2 + $0x84] sm:$0xf]
      %v1702 = vld [vmem:[#allocation2 + $0x88] sm:$0xf]
      %v1703 = vld [vmem:[#allocation2 + $0x90] sm:$0xf]
      %v1704 = vld [vmem:[#allocation2 + $0x94] sm:$0xf]
      %v1705 = vld [vmem:[#allocation2 + $0x9c] sm:$0xf]
      %v1706 = vld [vmem:[#allocation2 + $0xa0] sm:$0xf]
      %v1707 = vld [vmem:[#allocation2 + $0xa8] sm:$0xf]
      %v1708 = vld [vmem:[#allocation2 + $0xac] sm:$0xf]
      %v1709 = vld [vmem:[#allocation2 + $0xb4] sm:$0xf]
      %v1710 = vld [vmem:[#allocation2 + $0xb8] sm:$0xf]
      %v1711 = vld [vmem:[%s4] sm:$0xf]
      %v1712 = vld [vmem:[%s4 + $0x4] sm:$0xf]
      %v1713 = vld [vmem:[%s4 + $0x8] sm:$0xf]
      %v1714 = vld [vmem:[%s4 + $0xc] sm:$0xf]
      %v1715 = vld [vmem:[%s4 + $0x10] sm:$0xf]
      %v1716 = vld [vmem:[%s4 + $0x14] sm:$0xf]
      %v1717 = vld [vmem:[%s4 + $0x18] sm:$0xf]
      %v1718 = vld [vmem:[%s4 + $0x1c] sm:$0xf]
      %v1719 = vld [vmem:[%s4 + $0x20] sm:$0xf]
      %v1720 = vld [vmem:[%s4 + $0x24] sm:$0xf]
      %v1721 = vld [vmem:[%s4 + $0x28] sm:$0xf]
      %v1722 = vld [vmem:[%s4 + $0x2c] sm:$0xf]
      %v1723 = vld [vmem:[%s4 + $0x30] sm:$0xf]
      %v1724 = vld [vmem:[%s4 + $0x34] sm:$0xf]
      %v1725 = vld [vmem:[%s4 + $0x38] sm:$0xf]
      %v1726 = vld [vmem:[%s4 + $0x3c] sm:$0xf]
      %v1727 = vld [vmem:[#allocation2 + $0x8] sm:$0x1]
      %v1728 = vld [vmem:[#allocation2 + $0x14] sm:$0x1]
      %v1729 = vld [vmem:[#allocation2 + $0x20] sm:$0x1]
      %v1730 = vld [vmem:[#allocation2 + $0x2c] sm:$0x1]
      %v1731 = vld [vmem:[#allocation2 + $0x38] sm:$0x1]
      %v1732 = vld [vmem:[#allocation2 + $0x44] sm:$0x1]
      %v1733 = vld [vmem:[#allocation2 + $0x50] sm:$0x1]
      %v1734 = vld [vmem:[#allocation2 + $0x5c] sm:$0x1]
      %v1735 = vld [vmem:[#allocation2 + $0x68] sm:$0x1]
      %v1736 = vld [vmem:[#allocation2 + $0x74] sm:$0x1]
      %v1737 = vld [vmem:[#allocation2 + $0x80] sm:$0x1]
      %v1738 = vld [vmem:[#allocation2 + $0x8c] sm:$0x1]
      %v1739 = vld [vmem:[#allocation2 + $0x98] sm:$0x1]
      %v1740 = vld [vmem:[#allocation2 + $0xa4] sm:$0x1]
      %v1741 = vld [vmem:[#allocation2 + $0xb0] sm:$0x1]
      %v1742 = vld [vmem:[#allocation2 + $0xbc] sm:$0x1]
      %vm1743 = vsmask.f32 3328
      %vm1744 = vsmask.f32 7440
      %vm1745 = vmor %vm1743, %vm1744
      %v1747 = vshrl.u32 %v1679, 16
      %v1749 = vrot.slane %v1747, 4
      %v1750 = vshll.u32 %v1679, 16
      %v1752 = vrot.slane %v1750, 5
      %v1753 = vor.u32 %v1749, %v1752
      %v1754 = vrot.slane %v1753, 4
      %v1756 = vshll.u32 %v1680, 16
      %v1758 = vrot.slane %v1756, 5
      %v1759 = vsel %vm1745, %v1754, %v1758
      %v1760 = vshrl.u32 %v1680, 16
      %v1762 = vrot.slane %v1760, 4
      %v1763 = vor.u32 %v1762, %v1758
      %v1764 = vrot.slane %v1763, 4
      %v1766 = vshll.u32 %v1727, 16
      %v1768 = vrot.slane %v1766, 5
      %v1769 = vsel %vm1745, %v1764, %v1768
      %v1771 = vshrl.u32 %v1681, 16
      %v1773 = vrot.slane %v1771, 4
      %v1774 = vshll.u32 %v1681, 16
      %v1776 = vrot.slane %v1774, 5
      %v1777 = vor.u32 %v1773, %v1776
      %v1778 = vrot.slane %v1777, 4
      %v1780 = vshll.u32 %v1682, 16
      %v1782 = vrot.slane %v1780, 5
      %v1783 = vsel %vm1745, %v1778, %v1782
      %v1784 = vshrl.u32 %v1682, 16
      %v1786 = vrot.slane %v1784, 4
      %v1787 = vor.u32 %v1786, %v1782
      %v1788 = vrot.slane %v1787, 4
      %v1790 = vshll.u32 %v1728, 16
      %v1792 = vrot.slane %v1790, 5
      %v1793 = vsel %vm1745, %v1788, %v1792
      %v1795 = vshrl.u32 %v1683, 16
      %v1797 = vrot.slane %v1795, 4
      %v1798 = vshll.u32 %v1683, 16
      %v1800 = vrot.slane %v1798, 5
      %v1801 = vor.u32 %v1797, %v1800
      %v1802 = vrot.slane %v1801, 4
      %v1804 = vshll.u32 %v1684, 16
      %v1806 = vrot.slane %v1804, 5
      %v1807 = vsel %vm1745, %v1802, %v1806
      %v1808 = vshrl.u32 %v1684, 16
      %v1810 = vrot.slane %v1808, 4
      %v1811 = vor.u32 %v1810, %v1806
      %v1812 = vrot.slane %v1811, 4
      %v1814 = vshll.u32 %v1729, 16
      %v1816 = vrot.slane %v1814, 5
      %v1817 = vsel %vm1745, %v1812, %v1816
      %v1819 = vshrl.u32 %v1685, 16
      %v1821 = vrot.slane %v1819, 4
      %v1822 = vshll.u32 %v1685, 16
      %v1824 = vrot.slane %v1822, 5
      %v1825 = vor.u32 %v1821, %v1824
      %v1826 = vrot.slane %v1825, 4
      %v1828 = vshll.u32 %v1686, 16
      %v1830 = vrot.slane %v1828, 5
      %v1831 = vsel %vm1745, %v1826, %v1830
      %v1832 = vshrl.u32 %v1686, 16
      %v1834 = vrot.slane %v1832, 4
      %v1835 = vor.u32 %v1834, %v1830
      %v1836 = vrot.slane %v1835, 4
      %v1838 = vshll.u32 %v1730, 16
      %v1840 = vrot.slane %v1838, 5
      %v1841 = vsel %vm1745, %v1836, %v1840
      %v1843 = vshrl.u32 %v1687, 16
      %v1845 = vrot.slane %v1843, 4
      %v1846 = vshll.u32 %v1687, 16
      %v1848 = vrot.slane %v1846, 5
      %v1849 = vor.u32 %v1845, %v1848
      %v1850 = vrot.slane %v1849, 4
      %v1852 = vshll.u32 %v1688, 16
      %v1854 = vrot.slane %v1852, 5
      %v1855 = vsel %vm1745, %v1850, %v1854
      %v1856 = vshrl.u32 %v1688, 16
      %v1858 = vrot.slane %v1856, 4
      %v1859 = vor.u32 %v1858, %v1854
      %v1860 = vrot.slane %v1859, 4
      %v1862 = vshll.u32 %v1731, 16
      %v1864 = vrot.slane %v1862, 5
      %v1865 = vsel %vm1745, %v1860, %v1864
      %v1867 = vshrl.u32 %v1689, 16
      %v1869 = vrot.slane %v1867, 4
      %v1870 = vshll.u32 %v1689, 16
      %v1872 = vrot.slane %v1870, 5
      %v1873 = vor.u32 %v1869, %v1872
      %v1874 = vrot.slane %v1873, 4
      %v1876 = vshll.u32 %v1690, 16
      %v1878 = vrot.slane %v1876, 5
      %v1879 = vsel %vm1745, %v1874, %v1878
      %v1880 = vshrl.u32 %v1690, 16
      %v1882 = vrot.slane %v1880, 4
      %v1883 = vor.u32 %v1882, %v1878
      %v1884 = vrot.slane %v1883, 4
      %v1886 = vshll.u32 %v1732, 16
      %v1888 = vrot.slane %v1886, 5
      %v1889 = vsel %vm1745, %v1884, %v1888
      %v1891 = vshrl.u32 %v1691, 16
      %v1893 = vrot.slane %v1891, 4
      %v1894 = vshll.u32 %v1691, 16
      %v1896 = vrot.slane %v1894, 5
      %v1897 = vor.u32 %v1893, %v1896
      %v1898 = vrot.slane %v1897, 4
      %v1900 = vshll.u32 %v1692, 16
      %v1902 = vrot.slane %v1900, 5
      %v1903 = vsel %vm1745, %v1898, %v1902
      %v1904 = vshrl.u32 %v1692, 16
      %v1906 = vrot.slane %v1904, 4
      %v1907 = vor.u32 %v1906, %v1902
      %v1908 = vrot.slane %v1907, 4
      %v1910 = vshll.u32 %v1733, 16
      %v1912 = vrot.slane %v1910, 5
      %v1913 = vsel %vm1745, %v1908, %v1912
      %v1915 = vshrl.u32 %v1693, 16
      %v1917 = vrot.slane %v1915, 4
      %v1918 = vshll.u32 %v1693, 16
      %v1920 = vrot.slane %v1918, 5
      %v1921 = vor.u32 %v1917, %v1920
      %v1922 = vrot.slane %v1921, 4
      %v1924 = vshll.u32 %v1694, 16
      %v1926 = vrot.slane %v1924, 5
      %v1927 = vsel %vm1745, %v1922, %v1926
      %v1928 = vshrl.u32 %v1694, 16
      %v1930 = vrot.slane %v1928, 4
      %v1931 = vor.u32 %v1930, %v1926
      %v1932 = vrot.slane %v1931, 4
      %v1934 = vshll.u32 %v1734, 16
      %v1936 = vrot.slane %v1934, 5
      %v1937 = vsel %vm1745, %v1932, %v1936
      %v1939 = vshrl.u32 %v1695, 16
      %v1941 = vrot.slane %v1939, 4
      %v1942 = vshll.u32 %v1695, 16
      %v1944 = vrot.slane %v1942, 5
      %v1945 = vor.u32 %v1941, %v1944
      %v1946 = vrot.slane %v1945, 4
      %v1948 = vshll.u32 %v1696, 16
      %v1950 = vrot.slane %v1948, 5
      %v1951 = vsel %vm1745, %v1946, %v1950
      %v1952 = vshrl.u32 %v1696, 16
      %v1954 = vrot.slane %v1952, 4
      %v1955 = vor.u32 %v1954, %v1950
      %v1956 = vrot.slane %v1955, 4
      %v1958 = vshll.u32 %v1735, 16
      %v1960 = vrot.slane %v1958, 5
      %v1961 = vsel %vm1745, %v1956, %v1960
      %v1963 = vshrl.u32 %v1697, 16
      %v1965 = vrot.slane %v1963, 4
      %v1966 = vshll.u32 %v1697, 16
      %v1968 = vrot.slane %v1966, 5
      %v1969 = vor.u32 %v1965, %v1968
      %v1970 = vrot.slane %v1969, 4
      %v1972 = vshll.u32 %v1698, 16
      %v1974 = vrot.slane %v1972, 5
      %v1975 = vsel %vm1745, %v1970, %v1974
      %v1976 = vshrl.u32 %v1698, 16
      %v1978 = vrot.slane %v1976, 4
      %v1979 = vor.u32 %v1978, %v1974
      %v1980 = vrot.slane %v1979, 4
      %v1982 = vshll.u32 %v1736, 16
      %v1984 = vrot.slane %v1982, 5
      %v1985 = vsel %vm1745, %v1980, %v1984
      %v1987 = vshrl.u32 %v1699, 16
      %v1989 = vrot.slane %v1987, 4
      %v1990 = vshll.u32 %v1699, 16
      %v1992 = vrot.slane %v1990, 5
      %v1993 = vor.u32 %v1989, %v1992
      %v1994 = vrot.slane %v1993, 4
      %v1996 = vshll.u32 %v1700, 16
      %v1998 = vrot.slane %v1996, 5
      %v1999 = vsel %vm1745, %v1994, %v1998
      %v2000 = vshrl.u32 %v1700, 16
      %v2002 = vrot.slane %v2000, 4
      %v2003 = vor.u32 %v2002, %v1998
      %v2004 = vrot.slane %v2003, 4
      %v2006 = vshll.u32 %v1737, 16
      %v2008 = vrot.slane %v2006, 5
      %v2009 = vsel %vm1745, %v2004, %v2008
      %v2011 = vshrl.u32 %v1701, 16
      %v2013 = vrot.slane %v2011, 4
      %v2014 = vshll.u32 %v1701, 16
      %v2016 = vrot.slane %v2014, 5
      %v2017 = vor.u32 %v2013, %v2016
      %v2018 = vrot.slane %v2017, 4
      %v2020 = vshll.u32 %v1702, 16
      %v2022 = vrot.slane %v2020, 5
      %v2023 = vsel %vm1745, %v2018, %v2022
      %v2024 = vshrl.u32 %v1702, 16
      %v2026 = vrot.slane %v2024, 4
      %v2027 = vor.u32 %v2026, %v2022
      %v2028 = vrot.slane %v2027, 4
      %v2030 = vshll.u32 %v1738, 16
      %v2032 = vrot.slane %v2030, 5
      %v2033 = vsel %vm1745, %v2028, %v2032
      %v2035 = vshrl.u32 %v1703, 16
      %v2037 = vrot.slane %v2035, 4
      %v2038 = vshll.u32 %v1703, 16
      %v2040 = vrot.slane %v2038, 5
      %v2041 = vor.u32 %v2037, %v2040
      %v2042 = vrot.slane %v2041, 4
      %v2044 = vshll.u32 %v1704, 16
      %v2046 = vrot.slane %v2044, 5
      %v2047 = vsel %vm1745, %v2042, %v2046
      %v2048 = vshrl.u32 %v1704, 16
      %v2050 = vrot.slane %v2048, 4
      %v2051 = vor.u32 %v2050, %v2046
      %v2052 = vrot.slane %v2051, 4
      %v2054 = vshll.u32 %v1739, 16
      %v2056 = vrot.slane %v2054, 5
      %v2057 = vsel %vm1745, %v2052, %v2056
      %v2059 = vshrl.u32 %v1705, 16
      %v2061 = vrot.slane %v2059, 4
      %v2062 = vshll.u32 %v1705, 16
      %v2064 = vrot.slane %v2062, 5
      %v2065 = vor.u32 %v2061, %v2064
      %v2066 = vrot.slane %v2065, 4
      %v2068 = vshll.u32 %v1706, 16
      %v2070 = vrot.slane %v2068, 5
      %v2071 = vsel %vm1745, %v2066, %v2070
      %v2072 = vshrl.u32 %v1706, 16
      %v2074 = vrot.slane %v2072, 4
      %v2075 = vor.u32 %v2074, %v2070
      %v2076 = vrot.slane %v2075, 4
      %v2078 = vshll.u32 %v1740, 16
      %v2080 = vrot.slane %v2078, 5
      %v2081 = vsel %vm1745, %v2076, %v2080
      %v2083 = vshrl.u32 %v1707, 16
      %v2085 = vrot.slane %v2083, 4
      %v2086 = vshll.u32 %v1707, 16
      %v2088 = vrot.slane %v2086, 5
      %v2089 = vor.u32 %v2085, %v2088
      %v2090 = vrot.slane %v2089, 4
      %v2092 = vshll.u32 %v1708, 16
      %v2094 = vrot.slane %v2092, 5
      %v2095 = vsel %vm1745, %v2090, %v2094
      %v2096 = vshrl.u32 %v1708, 16
      %v2098 = vrot.slane %v2096, 4
      %v2099 = vor.u32 %v2098, %v2094
      %v2100 = vrot.slane %v2099, 4
      %v2102 = vshll.u32 %v1741, 16
      %v2104 = vrot.slane %v2102, 5
      %v2105 = vsel %vm1745, %v2100, %v2104
      %v2107 = vshrl.u32 %v1709, 16
      %v2109 = vrot.slane %v2107, 4
      %v2110 = vshll.u32 %v1709, 16
      %v2112 = vrot.slane %v2110, 5
      %v2113 = vor.u32 %v2109, %v2112
      %v2114 = vrot.slane %v2113, 4
      %v2116 = vshll.u32 %v1710, 16
      %v2118 = vrot.slane %v2116, 5
      %v2119 = vsel %vm1745, %v2114, %v2118
      %v2120 = vshrl.u32 %v1710, 16
      %v2122 = vrot.slane %v2120, 4
      %v2123 = vor.u32 %v2122, %v2118
      %v2124 = vrot.slane %v2123, 4
      %v2126 = vshll.u32 %v1742, 16
      %v2128 = vrot.slane %v2126, 5
      %v2129 = vsel %vm1745, %v2124, %v2128
      %s2130 = scalar_lea.vmem %s4, 64
      %v2131 = vld [vmem:[%s2130] sm:$0xf]
      %v2132 = vld [vmem:[%s2130 + $0x4] sm:$0xf]
      %v2133 = vld [vmem:[%s2130 + $0x8] sm:$0xf]
      %v2134 = vld [vmem:[%s2130 + $0xc] sm:$0xf]
      %v2135 = vld [vmem:[%s2130 + $0x10] sm:$0xf]
      %v2136 = vld [vmem:[%s2130 + $0x14] sm:$0xf]
      %v2137 = vld [vmem:[%s2130 + $0x18] sm:$0xf]
      %v2138 = vld [vmem:[%s2130 + $0x1c] sm:$0xf]
      %v2139 = vld [vmem:[%s2130 + $0x20] sm:$0xf]
      %v2140 = vld [vmem:[%s2130 + $0x24] sm:$0xf]
      %v2141 = vld [vmem:[%s2130 + $0x28] sm:$0xf]
      %v2142 = vld [vmem:[%s2130 + $0x2c] sm:$0xf]
      %v2143 = vld [vmem:[%s2130 + $0x30] sm:$0xf]
      %v2144 = vld [vmem:[%s2130 + $0x34] sm:$0xf]
      %v2145 = vld [vmem:[%s2130 + $0x38] sm:$0xf]
      %v2146 = vld [vmem:[%s2130 + $0x3c] sm:$0xf]
      %v2147 = vunpack.c.l.b16 %v1759
      %v2148 = vunpack.c.l.b16 %v1769
      %v2149 = vunpack.c.l.b16 %v1783
      %v2150 = vunpack.c.l.b16 %v1793
      %v2151 = vunpack.c.l.b16 %v1807
      %v2152 = vunpack.c.l.b16 %v1817
      %v2153 = vunpack.c.l.b16 %v1831
      %v2154 = vunpack.c.l.b16 %v1841
      %v2155 = vunpack.c.l.b16 %v1855
      %v2156 = vunpack.c.l.b16 %v1865
      %v2157 = vunpack.c.l.b16 %v1879
      %v2158 = vunpack.c.l.b16 %v1889
      %v2159 = vunpack.c.l.b16 %v1903
      %v2160 = vunpack.c.l.b16 %v1913
      %v2161 = vunpack.c.l.b16 %v1927
      %v2162 = vunpack.c.l.b16 %v1937
      %v2163 = vunpack.c.l.b16 %v1951
      %v2164 = vunpack.c.l.b16 %v1961
      %v2165 = vunpack.c.l.b16 %v1975
      %v2166 = vunpack.c.l.b16 %v1985
      %v2167 = vunpack.c.l.b16 %v1999
      %v2168 = vunpack.c.l.b16 %v2009
      %v2169 = vunpack.c.l.b16 %v2023
      %v2170 = vunpack.c.l.b16 %v2033
      %v2171 = vunpack.c.l.b16 %v2047
      %v2172 = vunpack.c.l.b16 %v2057
      %v2173 = vunpack.c.l.b16 %v2071
      %v2174 = vunpack.c.l.b16 %v2081
      %v2175 = vunpack.c.l.b16 %v2095
      %v2176 = vunpack.c.l.b16 %v2105
      %v2177 = vunpack.c.l.b16 %v2119
      %v2178 = vunpack.c.l.b16 %v2129
      %v2179 = vpack.c.b16 %v2148, %v2147
      %v2180 = vpack.c.b16 %v2150, %v2149
      %v2181 = vpack.c.b16 %v2152, %v2151
      %v2182 = vpack.c.b16 %v2154, %v2153
      %v2183 = vpack.c.b16 %v2156, %v2155
      %v2184 = vpack.c.b16 %v2158, %v2157
      %v2185 = vpack.c.b16 %v2160, %v2159
      %v2186 = vpack.c.b16 %v2162, %v2161
      %v2187 = vpack.c.b16 %v2164, %v2163
      %v2188 = vpack.c.b16 %v2166, %v2165
      %v2189 = vpack.c.b16 %v2168, %v2167
      %v2190 = vpack.c.b16 %v2170, %v2169
      %v2191 = vpack.c.b16 %v2172, %v2171
      %v2192 = vpack.c.b16 %v2174, %v2173
      %v2193 = vpack.c.b16 %v2176, %v2175
      %v2194 = vpack.c.b16 %v2178, %v2177
      %v2227 = vunpack.c.l.b16 %v2131
      %v2228 = vunpack.c.l.b16 %v2132
      %v2229 = vunpack.c.l.b16 %v2133
      %v2230 = vunpack.c.l.b16 %v2134
      %v2231 = vunpack.c.l.b16 %v2135
      %v2232 = vunpack.c.l.b16 %v2136
      %v2233 = vunpack.c.l.b16 %v2137
      %v2234 = vunpack.c.l.b16 %v2138
      %v2235 = vunpack.c.l.b16 %v2139
      %v2236 = vunpack.c.l.b16 %v2140
      %v2237 = vunpack.c.l.b16 %v2141
      %v2238 = vunpack.c.l.b16 %v2142
      %v2239 = vunpack.c.l.b16 %v2143
      %v2240 = vunpack.c.l.b16 %v2144
      %v2241 = vunpack.c.l.b16 %v2145
      %v2242 = vunpack.c.l.b16 %v2146
      %v2243 = vpack.c.b16 %v2228, %v2227
      %v2244 = vpack.c.b16 %v2230, %v2229
      %v2245 = vpack.c.b16 %v2232, %v2231
      %v2246 = vpack.c.b16 %v2234, %v2233
      %v2247 = vpack.c.b16 %v2236, %v2235
      %v2248 = vpack.c.b16 %v2238, %v2237
      %v2249 = vpack.c.b16 %v2240, %v2239
      %v2250 = vpack.c.b16 %v2242, %v2241
      %2259 = vmatprep.subr.bf16.mxu0 0
      %2260 = vmatpush1.bf16.msra.mxu0 %v2250
      %2261 = vmatprep.subr.bf16.mxu0 0
      %2262 = vmatpush1.bf16.msra.mxu0 %v2249
      %2263 = vmatprep.subr.bf16.mxu0 0
      %2264 = vmatpush1.bf16.msra.mxu0 %v2248
      %2265 = vmatprep.subr.bf16.mxu0 0
      %2266 = vmatpush1.bf16.msra.mxu0 %v2247
      %2267 = vmatprep.subr.bf16.mxu0 0
      %2268 = vmatpush1.bf16.msra.mxu0 %v2246
      %2269 = vmatprep.subr.bf16.mxu0 0
      %2270 = vmatpush1.bf16.msra.mxu0 %v2245
      %2271 = vmatprep.subr.bf16.mxu0 0
      %2272 = vmatpush1.bf16.msra.mxu0 %v2244
      %2273 = vmatprep.subr.bf16.mxu0 0
      %2274 = vmatpush1.bf16.msra.mxu0 %v2243
      %2275 = vmatprep.subr.bf16.mxu0 0
      %2276 = vmatpush2.bf16.msra.mxu0 0
      %2277 = vmatprep.subr.bf16.mxu0 0
      %2278 = vmatpush2.bf16.msra.mxu0 0
      %2279 = vmatprep.subr.bf16.mxu0 0
      %2280 = vmatpush2.bf16.msra.mxu0 0
      %2281 = vmatprep.subr.bf16.mxu0 0
      %2282 = vmatpush2.bf16.msra.mxu0 0
      %2283 = vmatprep.subr.bf16.mxu0 0
      %2284 = vmatpush2.bf16.msra.mxu0 0
      %2285 = vmatprep.subr.bf16.mxu0 0
      %2286 = vmatpush2.bf16.msra.mxu0 0
      %2287 = vmatprep.subr.bf16.mxu0 0
      %2288 = vmatpush2.bf16.msra.mxu0 0
      %2289 = vmatprep.subr.bf16.mxu0 0
      %2290 = vmatpush2.bf16.msra.mxu0 0
      %2291 = vmatprep.mubr.bf16.mxu0 0
      %2292 = vmatmul.mubr.bf16.gmra.mxu0 %v2179
      %v2293 = vpop.f32.mrf.mxu0
      %v2294 = vadd.f32 0.0, %v2293
      %v2295 = vpop.f32.mrf.mxu0
      %v2296 = vpop.f32.mrf.mxu0
      %v2297 = vadd.f32 0.0, %v2296
      %v2298 = vpop.f32.mrf.mxu0
      %2299 = vmatprep.mubr.bf16.mxu0 0
      %2300 = vmatmul.mubr.bf16.gmra.mxu0 %v2180
      %v2301 = vpop.f32.mrf.mxu0
      %v2302 = vadd.f32 0.0, %v2301
      %v2303 = vpop.f32.mrf.mxu0
      %v2304 = vpop.f32.mrf.mxu0
      %v2305 = vadd.f32 0.0, %v2304
      %v2306 = vpop.f32.mrf.mxu0
      %2307 = vmatprep.mubr.bf16.mxu0 0
      %2308 = vmatmul.mubr.bf16.gmra.mxu0 %v2181
      %v2309 = vpop.f32.mrf.mxu0
      %v2310 = vadd.f32 0.0, %v2309
      %v2311 = vpop.f32.mrf.mxu0
      %v2312 = vpop.f32.mrf.mxu0
      %v2313 = vadd.f32 0.0, %v2312
      %v2314 = vpop.f32.mrf.mxu0
      %2315 = vmatprep.mubr.bf16.mxu0 0
      %2316 = vmatmul.mubr.bf16.gmra.mxu0 %v2182
      %v2317 = vpop.f32.mrf.mxu0
      %v2318 = vadd.f32 0.0, %v2317
      %v2319 = vpop.f32.mrf.mxu0
      %v2320 = vpop.f32.mrf.mxu0
      %v2321 = vadd.f32 0.0, %v2320
      %v2322 = vpop.f32.mrf.mxu0
      %2323 = vmatprep.mubr.bf16.mxu0 0
      %2324 = vmatmul.mubr.bf16.gmra.mxu0 %v2183
      %v2325 = vpop.f32.mrf.mxu0
      %v2326 = vadd.f32 0.0, %v2325
      %v2327 = vpop.f32.mrf.mxu0
      %v2328 = vpop.f32.mrf.mxu0
      %v2329 = vadd.f32 0.0, %v2328
      %v2330 = vpop.f32.mrf.mxu0
      %2331 = vmatprep.mubr.bf16.mxu0 0
      %2332 = vmatmul.mubr.bf16.gmra.mxu0 %v2184
      %v2333 = vpop.f32.mrf.mxu0
      %v2334 = vadd.f32 0.0, %v2333
      %v2335 = vpop.f32.mrf.mxu0
      %v2336 = vpop.f32.mrf.mxu0
      %v2337 = vadd.f32 0.0, %v2336
      %v2338 = vpop.f32.mrf.mxu0
      %2339 = vmatprep.mubr.bf16.mxu0 0
      %2340 = vmatmul.mubr.bf16.gmra.mxu0 %v2185
      %v2341 = vpop.f32.mrf.mxu0
      %v2342 = vadd.f32 0.0, %v2341
      %v2343 = vpop.f32.mrf.mxu0
      %v2344 = vpop.f32.mrf.mxu0
      %v2345 = vadd.f32 0.0, %v2344
      %v2346 = vpop.f32.mrf.mxu0
      %2347 = vmatprep.mubr.bf16.mxu0 0
      %2348 = vmatmul.mubr.bf16.gmra.mxu0 %v2186
      %v2349 = vpop.f32.mrf.mxu0
      %v2350 = vadd.f32 0.0, %v2349
      %v2351 = vpop.f32.mrf.mxu0
      %v2352 = vpop.f32.mrf.mxu0
      %v2353 = vadd.f32 0.0, %v2352
      %v2354 = vpop.f32.mrf.mxu0
      %2355 = vmatprep.mubr.bf16.mxu0 0
      %2356 = vmatmul.mubr.bf16.gmra.mxu0 %v2187
      %v2357 = vpop.f32.mrf.mxu0
      %v2358 = vadd.f32 0.0, %v2357
      %v2359 = vpop.f32.mrf.mxu0
      %v2360 = vpop.f32.mrf.mxu0
      %v2361 = vadd.f32 0.0, %v2360
      %v2362 = vpop.f32.mrf.mxu0
      %2363 = vmatprep.mubr.bf16.mxu0 0
      %2364 = vmatmul.mubr.bf16.gmra.mxu0 %v2188
      %v2365 = vpop.f32.mrf.mxu0
      %v2366 = vadd.f32 0.0, %v2365
      %v2367 = vpop.f32.mrf.mxu0
      %v2368 = vpop.f32.mrf.mxu0
      %v2369 = vadd.f32 0.0, %v2368
      %v2370 = vpop.f32.mrf.mxu0
      %2371 = vmatprep.mubr.bf16.mxu0 0
      %2372 = vmatmul.mubr.bf16.gmra.mxu0 %v2189
      %v2373 = vpop.f32.mrf.mxu0
      %v2374 = vadd.f32 0.0, %v2373
      %v2375 = vpop.f32.mrf.mxu0
      %v2376 = vpop.f32.mrf.mxu0
      %v2377 = vadd.f32 0.0, %v2376
      %v2378 = vpop.f32.mrf.mxu0
      %2379 = vmatprep.mubr.bf16.mxu0 0
      %2380 = vmatmul.mubr.bf16.gmra.mxu0 %v2190
      %v2381 = vpop.f32.mrf.mxu0
      %v2382 = vadd.f32 0.0, %v2381
      %v2383 = vpop.f32.mrf.mxu0
      %v2384 = vpop.f32.mrf.mxu0
      %v2385 = vadd.f32 0.0, %v2384
      %v2386 = vpop.f32.mrf.mxu0
      %2387 = vmatprep.mubr.bf16.mxu0 0
      %2388 = vmatmul.mubr.bf16.gmra.mxu0 %v2191
      %v2389 = vpop.f32.mrf.mxu0
      %v2390 = vadd.f32 0.0, %v2389
      %v2391 = vpop.f32.mrf.mxu0
      %v2392 = vpop.f32.mrf.mxu0
      %v2393 = vadd.f32 0.0, %v2392
      %v2394 = vpop.f32.mrf.mxu0
      %2395 = vmatprep.mubr.bf16.mxu0 0
      %2396 = vmatmul.mubr.bf16.gmra.mxu0 %v2192
      %v2397 = vpop.f32.mrf.mxu0
      %v2398 = vadd.f32 0.0, %v2397
      %v2399 = vpop.f32.mrf.mxu0
      %v2400 = vpop.f32.mrf.mxu0
      %v2401 = vadd.f32 0.0, %v2400
      %v2402 = vpop.f32.mrf.mxu0
      %2403 = vmatprep.mubr.bf16.mxu0 0
      %2404 = vmatmul.mubr.bf16.gmra.mxu0 %v2193
      %v2405 = vpop.f32.mrf.mxu0
      %v2406 = vadd.f32 0.0, %v2405
      %v2407 = vpop.f32.mrf.mxu0
      %v2408 = vpop.f32.mrf.mxu0
      %v2409 = vadd.f32 0.0, %v2408
      %v2410 = vpop.f32.mrf.mxu0
      %2411 = vmatprep.mubr.bf16.mxu0 0
      %2412 = vmatmul.mubr.bf16.gmra.mxu0 %v2194
      %v2413 = vpop.f32.mrf.mxu0
      %v2414 = vadd.f32 0.0, %v2413
      %v2415 = vpop.f32.mrf.mxu0
      %v2416 = vpop.f32.mrf.mxu0
      %v2417 = vadd.f32 0.0, %v2416
      %v2418 = vpop.f32.mrf.mxu0
      %2419 = vdwg.mxu0
      %v2452 = vunpack.c.l.b16 %v1679
      %v2453 = vunpack.c.l.b16 %v1680
      %v2454 = vunpack.c.l.b16 %v1681
      %v2455 = vunpack.c.l.b16 %v1682
      %v2456 = vunpack.c.l.b16 %v1683
      %v2457 = vunpack.c.l.b16 %v1684
      %v2458 = vunpack.c.l.b16 %v1685
      %v2459 = vunpack.c.l.b16 %v1686
      %v2460 = vunpack.c.l.b16 %v1687
      %v2461 = vunpack.c.l.b16 %v1688
      %v2462 = vunpack.c.l.b16 %v1689
      %v2463 = vunpack.c.l.b16 %v1690
      %v2464 = vunpack.c.l.b16 %v1691
      %v2465 = vunpack.c.l.b16 %v1692
      %v2466 = vunpack.c.l.b16 %v1693
      %v2467 = vunpack.c.l.b16 %v1694
      %v2468 = vunpack.c.l.b16 %v1695
      %v2469 = vunpack.c.l.b16 %v1696
      %v2470 = vunpack.c.l.b16 %v1697
      %v2471 = vunpack.c.l.b16 %v1698
      %v2472 = vunpack.c.l.b16 %v1699
      %v2473 = vunpack.c.l.b16 %v1700
      %v2474 = vunpack.c.l.b16 %v1701
      %v2475 = vunpack.c.l.b16 %v1702
      %v2476 = vunpack.c.l.b16 %v1703
      %v2477 = vunpack.c.l.b16 %v1704
      %v2478 = vunpack.c.l.b16 %v1705
      %v2479 = vunpack.c.l.b16 %v1706
      %v2480 = vunpack.c.l.b16 %v1707
      %v2481 = vunpack.c.l.b16 %v1708
      %v2482 = vunpack.c.l.b16 %v1709
      %v2483 = vunpack.c.l.b16 %v1710
      %v2484 = vpack.c.b16 %v2453, %v2452
      %v2485 = vpack.c.b16 %v2455, %v2454
      %v2486 = vpack.c.b16 %v2457, %v2456
      %v2487 = vpack.c.b16 %v2459, %v2458
      %v2488 = vpack.c.b16 %v2461, %v2460
      %v2489 = vpack.c.b16 %v2463, %v2462
      %v2490 = vpack.c.b16 %v2465, %v2464
      %v2491 = vpack.c.b16 %v2467, %v2466
      %v2492 = vpack.c.b16 %v2469, %v2468
      %v2493 = vpack.c.b16 %v2471, %v2470
      %v2494 = vpack.c.b16 %v2473, %v2472
      %v2495 = vpack.c.b16 %v2475, %v2474
      %v2496 = vpack.c.b16 %v2477, %v2476
      %v2497 = vpack.c.b16 %v2479, %v2478
      %v2498 = vpack.c.b16 %v2481, %v2480
      %v2499 = vpack.c.b16 %v2483, %v2482
      %v2532 = vunpack.c.l.b16 %v1711
      %v2533 = vunpack.c.l.b16 %v1712
      %v2534 = vunpack.c.l.b16 %v1713
      %v2535 = vunpack.c.l.b16 %v1714
      %v2536 = vunpack.c.l.b16 %v1715
      %v2537 = vunpack.c.l.b16 %v1716
      %v2538 = vunpack.c.l.b16 %v1717
      %v2539 = vunpack.c.l.b16 %v1718
      %v2540 = vunpack.c.l.b16 %v1719
      %v2541 = vunpack.c.l.b16 %v1720
      %v2542 = vunpack.c.l.b16 %v1721
      %v2543 = vunpack.c.l.b16 %v1722
      %v2544 = vunpack.c.l.b16 %v1723
      %v2545 = vunpack.c.l.b16 %v1724
      %v2546 = vunpack.c.l.b16 %v1725
      %v2547 = vunpack.c.l.b16 %v1726
      %v2548 = vpack.c.b16 %v2533, %v2532
      %v2549 = vpack.c.b16 %v2535, %v2534
      %v2550 = vpack.c.b16 %v2537, %v2536
      %v2551 = vpack.c.b16 %v2539, %v2538
      %v2552 = vpack.c.b16 %v2541, %v2540
      %v2553 = vpack.c.b16 %v2543, %v2542
      %v2554 = vpack.c.b16 %v2545, %v2544
      %v2555 = vpack.c.b16 %v2547, %v2546
      %2564 = vmatprep.subr.bf16.mxu0 0
      %2565 = vmatpush1.bf16.msra.mxu0 %v2555
      %2566 = vmatprep.subr.bf16.mxu0 0
      %2567 = vmatpush1.bf16.msra.mxu0 %v2554
      %2568 = vmatprep.subr.bf16.mxu0 0
      %2569 = vmatpush1.bf16.msra.mxu0 %v2553
      %2570 = vmatprep.subr.bf16.mxu0 0
      %2571 = vmatpush1.bf16.msra.mxu0 %v2552
      %2572 = vmatprep.subr.bf16.mxu0 0
      %2573 = vmatpush1.bf16.msra.mxu0 %v2551
      %2574 = vmatprep.subr.bf16.mxu0 0
      %2575 = vmatpush1.bf16.msra.mxu0 %v2550
      %2576 = vmatprep.subr.bf16.mxu0 0
      %2577 = vmatpush1.bf16.msra.mxu0 %v2549
      %2578 = vmatprep.subr.bf16.mxu0 0
      %2579 = vmatpush1.bf16.msra.mxu0 %v2548
      %2580 = vmatprep.subr.bf16.mxu0 0
      %2581 = vmatpush2.bf16.msra.mxu0 0
      %2582 = vmatprep.subr.bf16.mxu0 0
      %2583 = vmatpush2.bf16.msra.mxu0 0
      %2584 = vmatprep.subr.bf16.mxu0 0
      %2585 = vmatpush2.bf16.msra.mxu0 0
      %2586 = vmatprep.subr.bf16.mxu0 0
      %2587 = vmatpush2.bf16.msra.mxu0 0
      %2588 = vmatprep.subr.bf16.mxu0 0
      %2589 = vmatpush2.bf16.msra.mxu0 0
      %2590 = vmatprep.subr.bf16.mxu0 0
      %2591 = vmatpush2.bf16.msra.mxu0 0
      %2592 = vmatprep.subr.bf16.mxu0 0
      %2593 = vmatpush2.bf16.msra.mxu0 0
      %2594 = vmatprep.subr.bf16.mxu0 0
      %2595 = vmatpush2.bf16.msra.mxu0 0
      %2596 = vmatprep.mubr.bf16.mxu0 0
      %2597 = vmatmul.mubr.bf16.gmra.mxu0 %v2484
      %v2598 = vpop.f32.mrf.mxu0
      %v2599 = vadd.f32 %v2294, %v2598
      %v2600 = vpop.f32.mrf.mxu0
      %v2601 = vpop.f32.mrf.mxu0
      %v2602 = vadd.f32 %v2297, %v2601
      %v2603 = vpop.f32.mrf.mxu0
      %2604 = vmatprep.mubr.bf16.mxu0 0
      %2605 = vmatmul.mubr.bf16.gmra.mxu0 %v2485
      %v2606 = vpop.f32.mrf.mxu0
      %v2607 = vadd.f32 %v2302, %v2606
      %v2608 = vpop.f32.mrf.mxu0
      %v2609 = vpop.f32.mrf.mxu0
      %v2610 = vadd.f32 %v2305, %v2609
      %v2611 = vpop.f32.mrf.mxu0
      %2612 = vmatprep.mubr.bf16.mxu0 0
      %2613 = vmatmul.mubr.bf16.gmra.mxu0 %v2486
      %v2614 = vpop.f32.mrf.mxu0
      %v2615 = vadd.f32 %v2310, %v2614
      %v2616 = vpop.f32.mrf.mxu0
      %v2617 = vpop.f32.mrf.mxu0
      %v2618 = vadd.f32 %v2313, %v2617
      %v2619 = vpop.f32.mrf.mxu0
      %2620 = vmatprep.mubr.bf16.mxu0 0
      %2621 = vmatmul.mubr.bf16.gmra.mxu0 %v2487
      %v2622 = vpop.f32.mrf.mxu0
      %v2623 = vadd.f32 %v2318, %v2622
      %v2624 = vpop.f32.mrf.mxu0
      %v2625 = vpop.f32.mrf.mxu0
      %v2626 = vadd.f32 %v2321, %v2625
      %v2627 = vpop.f32.mrf.mxu0
      %2628 = vmatprep.mubr.bf16.mxu0 0
      %2629 = vmatmul.mubr.bf16.gmra.mxu0 %v2488
      %v2630 = vpop.f32.mrf.mxu0
      %v2631 = vadd.f32 %v2326, %v2630
      %v2632 = vpop.f32.mrf.mxu0
      %v2633 = vpop.f32.mrf.mxu0
      %v2634 = vadd.f32 %v2329, %v2633
      %v2635 = vpop.f32.mrf.mxu0
      %2636 = vmatprep.mubr.bf16.mxu0 0
      %2637 = vmatmul.mubr.bf16.gmra.mxu0 %v2489
      %v2638 = vpop.f32.mrf.mxu0
      %v2639 = vadd.f32 %v2334, %v2638
      %v2640 = vpop.f32.mrf.mxu0
      %v2641 = vpop.f32.mrf.mxu0
      %v2642 = vadd.f32 %v2337, %v2641
      %v2643 = vpop.f32.mrf.mxu0
      %2644 = vmatprep.mubr.bf16.mxu0 0
      %2645 = vmatmul.mubr.bf16.gmra.mxu0 %v2490
      %v2646 = vpop.f32.mrf.mxu0
      %v2647 = vadd.f32 %v2342, %v2646
      %v2648 = vpop.f32.mrf.mxu0
      %v2649 = vpop.f32.mrf.mxu0
      %v2650 = vadd.f32 %v2345, %v2649
      %v2651 = vpop.f32.mrf.mxu0
      %2652 = vmatprep.mubr.bf16.mxu0 0
      %2653 = vmatmul.mubr.bf16.gmra.mxu0 %v2491
      %v2654 = vpop.f32.mrf.mxu0
      %v2655 = vadd.f32 %v2350, %v2654
      %v2656 = vpop.f32.mrf.mxu0
      %v2657 = vpop.f32.mrf.mxu0
      %v2658 = vadd.f32 %v2353, %v2657
      %v2659 = vpop.f32.mrf.mxu0
      %2660 = vmatprep.mubr.bf16.mxu0 0
      %2661 = vmatmul.mubr.bf16.gmra.mxu0 %v2492
      %v2662 = vpop.f32.mrf.mxu0
      %v2663 = vadd.f32 %v2358, %v2662
      %v2664 = vpop.f32.mrf.mxu0
      %v2665 = vpop.f32.mrf.mxu0
      %v2666 = vadd.f32 %v2361, %v2665
      %v2667 = vpop.f32.mrf.mxu0
      %2668 = vmatprep.mubr.bf16.mxu0 0
      %2669 = vmatmul.mubr.bf16.gmra.mxu0 %v2493
      %v2670 = vpop.f32.mrf.mxu0
      %v2671 = vadd.f32 %v2366, %v2670
      %v2672 = vpop.f32.mrf.mxu0
      %v2673 = vpop.f32.mrf.mxu0
      %v2674 = vadd.f32 %v2369, %v2673
      %v2675 = vpop.f32.mrf.mxu0
      %2676 = vmatprep.mubr.bf16.mxu0 0
      %2677 = vmatmul.mubr.bf16.gmra.mxu0 %v2494
      %v2678 = vpop.f32.mrf.mxu0
      %v2679 = vadd.f32 %v2374, %v2678
      %v2680 = vpop.f32.mrf.mxu0
      %v2681 = vpop.f32.mrf.mxu0
      %v2682 = vadd.f32 %v2377, %v2681
      %v2683 = vpop.f32.mrf.mxu0
      %2684 = vmatprep.mubr.bf16.mxu0 0
      %2685 = vmatmul.mubr.bf16.gmra.mxu0 %v2495
      %v2686 = vpop.f32.mrf.mxu0
      %v2687 = vadd.f32 %v2382, %v2686
      %v2688 = vpop.f32.mrf.mxu0
      %v2689 = vpop.f32.mrf.mxu0
      %v2690 = vadd.f32 %v2385, %v2689
      %v2691 = vpop.f32.mrf.mxu0
      %2692 = vmatprep.mubr.bf16.mxu0 0
      %2693 = vmatmul.mubr.bf16.gmra.mxu0 %v2496
      %v2694 = vpop.f32.mrf.mxu0
      %v2695 = vadd.f32 %v2390, %v2694
      %v2696 = vpop.f32.mrf.mxu0
      %v2697 = vpop.f32.mrf.mxu0
      %v2698 = vadd.f32 %v2393, %v2697
      %v2699 = vpop.f32.mrf.mxu0
      %2700 = vmatprep.mubr.bf16.mxu0 0
      %2701 = vmatmul.mubr.bf16.gmra.mxu0 %v2497
      %v2702 = vpop.f32.mrf.mxu0
      %v2703 = vadd.f32 %v2398, %v2702
      %v2704 = vpop.f32.mrf.mxu0
      %v2705 = vpop.f32.mrf.mxu0
      %v2706 = vadd.f32 %v2401, %v2705
      %v2707 = vpop.f32.mrf.mxu0
      %2708 = vmatprep.mubr.bf16.mxu0 0
      %2709 = vmatmul.mubr.bf16.gmra.mxu0 %v2498
      %v2710 = vpop.f32.mrf.mxu0
      %v2711 = vadd.f32 %v2406, %v2710
      %v2712 = vpop.f32.mrf.mxu0
      %v2713 = vpop.f32.mrf.mxu0
      %v2714 = vadd.f32 %v2409, %v2713
      %v2715 = vpop.f32.mrf.mxu0
      %2716 = vmatprep.mubr.bf16.mxu0 0
      %2717 = vmatmul.mubr.bf16.gmra.mxu0 %v2499
      %v2718 = vpop.f32.mrf.mxu0
      %v2719 = vadd.f32 %v2414, %v2718
      %v2720 = vpop.f32.mrf.mxu0
      %v2721 = vpop.f32.mrf.mxu0
      %v2722 = vadd.f32 %v2417, %v2721
      %v2723 = vpop.f32.mrf.mxu0
      %2724 = vdwg.mxu0
      %v2725 = vld [vmem:[#allocation2] sm:$0xe]
      %v2726 = vld [vmem:[#allocation2 + $0xc] sm:$0xe]
      %v2727 = vld [vmem:[#allocation2 + $0x18] sm:$0xe]
      %v2728 = vld [vmem:[#allocation2 + $0x24] sm:$0xe]
      %v2729 = vld [vmem:[#allocation2 + $0x30] sm:$0xe]
      %v2730 = vld [vmem:[#allocation2 + $0x3c] sm:$0xe]
      %v2731 = vld [vmem:[#allocation2 + $0x48] sm:$0xe]
      %v2732 = vld [vmem:[#allocation2 + $0x54] sm:$0xe]
      %v2733 = vld [vmem:[#allocation2 + $0x60] sm:$0xe]
      %v2734 = vld [vmem:[#allocation2 + $0x6c] sm:$0xe]
      %v2735 = vld [vmem:[#allocation2 + $0x78] sm:$0xe]
      %v2736 = vld [vmem:[#allocation2 + $0x84] sm:$0xe]
      %v2737 = vld [vmem:[#allocation2 + $0x90] sm:$0xe]
      %v2738 = vld [vmem:[#allocation2 + $0x9c] sm:$0xe]
      %v2739 = vld [vmem:[#allocation2 + $0xa8] sm:$0xe]
      %v2740 = vld [vmem:[#allocation2 + $0xb4] sm:$0xe]
      %vm2773 = vcmask 1042432
      %vm2774 = vcmask 1046532
      %vm2775 = vmor %vm2773, %vm2774
      %v2776 = vrot.slane %v2725, 5
      %v2777 = vrot.slane %v2776, 4
      %v2778 = vrot.slane %v1680, 5
      %v2779 = vsel %vm2775, %v2777, %v2778
      %v2780 = vrot.slane %v2778, 4
      %v2781 = vrot.slane %v1727, 5
      %v2782 = vsel %vm2775, %v2780, %v2781
      %v2783 = vrot.slane %v2726, 5
      %v2784 = vrot.slane %v2783, 4
      %v2785 = vrot.slane %v1682, 5
      %v2786 = vsel %vm2775, %v2784, %v2785
      %v2787 = vrot.slane %v2785, 4
      %v2788 = vrot.slane %v1728, 5
      %v2789 = vsel %vm2775, %v2787, %v2788
      %v2790 = vrot.slane %v2727, 5
      %v2791 = vrot.slane %v2790, 4
      %v2792 = vrot.slane %v1684, 5
      %v2793 = vsel %vm2775, %v2791, %v2792
      %v2794 = vrot.slane %v2792, 4
      %v2795 = vrot.slane %v1729, 5
      %v2796 = vsel %vm2775, %v2794, %v2795
      %v2797 = vrot.slane %v2728, 5
      %v2798 = vrot.slane %v2797, 4
      %v2799 = vrot.slane %v1686, 5
      %v2800 = vsel %vm2775, %v2798, %v2799
      %v2801 = vrot.slane %v2799, 4
      %v2802 = vrot.slane %v1730, 5
      %v2803 = vsel %vm2775, %v2801, %v2802
      %v2804 = vrot.slane %v2729, 5
      %v2805 = vrot.slane %v2804, 4
      %v2806 = vrot.slane %v1688, 5
      %v2807 = vsel %vm2775, %v2805, %v2806
      %v2808 = vrot.slane %v2806, 4
      %v2809 = vrot.slane %v1731, 5
      %v2810 = vsel %vm2775, %v2808, %v2809
      %v2811 = vrot.slane %v2730, 5
      %v2812 = vrot.slane %v2811, 4
      %v2813 = vrot.slane %v1690, 5
      %v2814 = vsel %vm2775, %v2812, %v2813
      %v2815 = vrot.slane %v2813, 4
      %v2816 = vrot.slane %v1732, 5
      %v2817 = vsel %vm2775, %v2815, %v2816
      %v2818 = vrot.slane %v2731, 5
      %v2819 = vrot.slane %v2818, 4
      %v2820 = vrot.slane %v1692, 5
      %v2821 = vsel %vm2775, %v2819, %v2820
      %v2822 = vrot.slane %v2820, 4
      %v2823 = vrot.slane %v1733, 5
      %v2824 = vsel %vm2775, %v2822, %v2823
      %v2825 = vrot.slane %v2732, 5
      %v2826 = vrot.slane %v2825, 4
      %v2827 = vrot.slane %v1694, 5
      %v2828 = vsel %vm2775, %v2826, %v2827
      %v2829 = vrot.slane %v2827, 4
      %v2830 = vrot.slane %v1734, 5
      %v2831 = vsel %vm2775, %v2829, %v2830
      %v2832 = vrot.slane %v2733, 5
      %v2833 = vrot.slane %v2832, 4
      %v2834 = vrot.slane %v1696, 5
      %v2835 = vsel %vm2775, %v2833, %v2834
      %v2836 = vrot.slane %v2834, 4
      %v2837 = vrot.slane %v1735, 5
      %v2838 = vsel %vm2775, %v2836, %v2837
      %v2839 = vrot.slane %v2734, 5
      %v2840 = vrot.slane %v2839, 4
      %v2841 = vrot.slane %v1698, 5
      %v2842 = vsel %vm2775, %v2840, %v2841
      %v2843 = vrot.slane %v2841, 4
      %v2844 = vrot.slane %v1736, 5
      %v2845 = vsel %vm2775, %v2843, %v2844
      %v2846 = vrot.slane %v2735, 5
      %v2847 = vrot.slane %v2846, 4
      %v2848 = vrot.slane %v1700, 5
      %v2849 = vsel %vm2775, %v2847, %v2848
      %v2850 = vrot.slane %v2848, 4
      %v2851 = vrot.slane %v1737, 5
      %v2852 = vsel %vm2775, %v2850, %v2851
      %v2853 = vrot.slane %v2736, 5
      %v2854 = vrot.slane %v2853, 4
      %v2855 = vrot.slane %v1702, 5
      %v2856 = vsel %vm2775, %v2854, %v2855
      %v2857 = vrot.slane %v2855, 4
      %v2858 = vrot.slane %v1738, 5
      %v2859 = vsel %vm2775, %v2857, %v2858
      %v2860 = vrot.slane %v2737, 5
      %v2861 = vrot.slane %v2860, 4
      %v2862 = vrot.slane %v1704, 5
      %v2863 = vsel %vm2775, %v2861, %v2862
      %v2864 = vrot.slane %v2862, 4
      %v2865 = vrot.slane %v1739, 5
      %v2866 = vsel %vm2775, %v2864, %v2865
      %v2867 = vrot.slane %v2738, 5
      %v2868 = vrot.slane %v2867, 4
      %v2869 = vrot.slane %v1706, 5
      %v2870 = vsel %vm2775, %v2868, %v2869
      %v2871 = vrot.slane %v2869, 4
      %v2872 = vrot.slane %v1740, 5
      %v2873 = vsel %vm2775, %v2871, %v2872
      %v2874 = vrot.slane %v2739, 5
      %v2875 = vrot.slane %v2874, 4
      %v2876 = vrot.slane %v1708, 5
      %v2877 = vsel %vm2775, %v2875, %v2876
      %v2878 = vrot.slane %v2876, 4
      %v2879 = vrot.slane %v1741, 5
      %v2880 = vsel %vm2775, %v2878, %v2879
      %v2881 = vrot.slane %v2740, 5
      %v2882 = vrot.slane %v2881, 4
      %v2883 = vrot.slane %v1710, 5
      %v2884 = vsel %vm2775, %v2882, %v2883
      %v2885 = vrot.slane %v2883, 4
      %v2886 = vrot.slane %v1742, 5
      %v2887 = vsel %vm2775, %v2885, %v2886
      %s2888 = scalar_lea.vmem %s4, 128
      %v2889 = vld [vmem:[%s2888] sm:$0xf]
      %v2890 = vld [vmem:[%s2888 + $0x4] sm:$0xf]
      %v2891 = vld [vmem:[%s2888 + $0x8] sm:$0xf]
      %v2892 = vld [vmem:[%s2888 + $0xc] sm:$0xf]
      %v2893 = vld [vmem:[%s2888 + $0x10] sm:$0xf]
      %v2894 = vld [vmem:[%s2888 + $0x14] sm:$0xf]
      %v2895 = vld [vmem:[%s2888 + $0x18] sm:$0xf]
      %v2896 = vld [vmem:[%s2888 + $0x1c] sm:$0xf]
      %v2897 = vld [vmem:[%s2888 + $0x20] sm:$0xf]
      %v2898 = vld [vmem:[%s2888 + $0x24] sm:$0xf]
      %v2899 = vld [vmem:[%s2888 + $0x28] sm:$0xf]
      %v2900 = vld [vmem:[%s2888 + $0x2c] sm:$0xf]
      %v2901 = vld [vmem:[%s2888 + $0x30] sm:$0xf]
      %v2902 = vld [vmem:[%s2888 + $0x34] sm:$0xf]
      %v2903 = vld [vmem:[%s2888 + $0x38] sm:$0xf]
      %v2904 = vld [vmem:[%s2888 + $0x3c] sm:$0xf]
      %v2905 = vunpack.c.l.b16 %v2779
      %v2906 = vunpack.c.l.b16 %v2782
      %v2907 = vunpack.c.l.b16 %v2786
      %v2908 = vunpack.c.l.b16 %v2789
      %v2909 = vunpack.c.l.b16 %v2793
      %v2910 = vunpack.c.l.b16 %v2796
      %v2911 = vunpack.c.l.b16 %v2800
      %v2912 = vunpack.c.l.b16 %v2803
      %v2913 = vunpack.c.l.b16 %v2807
      %v2914 = vunpack.c.l.b16 %v2810
      %v2915 = vunpack.c.l.b16 %v2814
      %v2916 = vunpack.c.l.b16 %v2817
      %v2917 = vunpack.c.l.b16 %v2821
      %v2918 = vunpack.c.l.b16 %v2824
      %v2919 = vunpack.c.l.b16 %v2828
      %v2920 = vunpack.c.l.b16 %v2831
      %v2921 = vunpack.c.l.b16 %v2835
      %v2922 = vunpack.c.l.b16 %v2838
      %v2923 = vunpack.c.l.b16 %v2842
      %v2924 = vunpack.c.l.b16 %v2845
      %v2925 = vunpack.c.l.b16 %v2849
      %v2926 = vunpack.c.l.b16 %v2852
      %v2927 = vunpack.c.l.b16 %v2856
      %v2928 = vunpack.c.l.b16 %v2859
      %v2929 = vunpack.c.l.b16 %v2863
      %v2930 = vunpack.c.l.b16 %v2866
      %v2931 = vunpack.c.l.b16 %v2870
      %v2932 = vunpack.c.l.b16 %v2873
      %v2933 = vunpack.c.l.b16 %v2877
      %v2934 = vunpack.c.l.b16 %v2880
      %v2935 = vunpack.c.l.b16 %v2884
      %v2936 = vunpack.c.l.b16 %v2887
      %v2937 = vpack.c.b16 %v2906, %v2905
      %v2938 = vpack.c.b16 %v2908, %v2907
      %v2939 = vpack.c.b16 %v2910, %v2909
      %v2940 = vpack.c.b16 %v2912, %v2911
      %v2941 = vpack.c.b16 %v2914, %v2913
      %v2942 = vpack.c.b16 %v2916, %v2915
      %v2943 = vpack.c.b16 %v2918, %v2917
      %v2944 = vpack.c.b16 %v2920, %v2919
      %v2945 = vpack.c.b16 %v2922, %v2921
      %v2946 = vpack.c.b16 %v2924, %v2923
      %v2947 = vpack.c.b16 %v2926, %v2925
      %v2948 = vpack.c.b16 %v2928, %v2927
      %v2949 = vpack.c.b16 %v2930, %v2929
      %v2950 = vpack.c.b16 %v2932, %v2931
      %v2951 = vpack.c.b16 %v2934, %v2933
      %v2952 = vpack.c.b16 %v2936, %v2935
      %v2985 = vunpack.c.l.b16 %v2889
      %v2986 = vunpack.c.l.b16 %v2890
      %v2987 = vunpack.c.l.b16 %v2891
      %v2988 = vunpack.c.l.b16 %v2892
      %v2989 = vunpack.c.l.b16 %v2893
      %v2990 = vunpack.c.l.b16 %v2894
      %v2991 = vunpack.c.l.b16 %v2895
      %v2992 = vunpack.c.l.b16 %v2896
      %v2993 = vunpack.c.l.b16 %v2897
      %v2994 = vunpack.c.l.b16 %v2898
      %v2995 = vunpack.c.l.b16 %v2899
      %v2996 = vunpack.c.l.b16 %v2900
      %v2997 = vunpack.c.l.b16 %v2901
      %v2998 = vunpack.c.l.b16 %v2902
      %v2999 = vunpack.c.l.b16 %v2903
      %v3000 = vunpack.c.l.b16 %v2904
      %v3001 = vpack.c.b16 %v2986, %v2985
      %v3002 = vpack.c.b16 %v2988, %v2987
      %v3003 = vpack.c.b16 %v2990, %v2989
      %v3004 = vpack.c.b16 %v2992, %v2991
      %v3005 = vpack.c.b16 %v2994, %v2993
      %v3006 = vpack.c.b16 %v2996, %v2995
      %v3007 = vpack.c.b16 %v2998, %v2997
      %v3008 = vpack.c.b16 %v3000, %v2999
      %3017 = vmatprep.subr.bf16.mxu0 0
      %3018 = vmatpush1.bf16.msra.mxu0 %v3008
      %3019 = vmatprep.subr.bf16.mxu0 0
      %3020 = vmatpush1.bf16.msra.mxu0 %v3007
      %3021 = vmatprep.subr.bf16.mxu0 0
      %3022 = vmatpush1.bf16.msra.mxu0 %v3006
      %3023 = vmatprep.subr.bf16.mxu0 0
      %3024 = vmatpush1.bf16.msra.mxu0 %v3005
      %3025 = vmatprep.subr.bf16.mxu0 0
      %3026 = vmatpush1.bf16.msra.mxu0 %v3004
      %3027 = vmatprep.subr.bf16.mxu0 0
      %3028 = vmatpush1.bf16.msra.mxu0 %v3003
      %3029 = vmatprep.subr.bf16.mxu0 0
      %3030 = vmatpush1.bf16.msra.mxu0 %v3002
      %3031 = vmatprep.subr.bf16.mxu0 0
      %3032 = vmatpush1.bf16.msra.mxu0 %v3001
      %3033 = vmatprep.subr.bf16.mxu0 0
      %3034 = vmatpush2.bf16.msra.mxu0 0
      %3035 = vmatprep.subr.bf16.mxu0 0
      %3036 = vmatpush2.bf16.msra.mxu0 0
      %3037 = vmatprep.subr.bf16.mxu0 0
      %3038 = vmatpush2.bf16.msra.mxu0 0
      %3039 = vmatprep.subr.bf16.mxu0 0
      %3040 = vmatpush2.bf16.msra.mxu0 0
      %3041 = vmatprep.subr.bf16.mxu0 0
      %3042 = vmatpush2.bf16.msra.mxu0 0
      %3043 = vmatprep.subr.bf16.mxu0 0
      %3044 = vmatpush2.bf16.msra.mxu0 0
      %3045 = vmatprep.subr.bf16.mxu0 0
      %3046 = vmatpush2.bf16.msra.mxu0 0
      %3047 = vmatprep.subr.bf16.mxu0 0
      %3048 = vmatpush2.bf16.msra.mxu0 0
      %3049 = vmatprep.mubr.bf16.mxu0 0
      %3050 = vmatmul.mubr.bf16.gmra.mxu0 %v2937
      %v3051 = vpop.f32.mrf.mxu0
      %v3052 = vadd.f32 0.0, %v3051
      %v3053 = vpop.f32.mrf.mxu0
      %v3054 = vpop.f32.mrf.mxu0
      %v3055 = vadd.f32 0.0, %v3054
      %v3056 = vpop.f32.mrf.mxu0
      %3057 = vmatprep.mubr.bf16.mxu0 0
      %3058 = vmatmul.mubr.bf16.gmra.mxu0 %v2938
      %v3059 = vpop.f32.mrf.mxu0
      %v3060 = vadd.f32 0.0, %v3059
      %v3061 = vpop.f32.mrf.mxu0
      %v3062 = vpop.f32.mrf.mxu0
      %v3063 = vadd.f32 0.0, %v3062
      %v3064 = vpop.f32.mrf.mxu0
      %3065 = vmatprep.mubr.bf16.mxu0 0
      %3066 = vmatmul.mubr.bf16.gmra.mxu0 %v2939
      %v3067 = vpop.f32.mrf.mxu0
      %v3068 = vadd.f32 0.0, %v3067
      %v3069 = vpop.f32.mrf.mxu0
      %v3070 = vpop.f32.mrf.mxu0
      %v3071 = vadd.f32 0.0, %v3070
      %v3072 = vpop.f32.mrf.mxu0
      %3073 = vmatprep.mubr.bf16.mxu0 0
      %3074 = vmatmul.mubr.bf16.gmra.mxu0 %v2940
      %v3075 = vpop.f32.mrf.mxu0
      %v3076 = vadd.f32 0.0, %v3075
      %v3077 = vpop.f32.mrf.mxu0
      %v3078 = vpop.f32.mrf.mxu0
      %v3079 = vadd.f32 0.0, %v3078
      %v3080 = vpop.f32.mrf.mxu0
      %3081 = vmatprep.mubr.bf16.mxu0 0
      %3082 = vmatmul.mubr.bf16.gmra.mxu0 %v2941
      %v3083 = vpop.f32.mrf.mxu0
      %v3084 = vadd.f32 0.0, %v3083
      %v3085 = vpop.f32.mrf.mxu0
      %v3086 = vpop.f32.mrf.mxu0
      %v3087 = vadd.f32 0.0, %v3086
      %v3088 = vpop.f32.mrf.mxu0
      %3089 = vmatprep.mubr.bf16.mxu0 0
      %3090 = vmatmul.mubr.bf16.gmra.mxu0 %v2942
      %v3091 = vpop.f32.mrf.mxu0
      %v3092 = vadd.f32 0.0, %v3091
      %v3093 = vpop.f32.mrf.mxu0
      %v3094 = vpop.f32.mrf.mxu0
      %v3095 = vadd.f32 0.0, %v3094
      %v3096 = vpop.f32.mrf.mxu0
      %3097 = vmatprep.mubr.bf16.mxu0 0
      %3098 = vmatmul.mubr.bf16.gmra.mxu0 %v2943
      %v3099 = vpop.f32.mrf.mxu0
      %v3100 = vadd.f32 0.0, %v3099
      %v3101 = vpop.f32.mrf.mxu0
      %v3102 = vpop.f32.mrf.mxu0
      %v3103 = vadd.f32 0.0, %v3102
      %v3104 = vpop.f32.mrf.mxu0
      %3105 = vmatprep.mubr.bf16.mxu0 0
      %3106 = vmatmul.mubr.bf16.gmra.mxu0 %v2944
      %v3107 = vpop.f32.mrf.mxu0
      %v3108 = vadd.f32 0.0, %v3107
      %v3109 = vpop.f32.mrf.mxu0
      %v3110 = vpop.f32.mrf.mxu0
      %v3111 = vadd.f32 0.0, %v3110
      %v3112 = vpop.f32.mrf.mxu0
      %3113 = vmatprep.mubr.bf16.mxu0 0
      %3114 = vmatmul.mubr.bf16.gmra.mxu0 %v2945
      %v3115 = vpop.f32.mrf.mxu0
      %v3116 = vadd.f32 0.0, %v3115
      %v3117 = vpop.f32.mrf.mxu0
      %v3118 = vpop.f32.mrf.mxu0
      %v3119 = vadd.f32 0.0, %v3118
      %v3120 = vpop.f32.mrf.mxu0
      %3121 = vmatprep.mubr.bf16.mxu0 0
      %3122 = vmatmul.mubr.bf16.gmra.mxu0 %v2946
      %v3123 = vpop.f32.mrf.mxu0
      %v3124 = vadd.f32 0.0, %v3123
      %v3125 = vpop.f32.mrf.mxu0
      %v3126 = vpop.f32.mrf.mxu0
      %v3127 = vadd.f32 0.0, %v3126
      %v3128 = vpop.f32.mrf.mxu0
      %3129 = vmatprep.mubr.bf16.mxu0 0
      %3130 = vmatmul.mubr.bf16.gmra.mxu0 %v2947
      %v3131 = vpop.f32.mrf.mxu0
      %v3132 = vadd.f32 0.0, %v3131
      %v3133 = vpop.f32.mrf.mxu0
      %v3134 = vpop.f32.mrf.mxu0
      %v3135 = vadd.f32 0.0, %v3134
      %v3136 = vpop.f32.mrf.mxu0
      %3137 = vmatprep.mubr.bf16.mxu0 0
      %3138 = vmatmul.mubr.bf16.gmra.mxu0 %v2948
      %v3139 = vpop.f32.mrf.mxu0
      %v3140 = vadd.f32 0.0, %v3139
      %v3141 = vpop.f32.mrf.mxu0
      %v3142 = vpop.f32.mrf.mxu0
      %v3143 = vadd.f32 0.0, %v3142
      %v3144 = vpop.f32.mrf.mxu0
      %3145 = vmatprep.mubr.bf16.mxu0 0
      %3146 = vmatmul.mubr.bf16.gmra.mxu0 %v2949
      %v3147 = vpop.f32.mrf.mxu0
      %v3148 = vadd.f32 0.0, %v3147
      %v3149 = vpop.f32.mrf.mxu0
      %v3150 = vpop.f32.mrf.mxu0
      %v3151 = vadd.f32 0.0, %v3150
      %v3152 = vpop.f32.mrf.mxu0
      %3153 = vmatprep.mubr.bf16.mxu0 0
      %3154 = vmatmul.mubr.bf16.gmra.mxu0 %v2950
      %v3155 = vpop.f32.mrf.mxu0
      %v3156 = vadd.f32 0.0, %v3155
      %v3157 = vpop.f32.mrf.mxu0
      %v3158 = vpop.f32.mrf.mxu0
      %v3159 = vadd.f32 0.0, %v3158
      %v3160 = vpop.f32.mrf.mxu0
      %3161 = vmatprep.mubr.bf16.mxu0 0
      %3162 = vmatmul.mubr.bf16.gmra.mxu0 %v2951
      %v3163 = vpop.f32.mrf.mxu0
      %v3164 = vadd.f32 0.0, %v3163
      %v3165 = vpop.f32.mrf.mxu0
      %v3166 = vpop.f32.mrf.mxu0
      %v3167 = vadd.f32 0.0, %v3166
      %v3168 = vpop.f32.mrf.mxu0
      %3169 = vmatprep.mubr.bf16.mxu0 0
      %3170 = vmatmul.mubr.bf16.gmra.mxu0 %v2952
      %v3171 = vpop.f32.mrf.mxu0
      %v3172 = vadd.f32 0.0, %v3171
      %v3173 = vpop.f32.mrf.mxu0
      %v3174 = vpop.f32.mrf.mxu0
      %v3175 = vadd.f32 0.0, %v3174
      %v3176 = vpop.f32.mrf.mxu0
      %3177 = vdwg.mxu0
      %v3178 = vadd.f32 %v2599, %v3052
      %v3179 = vadd.f32 %v2602, %v3055
      %v3180 = vadd.f32 %v2607, %v3060
      %v3181 = vadd.f32 %v2610, %v3063
      %v3182 = vadd.f32 %v2615, %v3068
      %v3183 = vadd.f32 %v2618, %v3071
      %v3184 = vadd.f32 %v2623, %v3076
      %v3185 = vadd.f32 %v2626, %v3079
      %v3186 = vadd.f32 %v2631, %v3084
      %v3187 = vadd.f32 %v2634, %v3087
      %v3188 = vadd.f32 %v2639, %v3092
      %v3189 = vadd.f32 %v2642, %v3095
      %v3190 = vadd.f32 %v2647, %v3100
      %v3191 = vadd.f32 %v2650, %v3103
      %v3192 = vadd.f32 %v2655, %v3108
      %v3193 = vadd.f32 %v2658, %v3111
      %v3194 = vadd.f32 %v2663, %v3116
      %v3195 = vadd.f32 %v2666, %v3119
      %v3196 = vadd.f32 %v2671, %v3124
      %v3197 = vadd.f32 %v2674, %v3127
      %v3198 = vadd.f32 %v2679, %v3132
      %v3199 = vadd.f32 %v2682, %v3135
      %v3200 = vadd.f32 %v2687, %v3140
      %v3201 = vadd.f32 %v2690, %v3143
      %v3202 = vadd.f32 %v2695, %v3148
      %v3203 = vadd.f32 %v2698, %v3151
      %v3204 = vadd.f32 %v2703, %v3156
      %v3205 = vadd.f32 %v2706, %v3159
      %v3206 = vadd.f32 %v2711, %v3164
      %v3207 = vadd.f32 %v2714, %v3167
      %v3208 = vadd.f32 %v2719, %v3172
      %v3209 = vadd.f32 %v2722, %v3175
      %s3210 = scalar_lea.vmem [#allocation2], 12
      %v3211 = vld [vmem:[%s3210] sm:$0xf]
      %v3212 = vld [vmem:[%s3210 + $0x4] sm:$0xf]
      %v3213 = vld [vmem:[%s3210 + $0xc] sm:$0xf]
      %v3214 = vld [vmem:[%s3210 + $0x10] sm:$0xf]
      %v3215 = vld [vmem:[%s3210 + $0x18] sm:$0xf]
      %v3216 = vld [vmem:[%s3210 + $0x1c] sm:$0xf]
      %v3217 = vld [vmem:[%s3210 + $0x24] sm:$0xf]
      %v3218 = vld [vmem:[%s3210 + $0x28] sm:$0xf]
      %v3219 = vld [vmem:[%s3210 + $0x30] sm:$0xf]
      %v3220 = vld [vmem:[%s3210 + $0x34] sm:$0xf]
      %v3221 = vld [vmem:[%s3210 + $0x3c] sm:$0xf]
      %v3222 = vld [vmem:[%s3210 + $0x40] sm:$0xf]
      %v3223 = vld [vmem:[%s3210 + $0x48] sm:$0xf]
      %v3224 = vld [vmem:[%s3210 + $0x4c] sm:$0xf]
      %v3225 = vld [vmem:[%s3210 + $0x54] sm:$0xf]
      %v3226 = vld [vmem:[%s3210 + $0x58] sm:$0xf]
      %v3227 = vld [vmem:[%s3210 + $0x60] sm:$0xf]
      %v3228 = vld [vmem:[%s3210 + $0x64] sm:$0xf]
      %v3229 = vld [vmem:[%s3210 + $0x6c] sm:$0xf]
      %v3230 = vld [vmem:[%s3210 + $0x70] sm:$0xf]
      %v3231 = vld [vmem:[%s3210 + $0x78] sm:$0xf]
      %v3232 = vld [vmem:[%s3210 + $0x7c] sm:$0xf]
      %v3233 = vld [vmem:[%s3210 + $0x84] sm:$0xf]
      %v3234 = vld [vmem:[%s3210 + $0x88] sm:$0xf]
      %v3235 = vld [vmem:[%s3210 + $0x90] sm:$0xf]
      %v3236 = vld [vmem:[%s3210 + $0x94] sm:$0xf]
      %v3237 = vld [vmem:[%s3210 + $0x9c] sm:$0xf]
      %v3238 = vld [vmem:[%s3210 + $0xa0] sm:$0xf]
      %v3239 = vld [vmem:[%s3210 + $0xa8] sm:$0xf]
      %v3240 = vld [vmem:[%s3210 + $0xac] sm:$0xf]
      %v3241 = vld [vmem:[%s3210 + $0xb4] sm:$0xf]
      %v3242 = vld [vmem:[%s3210 + $0xb8] sm:$0xf]
      %s3243 = scalar_lea.vmem %s4, 192
      %v3244 = vld [vmem:[%s3243] sm:$0xf]
      %v3245 = vld [vmem:[%s3243 + $0x4] sm:$0xf]
      %v3246 = vld [vmem:[%s3243 + $0x8] sm:$0xf]
      %v3247 = vld [vmem:[%s3243 + $0xc] sm:$0xf]
      %v3248 = vld [vmem:[%s3243 + $0x10] sm:$0xf]
      %v3249 = vld [vmem:[%s3243 + $0x14] sm:$0xf]
      %v3250 = vld [vmem:[%s3243 + $0x18] sm:$0xf]
      %v3251 = vld [vmem:[%s3243 + $0x1c] sm:$0xf]
      %v3252 = vld [vmem:[%s3243 + $0x20] sm:$0xf]
      %v3253 = vld [vmem:[%s3243 + $0x24] sm:$0xf]
      %v3254 = vld [vmem:[%s3243 + $0x28] sm:$0xf]
      %v3255 = vld [vmem:[%s3243 + $0x2c] sm:$0xf]
      %v3256 = vld [vmem:[%s3243 + $0x30] sm:$0xf]
      %v3257 = vld [vmem:[%s3243 + $0x34] sm:$0xf]
      %v3258 = vld [vmem:[%s3243 + $0x38] sm:$0xf]
      %v3259 = vld [vmem:[%s3243 + $0x3c] sm:$0xf]
      %v3292 = vunpack.c.l.b16 %v3211
      %v3293 = vunpack.c.l.b16 %v3212
      %v3294 = vunpack.c.l.b16 %v3213
      %v3295 = vunpack.c.l.b16 %v3214
      %v3296 = vunpack.c.l.b16 %v3215
      %v3297 = vunpack.c.l.b16 %v3216
      %v3298 = vunpack.c.l.b16 %v3217
      %v3299 = vunpack.c.l.b16 %v3218
      %v3300 = vunpack.c.l.b16 %v3219
      %v3301 = vunpack.c.l.b16 %v3220
      %v3302 = vunpack.c.l.b16 %v3221
      %v3303 = vunpack.c.l.b16 %v3222
      %v3304 = vunpack.c.l.b16 %v3223
      %v3305 = vunpack.c.l.b16 %v3224
      %v3306 = vunpack.c.l.b16 %v3225
      %v3307 = vunpack.c.l.b16 %v3226
      %v3308 = vunpack.c.l.b16 %v3227
      %v3309 = vunpack.c.l.b16 %v3228
      %v3310 = vunpack.c.l.b16 %v3229
      %v3311 = vunpack.c.l.b16 %v3230
      %v3312 = vunpack.c.l.b16 %v3231
      %v3313 = vunpack.c.l.b16 %v3232
      %v3314 = vunpack.c.l.b16 %v3233
      %v3315 = vunpack.c.l.b16 %v3234
      %v3316 = vunpack.c.l.b16 %v3235
      %v3317 = vunpack.c.l.b16 %v3236
      %v3318 = vunpack.c.l.b16 %v3237
      %v3319 = vunpack.c.l.b16 %v3238
      %v3320 = vunpack.c.l.b16 %v3239
      %v3321 = vunpack.c.l.b16 %v3240
      %v3322 = vunpack.c.l.b16 %v3241
      %v3323 = vunpack.c.l.b16 %v3242
      %v3324 = vpack.c.b16 %v3293, %v3292
      %v3325 = vpack.c.b16 %v3295, %v3294
      %v3326 = vpack.c.b16 %v3297, %v3296
      %v3327 = vpack.c.b16 %v3299, %v3298
      %v3328 = vpack.c.b16 %v3301, %v3300
      %v3329 = vpack.c.b16 %v3303, %v3302
      %v3330 = vpack.c.b16 %v3305, %v3304
      %v3331 = vpack.c.b16 %v3307, %v3306
      %v3332 = vpack.c.b16 %v3309, %v3308
      %v3333 = vpack.c.b16 %v3311, %v3310
      %v3334 = vpack.c.b16 %v3313, %v3312
      %v3335 = vpack.c.b16 %v3315, %v3314
      %v3336 = vpack.c.b16 %v3317, %v3316
      %v3337 = vpack.c.b16 %v3319, %v3318
      %v3338 = vpack.c.b16 %v3321, %v3320
      %v3339 = vpack.c.b16 %v3323, %v3322
      %v3372 = vunpack.c.l.b16 %v3244
      %v3373 = vunpack.c.l.b16 %v3245
      %v3374 = vunpack.c.l.b16 %v3246
      %v3375 = vunpack.c.l.b16 %v3247
      %v3376 = vunpack.c.l.b16 %v3248
      %v3377 = vunpack.c.l.b16 %v3249
      %v3378 = vunpack.c.l.b16 %v3250
      %v3379 = vunpack.c.l.b16 %v3251
      %v3380 = vunpack.c.l.b16 %v3252
      %v3381 = vunpack.c.l.b16 %v3253
      %v3382 = vunpack.c.l.b16 %v3254
      %v3383 = vunpack.c.l.b16 %v3255
      %v3384 = vunpack.c.l.b16 %v3256
      %v3385 = vunpack.c.l.b16 %v3257
      %v3386 = vunpack.c.l.b16 %v3258
      %v3387 = vunpack.c.l.b16 %v3259
      %v3388 = vpack.c.b16 %v3373, %v3372
      %v3389 = vpack.c.b16 %v3375, %v3374
      %v3390 = vpack.c.b16 %v3377, %v3376
      %v3391 = vpack.c.b16 %v3379, %v3378
      %v3392 = vpack.c.b16 %v3381, %v3380
      %v3393 = vpack.c.b16 %v3383, %v3382
      %v3394 = vpack.c.b16 %v3385, %v3384
      %v3395 = vpack.c.b16 %v3387, %v3386
      %3404 = vmatprep.subr.bf16.mxu0 0
      %3405 = vmatpush1.bf16.msra.mxu0 %v3395
      %3406 = vmatprep.subr.bf16.mxu0 0
      %3407 = vmatpush1.bf16.msra.mxu0 %v3394
      %3408 = vmatprep.subr.bf16.mxu0 0
      %3409 = vmatpush1.bf16.msra.mxu0 %v3393
      %3410 = vmatprep.subr.bf16.mxu0 0
      %3411 = vmatpush1.bf16.msra.mxu0 %v3392
      %3412 = vmatprep.subr.bf16.mxu0 0
      %3413 = vmatpush1.bf16.msra.mxu0 %v3391
      %3414 = vmatprep.subr.bf16.mxu0 0
      %3415 = vmatpush1.bf16.msra.mxu0 %v3390
      %3416 = vmatprep.subr.bf16.mxu0 0
      %3417 = vmatpush1.bf16.msra.mxu0 %v3389
      %3418 = vmatprep.subr.bf16.mxu0 0
      %3419 = vmatpush1.bf16.msra.mxu0 %v3388
      %3420 = vmatprep.subr.bf16.mxu0 0
      %3421 = vmatpush2.bf16.msra.mxu0 0
      %3422 = vmatprep.subr.bf16.mxu0 0
      %3423 = vmatpush2.bf16.msra.mxu0 0
      %3424 = vmatprep.subr.bf16.mxu0 0
      %3425 = vmatpush2.bf16.msra.mxu0 0
      %3426 = vmatprep.subr.bf16.mxu0 0
      %3427 = vmatpush2.bf16.msra.mxu0 0
      %3428 = vmatprep.subr.bf16.mxu0 0
      %3429 = vmatpush2.bf16.msra.mxu0 0
      %3430 = vmatprep.subr.bf16.mxu0 0
      %3431 = vmatpush2.bf16.msra.mxu0 0
      %3432 = vmatprep.subr.bf16.mxu0 0
      %3433 = vmatpush2.bf16.msra.mxu0 0
      %3434 = vmatprep.subr.bf16.mxu0 0
      %3435 = vmatpush2.bf16.msra.mxu0 0
      %3436 = vmatprep.mubr.bf16.mxu0 0
      %3437 = vmatmul.mubr.bf16.gmra.mxu0 %v3324
      %v3438 = vpop.f32.mrf.mxu0
      %v3439 = vadd.f32 0.0, %v3438
      %v3440 = vpop.f32.mrf.mxu0
      %v3441 = vpop.f32.mrf.mxu0
      %v3442 = vadd.f32 0.0, %v3441
      %v3443 = vpop.f32.mrf.mxu0
      %3444 = vmatprep.mubr.bf16.mxu0 0
      %3445 = vmatmul.mubr.bf16.gmra.mxu0 %v3325
      %v3446 = vpop.f32.mrf.mxu0
      %v3447 = vadd.f32 0.0, %v3446
      %v3448 = vpop.f32.mrf.mxu0
      %v3449 = vpop.f32.mrf.mxu0
      %v3450 = vadd.f32 0.0, %v3449
      %v3451 = vpop.f32.mrf.mxu0
      %3452 = vmatprep.mubr.bf16.mxu0 0
      %3453 = vmatmul.mubr.bf16.gmra.mxu0 %v3326
      %v3454 = vpop.f32.mrf.mxu0
      %v3455 = vadd.f32 0.0, %v3454
      %v3456 = vpop.f32.mrf.mxu0
      %v3457 = vpop.f32.mrf.mxu0
      %v3458 = vadd.f32 0.0, %v3457
      %v3459 = vpop.f32.mrf.mxu0
      %3460 = vmatprep.mubr.bf16.mxu0 0
      %3461 = vmatmul.mubr.bf16.gmra.mxu0 %v3327
      %v3462 = vpop.f32.mrf.mxu0
      %v3463 = vadd.f32 0.0, %v3462
      %v3464 = vpop.f32.mrf.mxu0
      %v3465 = vpop.f32.mrf.mxu0
      %v3466 = vadd.f32 0.0, %v3465
      %v3467 = vpop.f32.mrf.mxu0
      %3468 = vmatprep.mubr.bf16.mxu0 0
      %3469 = vmatmul.mubr.bf16.gmra.mxu0 %v3328
      %v3470 = vpop.f32.mrf.mxu0
      %v3471 = vadd.f32 0.0, %v3470
      %v3472 = vpop.f32.mrf.mxu0
      %v3473 = vpop.f32.mrf.mxu0
      %v3474 = vadd.f32 0.0, %v3473
      %v3475 = vpop.f32.mrf.mxu0
      %3476 = vmatprep.mubr.bf16.mxu0 0
      %3477 = vmatmul.mubr.bf16.gmra.mxu0 %v3329
      %v3478 = vpop.f32.mrf.mxu0
      %v3479 = vadd.f32 0.0, %v3478
      %v3480 = vpop.f32.mrf.mxu0
      %v3481 = vpop.f32.mrf.mxu0
      %v3482 = vadd.f32 0.0, %v3481
      %v3483 = vpop.f32.mrf.mxu0
      %3484 = vmatprep.mubr.bf16.mxu0 0
      %3485 = vmatmul.mubr.bf16.gmra.mxu0 %v3330
      %v3486 = vpop.f32.mrf.mxu0
      %v3487 = vadd.f32 0.0, %v3486
      %v3488 = vpop.f32.mrf.mxu0
      %v3489 = vpop.f32.mrf.mxu0
      %v3490 = vadd.f32 0.0, %v3489
      %v3491 = vpop.f32.mrf.mxu0
      %3492 = vmatprep.mubr.bf16.mxu0 0
      %3493 = vmatmul.mubr.bf16.gmra.mxu0 %v3331
      %v3494 = vpop.f32.mrf.mxu0
      %v3495 = vadd.f32 0.0, %v3494
      %v3496 = vpop.f32.mrf.mxu0
      %v3497 = vpop.f32.mrf.mxu0
      %v3498 = vadd.f32 0.0, %v3497
      %v3499 = vpop.f32.mrf.mxu0
      %3500 = vmatprep.mubr.bf16.mxu0 0
      %3501 = vmatmul.mubr.bf16.gmra.mxu0 %v3332
      %v3502 = vpop.f32.mrf.mxu0
      %v3503 = vadd.f32 0.0, %v3502
      %v3504 = vpop.f32.mrf.mxu0
      %v3505 = vpop.f32.mrf.mxu0
      %v3506 = vadd.f32 0.0, %v3505
      %v3507 = vpop.f32.mrf.mxu0
      %3508 = vmatprep.mubr.bf16.mxu0 0
      %3509 = vmatmul.mubr.bf16.gmra.mxu0 %v3333
      %v3510 = vpop.f32.mrf.mxu0
      %v3511 = vadd.f32 0.0, %v3510
      %v3512 = vpop.f32.mrf.mxu0
      %v3513 = vpop.f32.mrf.mxu0
      %v3514 = vadd.f32 0.0, %v3513
      %v3515 = vpop.f32.mrf.mxu0
      %3516 = vmatprep.mubr.bf16.mxu0 0
      %3517 = vmatmul.mubr.bf16.gmra.mxu0 %v3334
      %v3518 = vpop.f32.mrf.mxu0
      %v3519 = vadd.f32 0.0, %v3518
      %v3520 = vpop.f32.mrf.mxu0
      %v3521 = vpop.f32.mrf.mxu0
      %v3522 = vadd.f32 0.0, %v3521
      %v3523 = vpop.f32.mrf.mxu0
      %3524 = vmatprep.mubr.bf16.mxu0 0
      %3525 = vmatmul.mubr.bf16.gmra.mxu0 %v3335
      %v3526 = vpop.f32.mrf.mxu0
      %v3527 = vadd.f32 0.0, %v3526
      %v3528 = vpop.f32.mrf.mxu0
      %v3529 = vpop.f32.mrf.mxu0
      %v3530 = vadd.f32 0.0, %v3529
      %v3531 = vpop.f32.mrf.mxu0
      %3532 = vmatprep.mubr.bf16.mxu0 0
      %3533 = vmatmul.mubr.bf16.gmra.mxu0 %v3336
      %v3534 = vpop.f32.mrf.mxu0
      %v3535 = vadd.f32 0.0, %v3534
      %v3536 = vpop.f32.mrf.mxu0
      %v3537 = vpop.f32.mrf.mxu0
      %v3538 = vadd.f32 0.0, %v3537
      %v3539 = vpop.f32.mrf.mxu0
      %3540 = vmatprep.mubr.bf16.mxu0 0
      %3541 = vmatmul.mubr.bf16.gmra.mxu0 %v3337
      %v3542 = vpop.f32.mrf.mxu0
      %v3543 = vadd.f32 0.0, %v3542
      %v3544 = vpop.f32.mrf.mxu0
      %v3545 = vpop.f32.mrf.mxu0
      %v3546 = vadd.f32 0.0, %v3545
      %v3547 = vpop.f32.mrf.mxu0
      %3548 = vmatprep.mubr.bf16.mxu0 0
      %3549 = vmatmul.mubr.bf16.gmra.mxu0 %v3338
      %v3550 = vpop.f32.mrf.mxu0
      %v3551 = vadd.f32 0.0, %v3550
      %v3552 = vpop.f32.mrf.mxu0
      %v3553 = vpop.f32.mrf.mxu0
      %v3554 = vadd.f32 0.0, %v3553
      %v3555 = vpop.f32.mrf.mxu0
      %3556 = vmatprep.mubr.bf16.mxu0 0
      %3557 = vmatmul.mubr.bf16.gmra.mxu0 %v3339
      %v3558 = vpop.f32.mrf.mxu0
      %v3559 = vadd.f32 0.0, %v3558
      %v3560 = vpop.f32.mrf.mxu0
      %v3561 = vpop.f32.mrf.mxu0
      %v3562 = vadd.f32 0.0, %v3561
      %v3563 = vpop.f32.mrf.mxu0
      %3564 = vdwg.mxu0
      %v3565 = vadd.f32 %v3178, %v3439
      %v3566 = vadd.f32 %v3179, %v3442
      %v3567 = vadd.f32 %v3180, %v3447
      %v3568 = vadd.f32 %v3181, %v3450
      %v3569 = vadd.f32 %v3182, %v3455
      %v3570 = vadd.f32 %v3183, %v3458
      %v3571 = vadd.f32 %v3184, %v3463
      %v3572 = vadd.f32 %v3185, %v3466
      %v3573 = vadd.f32 %v3186, %v3471
      %v3574 = vadd.f32 %v3187, %v3474
      %v3575 = vadd.f32 %v3188, %v3479
      %v3576 = vadd.f32 %v3189, %v3482
      %v3577 = vadd.f32 %v3190, %v3487
      %v3578 = vadd.f32 %v3191, %v3490
      %v3579 = vadd.f32 %v3192, %v3495
      %v3580 = vadd.f32 %v3193, %v3498
      %v3581 = vadd.f32 %v3194, %v3503
      %v3582 = vadd.f32 %v3195, %v3506
      %v3583 = vadd.f32 %v3196, %v3511
      %v3584 = vadd.f32 %v3197, %v3514
      %v3585 = vadd.f32 %v3198, %v3519
      %v3586 = vadd.f32 %v3199, %v3522
      %v3587 = vadd.f32 %v3200, %v3527
      %v3588 = vadd.f32 %v3201, %v3530
      %v3589 = vadd.f32 %v3202, %v3535
      %v3590 = vadd.f32 %v3203, %v3538
      %v3591 = vadd.f32 %v3204, %v3543
      %v3592 = vadd.f32 %v3205, %v3546
      %v3593 = vadd.f32 %v3206, %v3551
      %v3594 = vadd.f32 %v3207, %v3554
      %v3595 = vadd.f32 %v3208, %v3559
      %v3596 = vadd.f32 %v3209, %v3562
      %v3597 = vld [vmem:[%s3210] sm:$0xf]
      %v3598 = vld [vmem:[%s3210 + $0x4] sm:$0xf]
      %v3599 = vld [vmem:[%s3210 + $0x8] sm:$0x1]
      %v3600 = vld [vmem:[%s3210 + $0xc] sm:$0xf]
      %v3601 = vld [vmem:[%s3210 + $0x10] sm:$0xf]
      %v3602 = vld [vmem:[%s3210 + $0x14] sm:$0x1]
      %v3603 = vld [vmem:[%s3210 + $0x18] sm:$0xf]
      %v3604 = vld [vmem:[%s3210 + $0x1c] sm:$0xf]
      %v3605 = vld [vmem:[%s3210 + $0x20] sm:$0x1]
      %v3606 = vld [vmem:[%s3210 + $0x24] sm:$0xf]
      %v3607 = vld [vmem:[%s3210 + $0x28] sm:$0xf]
      %v3608 = vld [vmem:[%s3210 + $0x2c] sm:$0x1]
      %v3609 = vld [vmem:[%s3210 + $0x30] sm:$0xf]
      %v3610 = vld [vmem:[%s3210 + $0x34] sm:$0xf]
      %v3611 = vld [vmem:[%s3210 + $0x38] sm:$0x1]
      %v3612 = vld [vmem:[%s3210 + $0x3c] sm:$0xf]
      %v3613 = vld [vmem:[%s3210 + $0x40] sm:$0xf]
      %v3614 = vld [vmem:[%s3210 + $0x44] sm:$0x1]
      %v3615 = vld [vmem:[%s3210 + $0x48] sm:$0xf]
      %v3616 = vld [vmem:[%s3210 + $0x4c] sm:$0xf]
      %v3617 = vld [vmem:[%s3210 + $0x50] sm:$0x1]
      %v3618 = vld [vmem:[%s3210 + $0x54] sm:$0xf]
      %v3619 = vld [vmem:[%s3210 + $0x58] sm:$0xf]
      %v3620 = vld [vmem:[%s3210 + $0x5c] sm:$0x1]
      %v3621 = vld [vmem:[%s3210 + $0x60] sm:$0xf]
      %v3622 = vld [vmem:[%s3210 + $0x64] sm:$0xf]
      %v3623 = vld [vmem:[%s3210 + $0x68] sm:$0x1]
      %v3624 = vld [vmem:[%s3210 + $0x6c] sm:$0xf]
      %v3625 = vld [vmem:[%s3210 + $0x70] sm:$0xf]
      %v3626 = vld [vmem:[%s3210 + $0x74] sm:$0x1]
      %v3627 = vld [vmem:[%s3210 + $0x78] sm:$0xf]
      %v3628 = vld [vmem:[%s3210 + $0x7c] sm:$0xf]
      %v3629 = vld [vmem:[%s3210 + $0x80] sm:$0x1]
      %v3630 = vld [vmem:[%s3210 + $0x84] sm:$0xf]
      %v3631 = vld [vmem:[%s3210 + $0x88] sm:$0xf]
      %v3632 = vld [vmem:[%s3210 + $0x8c] sm:$0x1]
      %v3633 = vld [vmem:[%s3210 + $0x90] sm:$0xf]
      %v3634 = vld [vmem:[%s3210 + $0x94] sm:$0xf]
      %v3635 = vld [vmem:[%s3210 + $0x98] sm:$0x1]
      %v3636 = vld [vmem:[%s3210 + $0x9c] sm:$0xf]
      %v3637 = vld [vmem:[%s3210 + $0xa0] sm:$0xf]
      %v3638 = vld [vmem:[%s3210 + $0xa4] sm:$0x1]
      %v3639 = vld [vmem:[%s3210 + $0xa8] sm:$0xf]
      %v3640 = vld [vmem:[%s3210 + $0xac] sm:$0xf]
      %v3641 = vld [vmem:[%s3210 + $0xb0] sm:$0x1]
      %v3642 = vld [vmem:[%s3210 + $0xb4] sm:$0xf]
      %v3643 = vld [vmem:[%s3210 + $0xb8] sm:$0xf]
      %v3644 = vld [vmem:[%s3210 + $0xbc] sm:$0x1]
      %v3646 = vshrl.u32 %v3597, 16
      %v3648 = vrot.slane %v3646, 4
      %v3649 = vshll.u32 %v3597, 16
      %v3651 = vrot.slane %v3649, 5
      %v3652 = vor.u32 %v3648, %v3651
      %v3653 = vrot.slane %v3652, 4
      %v3655 = vshll.u32 %v3598, 16
      %v3657 = vrot.slane %v3655, 5
      %v3658 = vsel %vm1745, %v3653, %v3657
      %v3659 = vshrl.u32 %v3598, 16
      %v3661 = vrot.slane %v3659, 4
      %v3662 = vor.u32 %v3661, %v3657
      %v3663 = vrot.slane %v3662, 4
      %v3665 = vshll.u32 %v3599, 16
      %v3667 = vrot.slane %v3665, 5
      %v3668 = vsel %vm1745, %v3663, %v3667
      %v3670 = vshrl.u32 %v3600, 16
      %v3672 = vrot.slane %v3670, 4
      %v3673 = vshll.u32 %v3600, 16
      %v3675 = vrot.slane %v3673, 5
      %v3676 = vor.u32 %v3672, %v3675
      %v3677 = vrot.slane %v3676, 4
      %v3679 = vshll.u32 %v3601, 16
      %v3681 = vrot.slane %v3679, 5
      %v3682 = vsel %vm1745, %v3677, %v3681
      %v3683 = vshrl.u32 %v3601, 16
      %v3685 = vrot.slane %v3683, 4
      %v3686 = vor.u32 %v3685, %v3681
      %v3687 = vrot.slane %v3686, 4
      %v3689 = vshll.u32 %v3602, 16
      %v3691 = vrot.slane %v3689, 5
      %v3692 = vsel %vm1745, %v3687, %v3691
      %v3694 = vshrl.u32 %v3603, 16
      %v3696 = vrot.slane %v3694, 4
      %v3697 = vshll.u32 %v3603, 16
      %v3699 = vrot.slane %v3697, 5
      %v3700 = vor.u32 %v3696, %v3699
      %v3701 = vrot.slane %v3700, 4
      %v3703 = vshll.u32 %v3604, 16
      %v3705 = vrot.slane %v3703, 5
      %v3706 = vsel %vm1745, %v3701, %v3705
      %v3707 = vshrl.u32 %v3604, 16
      %v3709 = vrot.slane %v3707, 4
      %v3710 = vor.u32 %v3709, %v3705
      %v3711 = vrot.slane %v3710, 4
      %v3713 = vshll.u32 %v3605, 16
      %v3715 = vrot.slane %v3713, 5
      %v3716 = vsel %vm1745, %v3711, %v3715
      %v3718 = vshrl.u32 %v3606, 16
      %v3720 = vrot.slane %v3718, 4
      %v3721 = vshll.u32 %v3606, 16
      %v3723 = vrot.slane %v3721, 5
      %v3724 = vor.u32 %v3720, %v3723
      %v3725 = vrot.slane %v3724, 4
      %v3727 = vshll.u32 %v3607, 16
      %v3729 = vrot.slane %v3727, 5
      %v3730 = vsel %vm1745, %v3725, %v3729
      %v3731 = vshrl.u32 %v3607, 16
      %v3733 = vrot.slane %v3731, 4
      %v3734 = vor.u32 %v3733, %v3729
      %v3735 = vrot.slane %v3734, 4
      %v3737 = vshll.u32 %v3608, 16
      %v3739 = vrot.slane %v3737, 5
      %v3740 = vsel %vm1745, %v3735, %v3739
      %v3742 = vshrl.u32 %v3609, 16
      %v3744 = vrot.slane %v3742, 4
      %v3745 = vshll.u32 %v3609, 16
      %v3747 = vrot.slane %v3745, 5
      %v3748 = vor.u32 %v3744, %v3747
      %v3749 = vrot.slane %v3748, 4
      %v3751 = vshll.u32 %v3610, 16
      %v3753 = vrot.slane %v3751, 5
      %v3754 = vsel %vm1745, %v3749, %v3753
      %v3755 = vshrl.u32 %v3610, 16
      %v3757 = vrot.slane %v3755, 4
      %v3758 = vor.u32 %v3757, %v3753
      %v3759 = vrot.slane %v3758, 4
      %v3761 = vshll.u32 %v3611, 16
      %v3763 = vrot.slane %v3761, 5
      %v3764 = vsel %vm1745, %v3759, %v3763
      %v3766 = vshrl.u32 %v3612, 16
      %v3768 = vrot.slane %v3766, 4
      %v3769 = vshll.u32 %v3612, 16
      %v3771 = vrot.slane %v3769, 5
      %v3772 = vor.u32 %v3768, %v3771
      %v3773 = vrot.slane %v3772, 4
      %v3775 = vshll.u32 %v3613, 16
      %v3777 = vrot.slane %v3775, 5
      %v3778 = vsel %vm1745, %v3773, %v3777
      %v3779 = vshrl.u32 %v3613, 16
      %v3781 = vrot.slane %v3779, 4
      %v3782 = vor.u32 %v3781, %v3777
      %v3783 = vrot.slane %v3782, 4
      %v3785 = vshll.u32 %v3614, 16
      %v3787 = vrot.slane %v3785, 5
      %v3788 = vsel %vm1745, %v3783, %v3787
      %v3790 = vshrl.u32 %v3615, 16
      %v3792 = vrot.slane %v3790, 4
      %v3793 = vshll.u32 %v3615, 16
      %v3795 = vrot.slane %v3793, 5
      %v3796 = vor.u32 %v3792, %v3795
      %v3797 = vrot.slane %v3796, 4
      %v3799 = vshll.u32 %v3616, 16
      %v3801 = vrot.slane %v3799, 5
      %v3802 = vsel %vm1745, %v3797, %v3801
      %v3803 = vshrl.u32 %v3616, 16
      %v3805 = vrot.slane %v3803, 4
      %v3806 = vor.u32 %v3805, %v3801
      %v3807 = vrot.slane %v3806, 4
      %v3809 = vshll.u32 %v3617, 16
      %v3811 = vrot.slane %v3809, 5
      %v3812 = vsel %vm1745, %v3807, %v3811
      %v3814 = vshrl.u32 %v3618, 16
      %v3816 = vrot.slane %v3814, 4
      %v3817 = vshll.u32 %v3618, 16
      %v3819 = vrot.slane %v3817, 5
      %v3820 = vor.u32 %v3816, %v3819
      %v3821 = vrot.slane %v3820, 4
      %v3823 = vshll.u32 %v3619, 16
      %v3825 = vrot.slane %v3823, 5
      %v3826 = vsel %vm1745, %v3821, %v3825
      %v3827 = vshrl.u32 %v3619, 16
      %v3829 = vrot.slane %v3827, 4
      %v3830 = vor.u32 %v3829, %v3825
      %v3831 = vrot.slane %v3830, 4
      %v3833 = vshll.u32 %v3620, 16
      %v3835 = vrot.slane %v3833, 5
      %v3836 = vsel %vm1745, %v3831, %v3835
      %v3838 = vshrl.u32 %v3621, 16
      %v3840 = vrot.slane %v3838, 4
      %v3841 = vshll.u32 %v3621, 16
      %v3843 = vrot.slane %v3841, 5
      %v3844 = vor.u32 %v3840, %v3843
      %v3845 = vrot.slane %v3844, 4
      %v3847 = vshll.u32 %v3622, 16
      %v3849 = vrot.slane %v3847, 5
      %v3850 = vsel %vm1745, %v3845, %v3849
      %v3851 = vshrl.u32 %v3622, 16
      %v3853 = vrot.slane %v3851, 4
      %v3854 = vor.u32 %v3853, %v3849
      %v3855 = vrot.slane %v3854, 4
      %v3857 = vshll.u32 %v3623, 16
      %v3859 = vrot.slane %v3857, 5
      %v3860 = vsel %vm1745, %v3855, %v3859
      %v3862 = vshrl.u32 %v3624, 16
      %v3864 = vrot.slane %v3862, 4
      %v3865 = vshll.u32 %v3624, 16
      %v3867 = vrot.slane %v3865, 5
      %v3868 = vor.u32 %v3864, %v3867
      %v3869 = vrot.slane %v3868, 4
      %v3871 = vshll.u32 %v3625, 16
      %v3873 = vrot.slane %v3871, 5
      %v3874 = vsel %vm1745, %v3869, %v3873
      %v3875 = vshrl.u32 %v3625, 16
      %v3877 = vrot.slane %v3875, 4
      %v3878 = vor.u32 %v3877, %v3873
      %v3879 = vrot.slane %v3878, 4
      %v3881 = vshll.u32 %v3626, 16
      %v3883 = vrot.slane %v3881, 5
      %v3884 = vsel %vm1745, %v3879, %v3883
      %v3886 = vshrl.u32 %v3627, 16
      %v3888 = vrot.slane %v3886, 4
      %v3889 = vshll.u32 %v3627, 16
      %v3891 = vrot.slane %v3889, 5
      %v3892 = vor.u32 %v3888, %v3891
      %v3893 = vrot.slane %v3892, 4
      %v3895 = vshll.u32 %v3628, 16
      %v3897 = vrot.slane %v3895, 5
      %v3898 = vsel %vm1745, %v3893, %v3897
      %v3899 = vshrl.u32 %v3628, 16
      %v3901 = vrot.slane %v3899, 4
      %v3902 = vor.u32 %v3901, %v3897
      %v3903 = vrot.slane %v3902, 4
      %v3905 = vshll.u32 %v3629, 16
      %v3907 = vrot.slane %v3905, 5
      %v3908 = vsel %vm1745, %v3903, %v3907
      %v3910 = vshrl.u32 %v3630, 16
      %v3912 = vrot.slane %v3910, 4
      %v3913 = vshll.u32 %v3630, 16
      %v3915 = vrot.slane %v3913, 5
      %v3916 = vor.u32 %v3912, %v3915
      %v3917 = vrot.slane %v3916, 4
      %v3919 = vshll.u32 %v3631, 16
      %v3921 = vrot.slane %v3919, 5
      %v3922 = vsel %vm1745, %v3917, %v3921
      %v3923 = vshrl.u32 %v3631, 16
      %v3925 = vrot.slane %v3923, 4
      %v3926 = vor.u32 %v3925, %v3921
      %v3927 = vrot.slane %v3926, 4
      %v3929 = vshll.u32 %v3632, 16
      %v3931 = vrot.slane %v3929, 5
      %v3932 = vsel %vm1745, %v3927, %v3931
      %v3934 = vshrl.u32 %v3633, 16
      %v3936 = vrot.slane %v3934, 4
      %v3937 = vshll.u32 %v3633, 16
      %v3939 = vrot.slane %v3937, 5
      %v3940 = vor.u32 %v3936, %v3939
      %v3941 = vrot.slane %v3940, 4
      %v3943 = vshll.u32 %v3634, 16
      %v3945 = vrot.slane %v3943, 5
      %v3946 = vsel %vm1745, %v3941, %v3945
      %v3947 = vshrl.u32 %v3634, 16
      %v3949 = vrot.slane %v3947, 4
      %v3950 = vor.u32 %v3949, %v3945
      %v3951 = vrot.slane %v3950, 4
      %v3953 = vshll.u32 %v3635, 16
      %v3955 = vrot.slane %v3953, 5
      %v3956 = vsel %vm1745, %v3951, %v3955
      %v3958 = vshrl.u32 %v3636, 16
      %v3960 = vrot.slane %v3958, 4
      %v3961 = vshll.u32 %v3636, 16
      %v3963 = vrot.slane %v3961, 5
      %v3964 = vor.u32 %v3960, %v3963
      %v3965 = vrot.slane %v3964, 4
      %v3967 = vshll.u32 %v3637, 16
      %v3969 = vrot.slane %v3967, 5
      %v3970 = vsel %vm1745, %v3965, %v3969
      %v3971 = vshrl.u32 %v3637, 16
      %v3973 = vrot.slane %v3971, 4
      %v3974 = vor.u32 %v3973, %v3969
      %v3975 = vrot.slane %v3974, 4
      %v3977 = vshll.u32 %v3638, 16
      %v3979 = vrot.slane %v3977, 5
      %v3980 = vsel %vm1745, %v3975, %v3979
      %v3982 = vshrl.u32 %v3639, 16
      %v3984 = vrot.slane %v3982, 4
      %v3985 = vshll.u32 %v3639, 16
      %v3987 = vrot.slane %v3985, 5
      %v3988 = vor.u32 %v3984, %v3987
      %v3989 = vrot.slane %v3988, 4
      %v3991 = vshll.u32 %v3640, 16
      %v3993 = vrot.slane %v3991, 5
      %v3994 = vsel %vm1745, %v3989, %v3993
      %v3995 = vshrl.u32 %v3640, 16
      %v3997 = vrot.slane %v3995, 4
      %v3998 = vor.u32 %v3997, %v3993
      %v3999 = vrot.slane %v3998, 4
      %v4001 = vshll.u32 %v3641, 16
      %v4003 = vrot.slane %v4001, 5
      %v4004 = vsel %vm1745, %v3999, %v4003
      %v4006 = vshrl.u32 %v3642, 16
      %v4008 = vrot.slane %v4006, 4
      %v4009 = vshll.u32 %v3642, 16
      %v4011 = vrot.slane %v4009, 5
      %v4012 = vor.u32 %v4008, %v4011
      %v4013 = vrot.slane %v4012, 4
      %v4015 = vshll.u32 %v3643, 16
      %v4017 = vrot.slane %v4015, 5
      %v4018 = vsel %vm1745, %v4013, %v4017
      %v4019 = vshrl.u32 %v3643, 16
      %v4021 = vrot.slane %v4019, 4
      %v4022 = vor.u32 %v4021, %v4017
      %v4023 = vrot.slane %v4022, 4
      %v4025 = vshll.u32 %v3644, 16
      %v4027 = vrot.slane %v4025, 5
      %v4028 = vsel %vm1745, %v4023, %v4027
      %s4029 = scalar_lea.vmem %s4, 256
      %v4030 = vld [vmem:[%s4029] sm:$0xf]
      %v4031 = vld [vmem:[%s4029 + $0x4] sm:$0xf]
      %v4032 = vld [vmem:[%s4029 + $0x8] sm:$0xf]
      %v4033 = vld [vmem:[%s4029 + $0xc] sm:$0xf]
      %v4034 = vld [vmem:[%s4029 + $0x10] sm:$0xf]
      %v4035 = vld [vmem:[%s4029 + $0x14] sm:$0xf]
      %v4036 = vld [vmem:[%s4029 + $0x18] sm:$0xf]
      %v4037 = vld [vmem:[%s4029 + $0x1c] sm:$0xf]
      %v4038 = vld [vmem:[%s4029 + $0x20] sm:$0xf]
      %v4039 = vld [vmem:[%s4029 + $0x24] sm:$0xf]
      %v4040 = vld [vmem:[%s4029 + $0x28] sm:$0xf]
      %v4041 = vld [vmem:[%s4029 + $0x2c] sm:$0xf]
      %v4042 = vld [vmem:[%s4029 + $0x30] sm:$0xf]
      %v4043 = vld [vmem:[%s4029 + $0x34] sm:$0xf]
      %v4044 = vld [vmem:[%s4029 + $0x38] sm:$0xf]
      %v4045 = vld [vmem:[%s4029 + $0x3c] sm:$0xf]
      %v4046 = vunpack.c.l.b16 %v3658
      %v4047 = vunpack.c.l.b16 %v3668
      %v4048 = vunpack.c.l.b16 %v3682
      %v4049 = vunpack.c.l.b16 %v3692
      %v4050 = vunpack.c.l.b16 %v3706
      %v4051 = vunpack.c.l.b16 %v3716
      %v4052 = vunpack.c.l.b16 %v3730
      %v4053 = vunpack.c.l.b16 %v3740
      %v4054 = vunpack.c.l.b16 %v3754
      %v4055 = vunpack.c.l.b16 %v3764
      %v4056 = vunpack.c.l.b16 %v3778
      %v4057 = vunpack.c.l.b16 %v3788
      %v4058 = vunpack.c.l.b16 %v3802
      %v4059 = vunpack.c.l.b16 %v3812
      %v4060 = vunpack.c.l.b16 %v3826
      %v4061 = vunpack.c.l.b16 %v3836
      %v4062 = vunpack.c.l.b16 %v3850
      %v4063 = vunpack.c.l.b16 %v3860
      %v4064 = vunpack.c.l.b16 %v3874
      %v4065 = vunpack.c.l.b16 %v3884
      %v4066 = vunpack.c.l.b16 %v3898
      %v4067 = vunpack.c.l.b16 %v3908
      %v4068 = vunpack.c.l.b16 %v3922
      %v4069 = vunpack.c.l.b16 %v3932
      %v4070 = vunpack.c.l.b16 %v3946
      %v4071 = vunpack.c.l.b16 %v3956
      %v4072 = vunpack.c.l.b16 %v3970
      %v4073 = vunpack.c.l.b16 %v3980
      %v4074 = vunpack.c.l.b16 %v3994
      %v4075 = vunpack.c.l.b16 %v4004
      %v4076 = vunpack.c.l.b16 %v4018
      %v4077 = vunpack.c.l.b16 %v4028
      %v4078 = vpack.c.b16 %v4047, %v4046
      %v4079 = vpack.c.b16 %v4049, %v4048
      %v4080 = vpack.c.b16 %v4051, %v4050
      %v4081 = vpack.c.b16 %v4053, %v4052
      %v4082 = vpack.c.b16 %v4055, %v4054
      %v4083 = vpack.c.b16 %v4057, %v4056
      %v4084 = vpack.c.b16 %v4059, %v4058
      %v4085 = vpack.c.b16 %v4061, %v4060
      %v4086 = vpack.c.b16 %v4063, %v4062
      %v4087 = vpack.c.b16 %v4065, %v4064
      %v4088 = vpack.c.b16 %v4067, %v4066
      %v4089 = vpack.c.b16 %v4069, %v4068
      %v4090 = vpack.c.b16 %v4071, %v4070
      %v4091 = vpack.c.b16 %v4073, %v4072
      %v4092 = vpack.c.b16 %v4075, %v4074
      %v4093 = vpack.c.b16 %v4077, %v4076
      %v4126 = vunpack.c.l.b16 %v4030
      %v4127 = vunpack.c.l.b16 %v4031
      %v4128 = vunpack.c.l.b16 %v4032
      %v4129 = vunpack.c.l.b16 %v4033
      %v4130 = vunpack.c.l.b16 %v4034
      %v4131 = vunpack.c.l.b16 %v4035
      %v4132 = vunpack.c.l.b16 %v4036
      %v4133 = vunpack.c.l.b16 %v4037
      %v4134 = vunpack.c.l.b16 %v4038
      %v4135 = vunpack.c.l.b16 %v4039
      %v4136 = vunpack.c.l.b16 %v4040
      %v4137 = vunpack.c.l.b16 %v4041
      %v4138 = vunpack.c.l.b16 %v4042
      %v4139 = vunpack.c.l.b16 %v4043
      %v4140 = vunpack.c.l.b16 %v4044
      %v4141 = vunpack.c.l.b16 %v4045
      %v4142 = vpack.c.b16 %v4127, %v4126
      %v4143 = vpack.c.b16 %v4129, %v4128
      %v4144 = vpack.c.b16 %v4131, %v4130
      %v4145 = vpack.c.b16 %v4133, %v4132
      %v4146 = vpack.c.b16 %v4135, %v4134
      %v4147 = vpack.c.b16 %v4137, %v4136
      %v4148 = vpack.c.b16 %v4139, %v4138
      %v4149 = vpack.c.b16 %v4141, %v4140
      %4158 = vmatprep.subr.bf16.mxu0 0
      %4159 = vmatpush1.bf16.msra.mxu0 %v4149
      %4160 = vmatprep.subr.bf16.mxu0 0
      %4161 = vmatpush1.bf16.msra.mxu0 %v4148
      %4162 = vmatprep.subr.bf16.mxu0 0
      %4163 = vmatpush1.bf16.msra.mxu0 %v4147
      %4164 = vmatprep.subr.bf16.mxu0 0
      %4165 = vmatpush1.bf16.msra.mxu0 %v4146
      %4166 = vmatprep.subr.bf16.mxu0 0
      %4167 = vmatpush1.bf16.msra.mxu0 %v4145
      %4168 = vmatprep.subr.bf16.mxu0 0
      %4169 = vmatpush1.bf16.msra.mxu0 %v4144
      %4170 = vmatprep.subr.bf16.mxu0 0
      %4171 = vmatpush1.bf16.msra.mxu0 %v4143
      %4172 = vmatprep.subr.bf16.mxu0 0
      %4173 = vmatpush1.bf16.msra.mxu0 %v4142
      %4174 = vmatprep.subr.bf16.mxu0 0
      %4175 = vmatpush2.bf16.msra.mxu0 0
      %4176 = vmatprep.subr.bf16.mxu0 0
      %4177 = vmatpush2.bf16.msra.mxu0 0
      %4178 = vmatprep.subr.bf16.mxu0 0
      %4179 = vmatpush2.bf16.msra.mxu0 0
      %4180 = vmatprep.subr.bf16.mxu0 0
      %4181 = vmatpush2.bf16.msra.mxu0 0
      %4182 = vmatprep.subr.bf16.mxu0 0
      %4183 = vmatpush2.bf16.msra.mxu0 0
      %4184 = vmatprep.subr.bf16.mxu0 0
      %4185 = vmatpush2.bf16.msra.mxu0 0
      %4186 = vmatprep.subr.bf16.mxu0 0
      %4187 = vmatpush2.bf16.msra.mxu0 0
      %4188 = vmatprep.subr.bf16.mxu0 0
      %4189 = vmatpush2.bf16.msra.mxu0 0
      %4190 = vmatprep.mubr.bf16.mxu0 0
      %4191 = vmatmul.mubr.bf16.gmra.mxu0 %v4078
      %v4192 = vpop.f32.mrf.mxu0
      %v4193 = vadd.f32 0.0, %v4192
      %v4194 = vpop.f32.mrf.mxu0
      %v4195 = vpop.f32.mrf.mxu0
      %v4196 = vadd.f32 0.0, %v4195
      %v4197 = vpop.f32.mrf.mxu0
      %4198 = vmatprep.mubr.bf16.mxu0 0
      %4199 = vmatmul.mubr.bf16.gmra.mxu0 %v4079
      %v4200 = vpop.f32.mrf.mxu0
      %v4201 = vadd.f32 0.0, %v4200
      %v4202 = vpop.f32.mrf.mxu0
      %v4203 = vpop.f32.mrf.mxu0
      %v4204 = vadd.f32 0.0, %v4203
      %v4205 = vpop.f32.mrf.mxu0
      %4206 = vmatprep.mubr.bf16.mxu0 0
      %4207 = vmatmul.mubr.bf16.gmra.mxu0 %v4080
      %v4208 = vpop.f32.mrf.mxu0
      %v4209 = vadd.f32 0.0, %v4208
      %v4210 = vpop.f32.mrf.mxu0
      %v4211 = vpop.f32.mrf.mxu0
      %v4212 = vadd.f32 0.0, %v4211
      %v4213 = vpop.f32.mrf.mxu0
      %4214 = vmatprep.mubr.bf16.mxu0 0
      %4215 = vmatmul.mubr.bf16.gmra.mxu0 %v4081
      %v4216 = vpop.f32.mrf.mxu0
      %v4217 = vadd.f32 0.0, %v4216
      %v4218 = vpop.f32.mrf.mxu0
      %v4219 = vpop.f32.mrf.mxu0
      %v4220 = vadd.f32 0.0, %v4219
      %v4221 = vpop.f32.mrf.mxu0
      %4222 = vmatprep.mubr.bf16.mxu0 0
      %4223 = vmatmul.mubr.bf16.gmra.mxu0 %v4082
      %v4224 = vpop.f32.mrf.mxu0
      %v4225 = vadd.f32 0.0, %v4224
      %v4226 = vpop.f32.mrf.mxu0
      %v4227 = vpop.f32.mrf.mxu0
      %v4228 = vadd.f32 0.0, %v4227
      %v4229 = vpop.f32.mrf.mxu0
      %4230 = vmatprep.mubr.bf16.mxu0 0
      %4231 = vmatmul.mubr.bf16.gmra.mxu0 %v4083
      %v4232 = vpop.f32.mrf.mxu0
      %v4233 = vadd.f32 0.0, %v4232
      %v4234 = vpop.f32.mrf.mxu0
      %v4235 = vpop.f32.mrf.mxu0
      %v4236 = vadd.f32 0.0, %v4235
      %v4237 = vpop.f32.mrf.mxu0
      %4238 = vmatprep.mubr.bf16.mxu0 0
      %4239 = vmatmul.mubr.bf16.gmra.mxu0 %v4084
      %v4240 = vpop.f32.mrf.mxu0
      %v4241 = vadd.f32 0.0, %v4240
      %v4242 = vpop.f32.mrf.mxu0
      %v4243 = vpop.f32.mrf.mxu0
      %v4244 = vadd.f32 0.0, %v4243
      %v4245 = vpop.f32.mrf.mxu0
      %4246 = vmatprep.mubr.bf16.mxu0 0
      %4247 = vmatmul.mubr.bf16.gmra.mxu0 %v4085
      %v4248 = vpop.f32.mrf.mxu0
      %v4249 = vadd.f32 0.0, %v4248
      %v4250 = vpop.f32.mrf.mxu0
      %v4251 = vpop.f32.mrf.mxu0
      %v4252 = vadd.f32 0.0, %v4251
      %v4253 = vpop.f32.mrf.mxu0
      %4254 = vmatprep.mubr.bf16.mxu0 0
      %4255 = vmatmul.mubr.bf16.gmra.mxu0 %v4086
      %v4256 = vpop.f32.mrf.mxu0
      %v4257 = vadd.f32 0.0, %v4256
      %v4258 = vpop.f32.mrf.mxu0
      %v4259 = vpop.f32.mrf.mxu0
      %v4260 = vadd.f32 0.0, %v4259
      %v4261 = vpop.f32.mrf.mxu0
      %4262 = vmatprep.mubr.bf16.mxu0 0
      %4263 = vmatmul.mubr.bf16.gmra.mxu0 %v4087
      %v4264 = vpop.f32.mrf.mxu0
      %v4265 = vadd.f32 0.0, %v4264
      %v4266 = vpop.f32.mrf.mxu0
      %v4267 = vpop.f32.mrf.mxu0
      %v4268 = vadd.f32 0.0, %v4267
      %v4269 = vpop.f32.mrf.mxu0
      %4270 = vmatprep.mubr.bf16.mxu0 0
      %4271 = vmatmul.mubr.bf16.gmra.mxu0 %v4088
      %v4272 = vpop.f32.mrf.mxu0
      %v4273 = vadd.f32 0.0, %v4272
      %v4274 = vpop.f32.mrf.mxu0
      %v4275 = vpop.f32.mrf.mxu0
      %v4276 = vadd.f32 0.0, %v4275
      %v4277 = vpop.f32.mrf.mxu0
      %4278 = vmatprep.mubr.bf16.mxu0 0
      %4279 = vmatmul.mubr.bf16.gmra.mxu0 %v4089
      %v4280 = vpop.f32.mrf.mxu0
      %v4281 = vadd.f32 0.0, %v4280
      %v4282 = vpop.f32.mrf.mxu0
      %v4283 = vpop.f32.mrf.mxu0
      %v4284 = vadd.f32 0.0, %v4283
      %v4285 = vpop.f32.mrf.mxu0
      %4286 = vmatprep.mubr.bf16.mxu0 0
      %4287 = vmatmul.mubr.bf16.gmra.mxu0 %v4090
      %v4288 = vpop.f32.mrf.mxu0
      %v4289 = vadd.f32 0.0, %v4288
      %v4290 = vpop.f32.mrf.mxu0
      %v4291 = vpop.f32.mrf.mxu0
      %v4292 = vadd.f32 0.0, %v4291
      %v4293 = vpop.f32.mrf.mxu0
      %4294 = vmatprep.mubr.bf16.mxu0 0
      %4295 = vmatmul.mubr.bf16.gmra.mxu0 %v4091
      %v4296 = vpop.f32.mrf.mxu0
      %v4297 = vadd.f32 0.0, %v4296
      %v4298 = vpop.f32.mrf.mxu0
      %v4299 = vpop.f32.mrf.mxu0
      %v4300 = vadd.f32 0.0, %v4299
      %v4301 = vpop.f32.mrf.mxu0
      %4302 = vmatprep.mubr.bf16.mxu0 0
      %4303 = vmatmul.mubr.bf16.gmra.mxu0 %v4092
      %v4304 = vpop.f32.mrf.mxu0
      %v4305 = vadd.f32 0.0, %v4304
      %v4306 = vpop.f32.mrf.mxu0
      %v4307 = vpop.f32.mrf.mxu0
      %v4308 = vadd.f32 0.0, %v4307
      %v4309 = vpop.f32.mrf.mxu0
      %4310 = vmatprep.mubr.bf16.mxu0 0
      %4311 = vmatmul.mubr.bf16.gmra.mxu0 %v4093
      %v4312 = vpop.f32.mrf.mxu0
      %v4313 = vadd.f32 0.0, %v4312
      %v4314 = vpop.f32.mrf.mxu0
      %v4315 = vpop.f32.mrf.mxu0
      %v4316 = vadd.f32 0.0, %v4315
      %v4317 = vpop.f32.mrf.mxu0
      %4318 = vdwg.mxu0
      %v4319 = vadd.f32 %v3565, %v4193
      %v4320 = vadd.f32 %v3566, %v4196
      %v4321 = vadd.f32 %v3567, %v4201
      %v4322 = vadd.f32 %v3568, %v4204
      %v4323 = vadd.f32 %v3569, %v4209
      %v4324 = vadd.f32 %v3570, %v4212
      %v4325 = vadd.f32 %v3571, %v4217
      %v4326 = vadd.f32 %v3572, %v4220
      %v4327 = vadd.f32 %v3573, %v4225
      %v4328 = vadd.f32 %v3574, %v4228
      %v4329 = vadd.f32 %v3575, %v4233
      %v4330 = vadd.f32 %v3576, %v4236
      %v4331 = vadd.f32 %v3577, %v4241
      %v4332 = vadd.f32 %v3578, %v4244
      %v4333 = vadd.f32 %v3579, %v4249
      %v4334 = vadd.f32 %v3580, %v4252
      %v4335 = vadd.f32 %v3581, %v4257
      %v4336 = vadd.f32 %v3582, %v4260
      %v4337 = vadd.f32 %v3583, %v4265
      %v4338 = vadd.f32 %v3584, %v4268
      %v4339 = vadd.f32 %v3585, %v4273
      %v4340 = vadd.f32 %v3586, %v4276
      %v4341 = vadd.f32 %v3587, %v4281
      %v4342 = vadd.f32 %v3588, %v4284
      %v4343 = vadd.f32 %v3589, %v4289
      %v4344 = vadd.f32 %v3590, %v4292
      %v4345 = vadd.f32 %v3591, %v4297
      %v4346 = vadd.f32 %v3592, %v4300
      %v4347 = vadd.f32 %v3593, %v4305
      %v4348 = vadd.f32 %v3594, %v4308
      %v4349 = vadd.f32 %v3595, %v4313
      %v4350 = vadd.f32 %v3596, %v4316
      %v4351 = vld [vmem:[%s3210] sm:$0xe]
      %v4352 = vld [vmem:[%s3210 + $0xc] sm:$0xe]
      %v4353 = vld [vmem:[%s3210 + $0x18] sm:$0xe]
      %v4354 = vld [vmem:[%s3210 + $0x24] sm:$0xe]
      %v4355 = vld [vmem:[%s3210 + $0x30] sm:$0xe]
      %v4356 = vld [vmem:[%s3210 + $0x3c] sm:$0xe]
      %v4357 = vld [vmem:[%s3210 + $0x48] sm:$0xe]
      %v4358 = vld [vmem:[%s3210 + $0x54] sm:$0xe]
      %v4359 = vld [vmem:[%s3210 + $0x60] sm:$0xe]
      %v4360 = vld [vmem:[%s3210 + $0x6c] sm:$0xe]
      %v4361 = vld [vmem:[%s3210 + $0x78] sm:$0xe]
      %v4362 = vld [vmem:[%s3210 + $0x84] sm:$0xe]
      %v4363 = vld [vmem:[%s3210 + $0x90] sm:$0xe]
      %v4364 = vld [vmem:[%s3210 + $0x9c] sm:$0xe]
      %v4365 = vld [vmem:[%s3210 + $0xa8] sm:$0xe]
      %v4366 = vld [vmem:[%s3210 + $0xb4] sm:$0xe]
      %v4415 = vrot.slane %v4351, 5
      %v4416 = vrot.slane %v4415, 4
      %v4417 = vrot.slane %v3598, 5
      %v4418 = vsel %vm2775, %v4416, %v4417
      %v4419 = vrot.slane %v4417, 4
      %v4420 = vrot.slane %v3599, 5
      %v4421 = vsel %vm2775, %v4419, %v4420
      %v4422 = vrot.slane %v4352, 5
      %v4423 = vrot.slane %v4422, 4
      %v4424 = vrot.slane %v3601, 5
      %v4425 = vsel %vm2775, %v4423, %v4424
      %v4426 = vrot.slane %v4424, 4
      %v4427 = vrot.slane %v3602, 5
      %v4428 = vsel %vm2775, %v4426, %v4427
      %v4429 = vrot.slane %v4353, 5
      %v4430 = vrot.slane %v4429, 4
      %v4431 = vrot.slane %v3604, 5
      %v4432 = vsel %vm2775, %v4430, %v4431
      %v4433 = vrot.slane %v4431, 4
      %v4434 = vrot.slane %v3605, 5
      %v4435 = vsel %vm2775, %v4433, %v4434
      %v4436 = vrot.slane %v4354, 5
      %v4437 = vrot.slane %v4436, 4
      %v4438 = vrot.slane %v3607, 5
      %v4439 = vsel %vm2775, %v4437, %v4438
      %v4440 = vrot.slane %v4438, 4
      %v4441 = vrot.slane %v3608, 5
      %v4442 = vsel %vm2775, %v4440, %v4441
      %v4443 = vrot.slane %v4355, 5
      %v4444 = vrot.slane %v4443, 4
      %v4445 = vrot.slane %v3610, 5
      %v4446 = vsel %vm2775, %v4444, %v4445
      %v4447 = vrot.slane %v4445, 4
      %v4448 = vrot.slane %v3611, 5
      %v4449 = vsel %vm2775, %v4447, %v4448
      %v4450 = vrot.slane %v4356, 5
      %v4451 = vrot.slane %v4450, 4
      %v4452 = vrot.slane %v3613, 5
      %v4453 = vsel %vm2775, %v4451, %v4452
      %v4454 = vrot.slane %v4452, 4
      %v4455 = vrot.slane %v3614, 5
      %v4456 = vsel %vm2775, %v4454, %v4455
      %v4457 = vrot.slane %v4357, 5
      %v4458 = vrot.slane %v4457, 4
      %v4459 = vrot.slane %v3616, 5
      %v4460 = vsel %vm2775, %v4458, %v4459
      %v4461 = vrot.slane %v4459, 4
      %v4462 = vrot.slane %v3617, 5
      %v4463 = vsel %vm2775, %v4461, %v4462
      %v4464 = vrot.slane %v4358, 5
      %v4465 = vrot.slane %v4464, 4
      %v4466 = vrot.slane %v3619, 5
      %v4467 = vsel %vm2775, %v4465, %v4466
      %v4468 = vrot.slane %v4466, 4
      %v4469 = vrot.slane %v3620, 5
      %v4470 = vsel %vm2775, %v4468, %v4469
      %v4471 = vrot.slane %v4359, 5
      %v4472 = vrot.slane %v4471, 4
      %v4473 = vrot.slane %v3622, 5
      %v4474 = vsel %vm2775, %v4472, %v4473
      %v4475 = vrot.slane %v4473, 4
      %v4476 = vrot.slane %v3623, 5
      %v4477 = vsel %vm2775, %v4475, %v4476
      %v4478 = vrot.slane %v4360, 5
      %v4479 = vrot.slane %v4478, 4
      %v4480 = vrot.slane %v3625, 5
      %v4481 = vsel %vm2775, %v4479, %v4480
      %v4482 = vrot.slane %v4480, 4
      %v4483 = vrot.slane %v3626, 5
      %v4484 = vsel %vm2775, %v4482, %v4483
      %v4485 = vrot.slane %v4361, 5
      %v4486 = vrot.slane %v4485, 4
      %v4487 = vrot.slane %v3628, 5
      %v4488 = vsel %vm2775, %v4486, %v4487
      %v4489 = vrot.slane %v4487, 4
      %v4490 = vrot.slane %v3629, 5
      %v4491 = vsel %vm2775, %v4489, %v4490
      %v4492 = vrot.slane %v4362, 5
      %v4493 = vrot.slane %v4492, 4
      %v4494 = vrot.slane %v3631, 5
      %v4495 = vsel %vm2775, %v4493, %v4494
      %v4496 = vrot.slane %v4494, 4
      %v4497 = vrot.slane %v3632, 5
      %v4498 = vsel %vm2775, %v4496, %v4497
      %v4499 = vrot.slane %v4363, 5
      %v4500 = vrot.slane %v4499, 4
      %v4501 = vrot.slane %v3634, 5
      %v4502 = vsel %vm2775, %v4500, %v4501
      %v4503 = vrot.slane %v4501, 4
      %v4504 = vrot.slane %v3635, 5
      %v4505 = vsel %vm2775, %v4503, %v4504
      %v4506 = vrot.slane %v4364, 5
      %v4507 = vrot.slane %v4506, 4
      %v4508 = vrot.slane %v3637, 5
      %v4509 = vsel %vm2775, %v4507, %v4508
      %v4510 = vrot.slane %v4508, 4
      %v4511 = vrot.slane %v3638, 5
      %v4512 = vsel %vm2775, %v4510, %v4511
      %v4513 = vrot.slane %v4365, 5
      %v4514 = vrot.slane %v4513, 4
      %v4515 = vrot.slane %v3640, 5
      %v4516 = vsel %vm2775, %v4514, %v4515
      %v4517 = vrot.slane %v4515, 4
      %v4518 = vrot.slane %v3641, 5
      %v4519 = vsel %vm2775, %v4517, %v4518
      %v4520 = vrot.slane %v4366, 5
      %v4521 = vrot.slane %v4520, 4
      %v4522 = vrot.slane %v3643, 5
      %v4523 = vsel %vm2775, %v4521, %v4522
      %v4524 = vrot.slane %v4522, 4
      %v4525 = vrot.slane %v3644, 5
      %v4526 = vsel %vm2775, %v4524, %v4525
      %s4527 = scalar_lea.vmem %s4, 320
      %v4528 = vld [vmem:[%s4527] sm:$0xf]
      %v4529 = vld [vmem:[%s4527 + $0x4] sm:$0xf]
      %v4530 = vld [vmem:[%s4527 + $0x8] sm:$0xf]
      %v4531 = vld [vmem:[%s4527 + $0xc] sm:$0xf]
      %v4532 = vld [vmem:[%s4527 + $0x10] sm:$0xf]
      %v4533 = vld [vmem:[%s4527 + $0x14] sm:$0xf]
      %v4534 = vld [vmem:[%s4527 + $0x18] sm:$0xf]
      %v4535 = vld [vmem:[%s4527 + $0x1c] sm:$0xf]
      %v4536 = vld [vmem:[%s4527 + $0x20] sm:$0xf]
      %v4537 = vld [vmem:[%s4527 + $0x24] sm:$0xf]
      %v4538 = vld [vmem:[%s4527 + $0x28] sm:$0xf]
      %v4539 = vld [vmem:[%s4527 + $0x2c] sm:$0xf]
      %v4540 = vld [vmem:[%s4527 + $0x30] sm:$0xf]
      %v4541 = vld [vmem:[%s4527 + $0x34] sm:$0xf]
      %v4542 = vld [vmem:[%s4527 + $0x38] sm:$0xf]
      %v4543 = vld [vmem:[%s4527 + $0x3c] sm:$0xf]
      %v4544 = vunpack.c.l.b16 %v4418
      %v4545 = vunpack.c.l.b16 %v4421
      %v4546 = vunpack.c.l.b16 %v4425
      %v4547 = vunpack.c.l.b16 %v4428
      %v4548 = vunpack.c.l.b16 %v4432
      %v4549 = vunpack.c.l.b16 %v4435
      %v4550 = vunpack.c.l.b16 %v4439
      %v4551 = vunpack.c.l.b16 %v4442
      %v4552 = vunpack.c.l.b16 %v4446
      %v4553 = vunpack.c.l.b16 %v4449
      %v4554 = vunpack.c.l.b16 %v4453
      %v4555 = vunpack.c.l.b16 %v4456
      %v4556 = vunpack.c.l.b16 %v4460
      %v4557 = vunpack.c.l.b16 %v4463
      %v4558 = vunpack.c.l.b16 %v4467
      %v4559 = vunpack.c.l.b16 %v4470
      %v4560 = vunpack.c.l.b16 %v4474
      %v4561 = vunpack.c.l.b16 %v4477
      %v4562 = vunpack.c.l.b16 %v4481
      %v4563 = vunpack.c.l.b16 %v4484
      %v4564 = vunpack.c.l.b16 %v4488
      %v4565 = vunpack.c.l.b16 %v4491
      %v4566 = vunpack.c.l.b16 %v4495
      %v4567 = vunpack.c.l.b16 %v4498
      %v4568 = vunpack.c.l.b16 %v4502
      %v4569 = vunpack.c.l.b16 %v4505
      %v4570 = vunpack.c.l.b16 %v4509
      %v4571 = vunpack.c.l.b16 %v4512
      %v4572 = vunpack.c.l.b16 %v4516
      %v4573 = vunpack.c.l.b16 %v4519
      %v4574 = vunpack.c.l.b16 %v4523
      %v4575 = vunpack.c.l.b16 %v4526
      %v4576 = vpack.c.b16 %v4545, %v4544
      %v4577 = vpack.c.b16 %v4547, %v4546
      %v4578 = vpack.c.b16 %v4549, %v4548
      %v4579 = vpack.c.b16 %v4551, %v4550
      %v4580 = vpack.c.b16 %v4553, %v4552
      %v4581 = vpack.c.b16 %v4555, %v4554
      %v4582 = vpack.c.b16 %v4557, %v4556
      %v4583 = vpack.c.b16 %v4559, %v4558
      %v4584 = vpack.c.b16 %v4561, %v4560
      %v4585 = vpack.c.b16 %v4563, %v4562
      %v4586 = vpack.c.b16 %v4565, %v4564
      %v4587 = vpack.c.b16 %v4567, %v4566
      %v4588 = vpack.c.b16 %v4569, %v4568
      %v4589 = vpack.c.b16 %v4571, %v4570
      %v4590 = vpack.c.b16 %v4573, %v4572
      %v4591 = vpack.c.b16 %v4575, %v4574
      %v4624 = vunpack.c.l.b16 %v4528
      %v4625 = vunpack.c.l.b16 %v4529
      %v4626 = vunpack.c.l.b16 %v4530
      %v4627 = vunpack.c.l.b16 %v4531
      %v4628 = vunpack.c.l.b16 %v4532
      %v4629 = vunpack.c.l.b16 %v4533
      %v4630 = vunpack.c.l.b16 %v4534
      %v4631 = vunpack.c.l.b16 %v4535
      %v4632 = vunpack.c.l.b16 %v4536
      %v4633 = vunpack.c.l.b16 %v4537
      %v4634 = vunpack.c.l.b16 %v4538
      %v4635 = vunpack.c.l.b16 %v4539
      %v4636 = vunpack.c.l.b16 %v4540
      %v4637 = vunpack.c.l.b16 %v4541
      %v4638 = vunpack.c.l.b16 %v4542
      %v4639 = vunpack.c.l.b16 %v4543
      %v4640 = vpack.c.b16 %v4625, %v4624
      %v4641 = vpack.c.b16 %v4627, %v4626
      %v4642 = vpack.c.b16 %v4629, %v4628
      %v4643 = vpack.c.b16 %v4631, %v4630
      %v4644 = vpack.c.b16 %v4633, %v4632
      %v4645 = vpack.c.b16 %v4635, %v4634
      %v4646 = vpack.c.b16 %v4637, %v4636
      %v4647 = vpack.c.b16 %v4639, %v4638
      %4656 = vmatprep.subr.bf16.mxu0 0
      %4657 = vmatpush1.bf16.msra.mxu0 %v4647
      %4658 = vmatprep.subr.bf16.mxu0 0
      %4659 = vmatpush1.bf16.msra.mxu0 %v4646
      %4660 = vmatprep.subr.bf16.mxu0 0
      %4661 = vmatpush1.bf16.msra.mxu0 %v4645
      %4662 = vmatprep.subr.bf16.mxu0 0
      %4663 = vmatpush1.bf16.msra.mxu0 %v4644
      %4664 = vmatprep.subr.bf16.mxu0 0
      %4665 = vmatpush1.bf16.msra.mxu0 %v4643
      %4666 = vmatprep.subr.bf16.mxu0 0
      %4667 = vmatpush1.bf16.msra.mxu0 %v4642
      %4668 = vmatprep.subr.bf16.mxu0 0
      %4669 = vmatpush1.bf16.msra.mxu0 %v4641
      %4670 = vmatprep.subr.bf16.mxu0 0
      %4671 = vmatpush1.bf16.msra.mxu0 %v4640
      %4672 = vmatprep.subr.bf16.mxu0 0
      %4673 = vmatpush2.bf16.msra.mxu0 0
      %4674 = vmatprep.subr.bf16.mxu0 0
      %4675 = vmatpush2.bf16.msra.mxu0 0
      %4676 = vmatprep.subr.bf16.mxu0 0
      %4677 = vmatpush2.bf16.msra.mxu0 0
      %4678 = vmatprep.subr.bf16.mxu0 0
      %4679 = vmatpush2.bf16.msra.mxu0 0
      %4680 = vmatprep.subr.bf16.mxu0 0
      %4681 = vmatpush2.bf16.msra.mxu0 0
      %4682 = vmatprep.subr.bf16.mxu0 0
      %4683 = vmatpush2.bf16.msra.mxu0 0
      %4684 = vmatprep.subr.bf16.mxu0 0
      %4685 = vmatpush2.bf16.msra.mxu0 0
      %4686 = vmatprep.subr.bf16.mxu0 0
      %4687 = vmatpush2.bf16.msra.mxu0 0
      %4688 = vmatprep.mubr.bf16.mxu0 0
      %4689 = vmatmul.mubr.bf16.gmra.mxu0 %v4576
      %v4690 = vpop.f32.mrf.mxu0
      %v4691 = vadd.f32 0.0, %v4690
      %v4692 = vpop.f32.mrf.mxu0
      %v4693 = vpop.f32.mrf.mxu0
      %v4694 = vadd.f32 0.0, %v4693
      %v4695 = vpop.f32.mrf.mxu0
      %4696 = vmatprep.mubr.bf16.mxu0 0
      %4697 = vmatmul.mubr.bf16.gmra.mxu0 %v4577
      %v4698 = vpop.f32.mrf.mxu0
      %v4699 = vadd.f32 0.0, %v4698
      %v4700 = vpop.f32.mrf.mxu0
      %v4701 = vpop.f32.mrf.mxu0
      %v4702 = vadd.f32 0.0, %v4701
      %v4703 = vpop.f32.mrf.mxu0
      %4704 = vmatprep.mubr.bf16.mxu0 0
      %4705 = vmatmul.mubr.bf16.gmra.mxu0 %v4578
      %v4706 = vpop.f32.mrf.mxu0
      %v4707 = vadd.f32 0.0, %v4706
      %v4708 = vpop.f32.mrf.mxu0
      %v4709 = vpop.f32.mrf.mxu0
      %v4710 = vadd.f32 0.0, %v4709
      %v4711 = vpop.f32.mrf.mxu0
      %4712 = vmatprep.mubr.bf16.mxu0 0
      %4713 = vmatmul.mubr.bf16.gmra.mxu0 %v4579
      %v4714 = vpop.f32.mrf.mxu0
      %v4715 = vadd.f32 0.0, %v4714
      %v4716 = vpop.f32.mrf.mxu0
      %v4717 = vpop.f32.mrf.mxu0
      %v4718 = vadd.f32 0.0, %v4717
      %v4719 = vpop.f32.mrf.mxu0
      %4720 = vmatprep.mubr.bf16.mxu0 0
      %4721 = vmatmul.mubr.bf16.gmra.mxu0 %v4580
      %v4722 = vpop.f32.mrf.mxu0
      %v4723 = vadd.f32 0.0, %v4722
      %v4724 = vpop.f32.mrf.mxu0
      %v4725 = vpop.f32.mrf.mxu0
      %v4726 = vadd.f32 0.0, %v4725
      %v4727 = vpop.f32.mrf.mxu0
      %4728 = vmatprep.mubr.bf16.mxu0 0
      %4729 = vmatmul.mubr.bf16.gmra.mxu0 %v4581
      %v4730 = vpop.f32.mrf.mxu0
      %v4731 = vadd.f32 0.0, %v4730
      %v4732 = vpop.f32.mrf.mxu0
      %v4733 = vpop.f32.mrf.mxu0
      %v4734 = vadd.f32 0.0, %v4733
      %v4735 = vpop.f32.mrf.mxu0
      %4736 = vmatprep.mubr.bf16.mxu0 0
      %4737 = vmatmul.mubr.bf16.gmra.mxu0 %v4582
      %v4738 = vpop.f32.mrf.mxu0
      %v4739 = vadd.f32 0.0, %v4738
      %v4740 = vpop.f32.mrf.mxu0
      %v4741 = vpop.f32.mrf.mxu0
      %v4742 = vadd.f32 0.0, %v4741
      %v4743 = vpop.f32.mrf.mxu0
      %4744 = vmatprep.mubr.bf16.mxu0 0
      %4745 = vmatmul.mubr.bf16.gmra.mxu0 %v4583
      %v4746 = vpop.f32.mrf.mxu0
      %v4747 = vadd.f32 0.0, %v4746
      %v4748 = vpop.f32.mrf.mxu0
      %v4749 = vpop.f32.mrf.mxu0
      %v4750 = vadd.f32 0.0, %v4749
      %v4751 = vpop.f32.mrf.mxu0
      %4752 = vmatprep.mubr.bf16.mxu0 0
      %4753 = vmatmul.mubr.bf16.gmra.mxu0 %v4584
      %v4754 = vpop.f32.mrf.mxu0
      %v4755 = vadd.f32 0.0, %v4754
      %v4756 = vpop.f32.mrf.mxu0
      %v4757 = vpop.f32.mrf.mxu0
      %v4758 = vadd.f32 0.0, %v4757
      %v4759 = vpop.f32.mrf.mxu0
      %4760 = vmatprep.mubr.bf16.mxu0 0
      %4761 = vmatmul.mubr.bf16.gmra.mxu0 %v4585
      %v4762 = vpop.f32.mrf.mxu0
      %v4763 = vadd.f32 0.0, %v4762
      %v4764 = vpop.f32.mrf.mxu0
      %v4765 = vpop.f32.mrf.mxu0
      %v4766 = vadd.f32 0.0, %v4765
      %v4767 = vpop.f32.mrf.mxu0
      %4768 = vmatprep.mubr.bf16.mxu0 0
      %4769 = vmatmul.mubr.bf16.gmra.mxu0 %v4586
      %v4770 = vpop.f32.mrf.mxu0
      %v4771 = vadd.f32 0.0, %v4770
      %v4772 = vpop.f32.mrf.mxu0
      %v4773 = vpop.f32.mrf.mxu0
      %v4774 = vadd.f32 0.0, %v4773
      %v4775 = vpop.f32.mrf.mxu0
      %4776 = vmatprep.mubr.bf16.mxu0 0
      %4777 = vmatmul.mubr.bf16.gmra.mxu0 %v4587
      %v4778 = vpop.f32.mrf.mxu0
      %v4779 = vadd.f32 0.0, %v4778
      %v4780 = vpop.f32.mrf.mxu0
      %v4781 = vpop.f32.mrf.mxu0
      %v4782 = vadd.f32 0.0, %v4781
      %v4783 = vpop.f32.mrf.mxu0
      %4784 = vmatprep.mubr.bf16.mxu0 0
      %4785 = vmatmul.mubr.bf16.gmra.mxu0 %v4588
      %v4786 = vpop.f32.mrf.mxu0
      %v4787 = vadd.f32 0.0, %v4786
      %v4788 = vpop.f32.mrf.mxu0
      %v4789 = vpop.f32.mrf.mxu0
      %v4790 = vadd.f32 0.0, %v4789
      %v4791 = vpop.f32.mrf.mxu0
      %4792 = vmatprep.mubr.bf16.mxu0 0
      %4793 = vmatmul.mubr.bf16.gmra.mxu0 %v4589
      %v4794 = vpop.f32.mrf.mxu0
      %v4795 = vadd.f32 0.0, %v4794
      %v4796 = vpop.f32.mrf.mxu0
      %v4797 = vpop.f32.mrf.mxu0
      %v4798 = vadd.f32 0.0, %v4797
      %v4799 = vpop.f32.mrf.mxu0
      %4800 = vmatprep.mubr.bf16.mxu0 0
      %4801 = vmatmul.mubr.bf16.gmra.mxu0 %v4590
      %v4802 = vpop.f32.mrf.mxu0
      %v4803 = vadd.f32 0.0, %v4802
      %v4804 = vpop.f32.mrf.mxu0
      %v4805 = vpop.f32.mrf.mxu0
      %v4806 = vadd.f32 0.0, %v4805
      %v4807 = vpop.f32.mrf.mxu0
      %4808 = vmatprep.mubr.bf16.mxu0 0
      %4809 = vmatmul.mubr.bf16.gmra.mxu0 %v4591
      %v4810 = vpop.f32.mrf.mxu0
      %v4811 = vadd.f32 0.0, %v4810
      %v4812 = vpop.f32.mrf.mxu0
      %v4813 = vpop.f32.mrf.mxu0
      %v4814 = vadd.f32 0.0, %v4813
      %v4815 = vpop.f32.mrf.mxu0
      %4816 = vdwg.mxu0
      %v4817 = vadd.f32 %v4319, %v4691
      %v4818 = vadd.f32 %v4320, %v4694
      %v4819 = vadd.f32 %v4321, %v4699
      %v4820 = vadd.f32 %v4322, %v4702
      %v4821 = vadd.f32 %v4323, %v4707
      %v4822 = vadd.f32 %v4324, %v4710
      %v4823 = vadd.f32 %v4325, %v4715
      %v4824 = vadd.f32 %v4326, %v4718
      %v4825 = vadd.f32 %v4327, %v4723
      %v4826 = vadd.f32 %v4328, %v4726
      %v4827 = vadd.f32 %v4329, %v4731
      %v4828 = vadd.f32 %v4330, %v4734
      %v4829 = vadd.f32 %v4331, %v4739
      %v4830 = vadd.f32 %v4332, %v4742
      %v4831 = vadd.f32 %v4333, %v4747
      %v4832 = vadd.f32 %v4334, %v4750
      %v4833 = vadd.f32 %v4335, %v4755
      %v4834 = vadd.f32 %v4336, %v4758
      %v4835 = vadd.f32 %v4337, %v4763
      %v4836 = vadd.f32 %v4338, %v4766
      %v4837 = vadd.f32 %v4339, %v4771
      %v4838 = vadd.f32 %v4340, %v4774
      %v4839 = vadd.f32 %v4341, %v4779
      %v4840 = vadd.f32 %v4342, %v4782
      %v4841 = vadd.f32 %v4343, %v4787
      %v4842 = vadd.f32 %v4344, %v4790
      %v4843 = vadd.f32 %v4345, %v4795
      %v4844 = vadd.f32 %v4346, %v4798
      %v4845 = vadd.f32 %v4347, %v4803
      %v4846 = vadd.f32 %v4348, %v4806
      %v4847 = vadd.f32 %v4349, %v4811
      %v4848 = vadd.f32 %v4350, %v4814
      %s4849 = scalar_lea.vmem [#allocation2], 24
      %v4850 = vld [vmem:[%s4849] sm:$0xf]
      %v4851 = vld [vmem:[%s4849 + $0x4] sm:$0xf]
      %v4852 = vld [vmem:[%s4849 + $0xc] sm:$0xf]
      %v4853 = vld [vmem:[%s4849 + $0x10] sm:$0xf]
      %v4854 = vld [vmem:[%s4849 + $0x18] sm:$0xf]
      %v4855 = vld [vmem:[%s4849 + $0x1c] sm:$0xf]
      %v4856 = vld [vmem:[%s4849 + $0x24] sm:$0xf]
      %v4857 = vld [vmem:[%s4849 + $0x28] sm:$0xf]
      %v4858 = vld [vmem:[%s4849 + $0x30] sm:$0xf]
      %v4859 = vld [vmem:[%s4849 + $0x34] sm:$0xf]
      %v4860 = vld [vmem:[%s4849 + $0x3c] sm:$0xf]
      %v4861 = vld [vmem:[%s4849 + $0x40] sm:$0xf]
      %v4862 = vld [vmem:[%s4849 + $0x48] sm:$0xf]
      %v4863 = vld [vmem:[%s4849 + $0x4c] sm:$0xf]
      %v4864 = vld [vmem:[%s4849 + $0x54] sm:$0xf]
      %v4865 = vld [vmem:[%s4849 + $0x58] sm:$0xf]
      %v4866 = vld [vmem:[%s4849 + $0x60] sm:$0xf]
      %v4867 = vld [vmem:[%s4849 + $0x64] sm:$0xf]
      %v4868 = vld [vmem:[%s4849 + $0x6c] sm:$0xf]
      %v4869 = vld [vmem:[%s4849 + $0x70] sm:$0xf]
      %v4870 = vld [vmem:[%s4849 + $0x78] sm:$0xf]
      %v4871 = vld [vmem:[%s4849 + $0x7c] sm:$0xf]
      %v4872 = vld [vmem:[%s4849 + $0x84] sm:$0xf]
      %v4873 = vld [vmem:[%s4849 + $0x88] sm:$0xf]
      %v4874 = vld [vmem:[%s4849 + $0x90] sm:$0xf]
      %v4875 = vld [vmem:[%s4849 + $0x94] sm:$0xf]
      %v4876 = vld [vmem:[%s4849 + $0x9c] sm:$0xf]
      %v4877 = vld [vmem:[%s4849 + $0xa0] sm:$0xf]
      %v4878 = vld [vmem:[%s4849 + $0xa8] sm:$0xf]
      %v4879 = vld [vmem:[%s4849 + $0xac] sm:$0xf]
      %v4880 = vld [vmem:[%s4849 + $0xb4] sm:$0xf]
      %v4881 = vld [vmem:[%s4849 + $0xb8] sm:$0xf]
      %s4882 = scalar_lea.vmem %s4, 384
      %v4883 = vld [vmem:[%s4882] sm:$0xf]
      %v4884 = vld [vmem:[%s4882 + $0x4] sm:$0xf]
      %v4885 = vld [vmem:[%s4882 + $0x8] sm:$0xf]
      %v4886 = vld [vmem:[%s4882 + $0xc] sm:$0xf]
      %v4887 = vld [vmem:[%s4882 + $0x10] sm:$0xf]
      %v4888 = vld [vmem:[%s4882 + $0x14] sm:$0xf]
      %v4889 = vld [vmem:[%s4882 + $0x18] sm:$0xf]
      %v4890 = vld [vmem:[%s4882 + $0x1c] sm:$0xf]
      %v4891 = vld [vmem:[%s4882 + $0x20] sm:$0xf]
      %v4892 = vld [vmem:[%s4882 + $0x24] sm:$0xf]
      %v4893 = vld [vmem:[%s4882 + $0x28] sm:$0xf]
      %v4894 = vld [vmem:[%s4882 + $0x2c] sm:$0xf]
      %v4895 = vld [vmem:[%s4882 + $0x30] sm:$0xf]
      %v4896 = vld [vmem:[%s4882 + $0x34] sm:$0xf]
      %v4897 = vld [vmem:[%s4882 + $0x38] sm:$0xf]
      %v4898 = vld [vmem:[%s4882 + $0x3c] sm:$0xf]
      %v4931 = vunpack.c.l.b16 %v4850
      %v4932 = vunpack.c.l.b16 %v4851
      %v4933 = vunpack.c.l.b16 %v4852
      %v4934 = vunpack.c.l.b16 %v4853
      %v4935 = vunpack.c.l.b16 %v4854
      %v4936 = vunpack.c.l.b16 %v4855
      %v4937 = vunpack.c.l.b16 %v4856
      %v4938 = vunpack.c.l.b16 %v4857
      %v4939 = vunpack.c.l.b16 %v4858
      %v4940 = vunpack.c.l.b16 %v4859
      %v4941 = vunpack.c.l.b16 %v4860
      %v4942 = vunpack.c.l.b16 %v4861
      %v4943 = vunpack.c.l.b16 %v4862
      %v4944 = vunpack.c.l.b16 %v4863
      %v4945 = vunpack.c.l.b16 %v4864
      %v4946 = vunpack.c.l.b16 %v4865
      %v4947 = vunpack.c.l.b16 %v4866
      %v4948 = vunpack.c.l.b16 %v4867
      %v4949 = vunpack.c.l.b16 %v4868
      %v4950 = vunpack.c.l.b16 %v4869
      %v4951 = vunpack.c.l.b16 %v4870
      %v4952 = vunpack.c.l.b16 %v4871
      %v4953 = vunpack.c.l.b16 %v4872
      %v4954 = vunpack.c.l.b16 %v4873
      %v4955 = vunpack.c.l.b16 %v4874
      %v4956 = vunpack.c.l.b16 %v4875
      %v4957 = vunpack.c.l.b16 %v4876
      %v4958 = vunpack.c.l.b16 %v4877
      %v4959 = vunpack.c.l.b16 %v4878
      %v4960 = vunpack.c.l.b16 %v4879
      %v4961 = vunpack.c.l.b16 %v4880
      %v4962 = vunpack.c.l.b16 %v4881
      %v4963 = vpack.c.b16 %v4932, %v4931
      %v4964 = vpack.c.b16 %v4934, %v4933
      %v4965 = vpack.c.b16 %v4936, %v4935
      %v4966 = vpack.c.b16 %v4938, %v4937
      %v4967 = vpack.c.b16 %v4940, %v4939
      %v4968 = vpack.c.b16 %v4942, %v4941
      %v4969 = vpack.c.b16 %v4944, %v4943
      %v4970 = vpack.c.b16 %v4946, %v4945
      %v4971 = vpack.c.b16 %v4948, %v4947
      %v4972 = vpack.c.b16 %v4950, %v4949
      %v4973 = vpack.c.b16 %v4952, %v4951
      %v4974 = vpack.c.b16 %v4954, %v4953
      %v4975 = vpack.c.b16 %v4956, %v4955
      %v4976 = vpack.c.b16 %v4958, %v4957
      %v4977 = vpack.c.b16 %v4960, %v4959
      %v4978 = vpack.c.b16 %v4962, %v4961
      %v5011 = vunpack.c.l.b16 %v4883
      %v5012 = vunpack.c.l.b16 %v4884
      %v5013 = vunpack.c.l.b16 %v4885
      %v5014 = vunpack.c.l.b16 %v4886
      %v5015 = vunpack.c.l.b16 %v4887
      %v5016 = vunpack.c.l.b16 %v4888
      %v5017 = vunpack.c.l.b16 %v4889
      %v5018 = vunpack.c.l.b16 %v4890
      %v5019 = vunpack.c.l.b16 %v4891
      %v5020 = vunpack.c.l.b16 %v4892
      %v5021 = vunpack.c.l.b16 %v4893
      %v5022 = vunpack.c.l.b16 %v4894
      %v5023 = vunpack.c.l.b16 %v4895
      %v5024 = vunpack.c.l.b16 %v4896
      %v5025 = vunpack.c.l.b16 %v4897
      %v5026 = vunpack.c.l.b16 %v4898
      %v5027 = vpack.c.b16 %v5012, %v5011
      %v5028 = vpack.c.b16 %v5014, %v5013
      %v5029 = vpack.c.b16 %v5016, %v5015
      %v5030 = vpack.c.b16 %v5018, %v5017
      %v5031 = vpack.c.b16 %v5020, %v5019
      %v5032 = vpack.c.b16 %v5022, %v5021
      %v5033 = vpack.c.b16 %v5024, %v5023
      %v5034 = vpack.c.b16 %v5026, %v5025
      %5043 = vmatprep.subr.bf16.mxu0 0
      %5044 = vmatpush1.bf16.msra.mxu0 %v5034
      %5045 = vmatprep.subr.bf16.mxu0 0
      %5046 = vmatpush1.bf16.msra.mxu0 %v5033
      %5047 = vmatprep.subr.bf16.mxu0 0
      %5048 = vmatpush1.bf16.msra.mxu0 %v5032
      %5049 = vmatprep.subr.bf16.mxu0 0
      %5050 = vmatpush1.bf16.msra.mxu0 %v5031
      %5051 = vmatprep.subr.bf16.mxu0 0
      %5052 = vmatpush1.bf16.msra.mxu0 %v5030
      %5053 = vmatprep.subr.bf16.mxu0 0
      %5054 = vmatpush1.bf16.msra.mxu0 %v5029
      %5055 = vmatprep.subr.bf16.mxu0 0
      %5056 = vmatpush1.bf16.msra.mxu0 %v5028
      %5057 = vmatprep.subr.bf16.mxu0 0
      %5058 = vmatpush1.bf16.msra.mxu0 %v5027
      %5059 = vmatprep.subr.bf16.mxu0 0
      %5060 = vmatpush2.bf16.msra.mxu0 0
      %5061 = vmatprep.subr.bf16.mxu0 0
      %5062 = vmatpush2.bf16.msra.mxu0 0
      %5063 = vmatprep.subr.bf16.mxu0 0
      %5064 = vmatpush2.bf16.msra.mxu0 0
      %5065 = vmatprep.subr.bf16.mxu0 0
      %5066 = vmatpush2.bf16.msra.mxu0 0
      %5067 = vmatprep.subr.bf16.mxu0 0
      %5068 = vmatpush2.bf16.msra.mxu0 0
      %5069 = vmatprep.subr.bf16.mxu0 0
      %5070 = vmatpush2.bf16.msra.mxu0 0
      %5071 = vmatprep.subr.bf16.mxu0 0
      %5072 = vmatpush2.bf16.msra.mxu0 0
      %5073 = vmatprep.subr.bf16.mxu0 0
      %5074 = vmatpush2.bf16.msra.mxu0 0
      %5075 = vmatprep.mubr.bf16.mxu0 0
      %5076 = vmatmul.mubr.bf16.gmra.mxu0 %v4963
      %v5077 = vpop.f32.mrf.mxu0
      %v5078 = vadd.f32 0.0, %v5077
      %v5079 = vpop.f32.mrf.mxu0
      %v5080 = vpop.f32.mrf.mxu0
      %v5081 = vadd.f32 0.0, %v5080
      %v5082 = vpop.f32.mrf.mxu0
      %5083 = vmatprep.mubr.bf16.mxu0 0
      %5084 = vmatmul.mubr.bf16.gmra.mxu0 %v4964
      %v5085 = vpop.f32.mrf.mxu0
      %v5086 = vadd.f32 0.0, %v5085
      %v5087 = vpop.f32.mrf.mxu0
      %v5088 = vpop.f32.mrf.mxu0
      %v5089 = vadd.f32 0.0, %v5088
      %v5090 = vpop.f32.mrf.mxu0
      %5091 = vmatprep.mubr.bf16.mxu0 0
      %5092 = vmatmul.mubr.bf16.gmra.mxu0 %v4965
      %v5093 = vpop.f32.mrf.mxu0
      %v5094 = vadd.f32 0.0, %v5093
      %v5095 = vpop.f32.mrf.mxu0
      %v5096 = vpop.f32.mrf.mxu0
      %v5097 = vadd.f32 0.0, %v5096
      %v5098 = vpop.f32.mrf.mxu0
      %5099 = vmatprep.mubr.bf16.mxu0 0
      %5100 = vmatmul.mubr.bf16.gmra.mxu0 %v4966
      %v5101 = vpop.f32.mrf.mxu0
      %v5102 = vadd.f32 0.0, %v5101
      %v5103 = vpop.f32.mrf.mxu0
      %v5104 = vpop.f32.mrf.mxu0
      %v5105 = vadd.f32 0.0, %v5104
      %v5106 = vpop.f32.mrf.mxu0
      %5107 = vmatprep.mubr.bf16.mxu0 0
      %5108 = vmatmul.mubr.bf16.gmra.mxu0 %v4967
      %v5109 = vpop.f32.mrf.mxu0
      %v5110 = vadd.f32 0.0, %v5109
      %v5111 = vpop.f32.mrf.mxu0
      %v5112 = vpop.f32.mrf.mxu0
      %v5113 = vadd.f32 0.0, %v5112
      %v5114 = vpop.f32.mrf.mxu0
      %5115 = vmatprep.mubr.bf16.mxu0 0
      %5116 = vmatmul.mubr.bf16.gmra.mxu0 %v4968
      %v5117 = vpop.f32.mrf.mxu0
      %v5118 = vadd.f32 0.0, %v5117
      %v5119 = vpop.f32.mrf.mxu0
      %v5120 = vpop.f32.mrf.mxu0
      %v5121 = vadd.f32 0.0, %v5120
      %v5122 = vpop.f32.mrf.mxu0
      %5123 = vmatprep.mubr.bf16.mxu0 0
      %5124 = vmatmul.mubr.bf16.gmra.mxu0 %v4969
      %v5125 = vpop.f32.mrf.mxu0
      %v5126 = vadd.f32 0.0, %v5125
      %v5127 = vpop.f32.mrf.mxu0
      %v5128 = vpop.f32.mrf.mxu0
      %v5129 = vadd.f32 0.0, %v5128
      %v5130 = vpop.f32.mrf.mxu0
      %5131 = vmatprep.mubr.bf16.mxu0 0
      %5132 = vmatmul.mubr.bf16.gmra.mxu0 %v4970
      %v5133 = vpop.f32.mrf.mxu0
      %v5134 = vadd.f32 0.0, %v5133
      %v5135 = vpop.f32.mrf.mxu0
      %v5136 = vpop.f32.mrf.mxu0
      %v5137 = vadd.f32 0.0, %v5136
      %v5138 = vpop.f32.mrf.mxu0
      %5139 = vmatprep.mubr.bf16.mxu0 0
      %5140 = vmatmul.mubr.bf16.gmra.mxu0 %v4971
      %v5141 = vpop.f32.mrf.mxu0
      %v5142 = vadd.f32 0.0, %v5141
      %v5143 = vpop.f32.mrf.mxu0
      %v5144 = vpop.f32.mrf.mxu0
      %v5145 = vadd.f32 0.0, %v5144
      %v5146 = vpop.f32.mrf.mxu0
      %5147 = vmatprep.mubr.bf16.mxu0 0
      %5148 = vmatmul.mubr.bf16.gmra.mxu0 %v4972
      %v5149 = vpop.f32.mrf.mxu0
      %v5150 = vadd.f32 0.0, %v5149
      %v5151 = vpop.f32.mrf.mxu0
      %v5152 = vpop.f32.mrf.mxu0
      %v5153 = vadd.f32 0.0, %v5152
      %v5154 = vpop.f32.mrf.mxu0
      %5155 = vmatprep.mubr.bf16.mxu0 0
      %5156 = vmatmul.mubr.bf16.gmra.mxu0 %v4973
      %v5157 = vpop.f32.mrf.mxu0
      %v5158 = vadd.f32 0.0, %v5157
      %v5159 = vpop.f32.mrf.mxu0
      %v5160 = vpop.f32.mrf.mxu0
      %v5161 = vadd.f32 0.0, %v5160
      %v5162 = vpop.f32.mrf.mxu0
      %5163 = vmatprep.mubr.bf16.mxu0 0
      %5164 = vmatmul.mubr.bf16.gmra.mxu0 %v4974
      %v5165 = vpop.f32.mrf.mxu0
      %v5166 = vadd.f32 0.0, %v5165
      %v5167 = vpop.f32.mrf.mxu0
      %v5168 = vpop.f32.mrf.mxu0
      %v5169 = vadd.f32 0.0, %v5168
      %v5170 = vpop.f32.mrf.mxu0
      %5171 = vmatprep.mubr.bf16.mxu0 0
      %5172 = vmatmul.mubr.bf16.gmra.mxu0 %v4975
      %v5173 = vpop.f32.mrf.mxu0
      %v5174 = vadd.f32 0.0, %v5173
      %v5175 = vpop.f32.mrf.mxu0
      %v5176 = vpop.f32.mrf.mxu0
      %v5177 = vadd.f32 0.0, %v5176
      %v5178 = vpop.f32.mrf.mxu0
      %5179 = vmatprep.mubr.bf16.mxu0 0
      %5180 = vmatmul.mubr.bf16.gmra.mxu0 %v4976
      %v5181 = vpop.f32.mrf.mxu0
      %v5182 = vadd.f32 0.0, %v5181
      %v5183 = vpop.f32.mrf.mxu0
      %v5184 = vpop.f32.mrf.mxu0
      %v5185 = vadd.f32 0.0, %v5184
      %v5186 = vpop.f32.mrf.mxu0
      %5187 = vmatprep.mubr.bf16.mxu0 0
      %5188 = vmatmul.mubr.bf16.gmra.mxu0 %v4977
      %v5189 = vpop.f32.mrf.mxu0
      %v5190 = vadd.f32 0.0, %v5189
      %v5191 = vpop.f32.mrf.mxu0
      %v5192 = vpop.f32.mrf.mxu0
      %v5193 = vadd.f32 0.0, %v5192
      %v5194 = vpop.f32.mrf.mxu0
      %5195 = vmatprep.mubr.bf16.mxu0 0
      %5196 = vmatmul.mubr.bf16.gmra.mxu0 %v4978
      %v5197 = vpop.f32.mrf.mxu0
      %v5198 = vadd.f32 0.0, %v5197
      %v5199 = vpop.f32.mrf.mxu0
      %v5200 = vpop.f32.mrf.mxu0
      %v5201 = vadd.f32 0.0, %v5200
      %v5202 = vpop.f32.mrf.mxu0
      %5203 = vdwg.mxu0
      %v5204 = vadd.f32 %v4817, %v5078
      %v5205 = vadd.f32 %v4818, %v5081
      %v5206 = vadd.f32 %v4819, %v5086
      %v5207 = vadd.f32 %v4820, %v5089
      %v5208 = vadd.f32 %v4821, %v5094
      %v5209 = vadd.f32 %v4822, %v5097
      %v5210 = vadd.f32 %v4823, %v5102
      %v5211 = vadd.f32 %v4824, %v5105
      %v5212 = vadd.f32 %v4825, %v5110
      %v5213 = vadd.f32 %v4826, %v5113
      %v5214 = vadd.f32 %v4827, %v5118
      %v5215 = vadd.f32 %v4828, %v5121
      %v5216 = vadd.f32 %v4829, %v5126
      %v5217 = vadd.f32 %v4830, %v5129
      %v5218 = vadd.f32 %v4831, %v5134
      %v5219 = vadd.f32 %v4832, %v5137
      %v5220 = vadd.f32 %v4833, %v5142
      %v5221 = vadd.f32 %v4834, %v5145
      %v5222 = vadd.f32 %v4835, %v5150
      %v5223 = vadd.f32 %v4836, %v5153
      %v5224 = vadd.f32 %v4837, %v5158
      %v5225 = vadd.f32 %v4838, %v5161
      %v5226 = vadd.f32 %v4839, %v5166
      %v5227 = vadd.f32 %v4840, %v5169
      %v5228 = vadd.f32 %v4841, %v5174
      %v5229 = vadd.f32 %v4842, %v5177
      %v5230 = vadd.f32 %v4843, %v5182
      %v5231 = vadd.f32 %v4844, %v5185
      %v5232 = vadd.f32 %v4845, %v5190
      %v5233 = vadd.f32 %v4846, %v5193
      %v5234 = vadd.f32 %v4847, %v5198
      %v5235 = vadd.f32 %v4848, %v5201
      %v5236 = vld [vmem:[%s4849] sm:$0xf]
      %v5237 = vld [vmem:[%s4849 + $0x4] sm:$0xf]
      %v5238 = vld [vmem:[%s4849 + $0x8] sm:$0x1]
      %v5239 = vld [vmem:[%s4849 + $0xc] sm:$0xf]
      %v5240 = vld [vmem:[%s4849 + $0x10] sm:$0xf]
      %v5241 = vld [vmem:[%s4849 + $0x14] sm:$0x1]
      %v5242 = vld [vmem:[%s4849 + $0x18] sm:$0xf]
      %v5243 = vld [vmem:[%s4849 + $0x1c] sm:$0xf]
      %v5244 = vld [vmem:[%s4849 + $0x20] sm:$0x1]
      %v5245 = vld [vmem:[%s4849 + $0x24] sm:$0xf]
      %v5246 = vld [vmem:[%s4849 + $0x28] sm:$0xf]
      %v5247 = vld [vmem:[%s4849 + $0x2c] sm:$0x1]
      %v5248 = vld [vmem:[%s4849 + $0x30] sm:$0xf]
      %v5249 = vld [vmem:[%s4849 + $0x34] sm:$0xf]
      %v5250 = vld [vmem:[%s4849 + $0x38] sm:$0x1]
      %v5251 = vld [vmem:[%s4849 + $0x3c] sm:$0xf]
      %v5252 = vld [vmem:[%s4849 + $0x40] sm:$0xf]
      %v5253 = vld [vmem:[%s4849 + $0x44] sm:$0x1]
      %v5254 = vld [vmem:[%s4849 + $0x48] sm:$0xf]
      %v5255 = vld [vmem:[%s4849 + $0x4c] sm:$0xf]
      %v5256 = vld [vmem:[%s4849 + $0x50] sm:$0x1]
      %v5257 = vld [vmem:[%s4849 + $0x54] sm:$0xf]
      %v5258 = vld [vmem:[%s4849 + $0x58] sm:$0xf]
      %v5259 = vld [vmem:[%s4849 + $0x5c] sm:$0x1]
      %v5260 = vld [vmem:[%s4849 + $0x60] sm:$0xf]
      %v5261 = vld [vmem:[%s4849 + $0x64] sm:$0xf]
      %v5262 = vld [vmem:[%s4849 + $0x68] sm:$0x1]
      %v5263 = vld [vmem:[%s4849 + $0x6c] sm:$0xf]
      %v5264 = vld [vmem:[%s4849 + $0x70] sm:$0xf]
      %v5265 = vld [vmem:[%s4849 + $0x74] sm:$0x1]
      %v5266 = vld [vmem:[%s4849 + $0x78] sm:$0xf]
      %v5267 = vld [vmem:[%s4849 + $0x7c] sm:$0xf]
      %v5268 = vld [vmem:[%s4849 + $0x80] sm:$0x1]
      %v5269 = vld [vmem:[%s4849 + $0x84] sm:$0xf]
      %v5270 = vld [vmem:[%s4849 + $0x88] sm:$0xf]
      %v5271 = vld [vmem:[%s4849 + $0x8c] sm:$0x1]
      %v5272 = vld [vmem:[%s4849 + $0x90] sm:$0xf]
      %v5273 = vld [vmem:[%s4849 + $0x94] sm:$0xf]
      %v5274 = vld [vmem:[%s4849 + $0x98] sm:$0x1]
      %v5275 = vld [vmem:[%s4849 + $0x9c] sm:$0xf]
      %v5276 = vld [vmem:[%s4849 + $0xa0] sm:$0xf]
      %v5277 = vld [vmem:[%s4849 + $0xa4] sm:$0x1]
      %v5278 = vld [vmem:[%s4849 + $0xa8] sm:$0xf]
      %v5279 = vld [vmem:[%s4849 + $0xac] sm:$0xf]
      %v5280 = vld [vmem:[%s4849 + $0xb0] sm:$0x1]
      %v5281 = vld [vmem:[%s4849 + $0xb4] sm:$0xf]
      %v5282 = vld [vmem:[%s4849 + $0xb8] sm:$0xf]
      %v5283 = vld [vmem:[%s4849 + $0xbc] sm:$0x1]
      %v5285 = vshrl.u32 %v5236, 16
      %v5287 = vrot.slane %v5285, 4
      %v5288 = vshll.u32 %v5236, 16
      %v5290 = vrot.slane %v5288, 5
      %v5291 = vor.u32 %v5287, %v5290
      %v5292 = vrot.slane %v5291, 4
      %v5294 = vshll.u32 %v5237, 16
      %v5296 = vrot.slane %v5294, 5
      %v5297 = vsel %vm1745, %v5292, %v5296
      %v5298 = vshrl.u32 %v5237, 16
      %v5300 = vrot.slane %v5298, 4
      %v5301 = vor.u32 %v5300, %v5296
      %v5302 = vrot.slane %v5301, 4
      %v5304 = vshll.u32 %v5238, 16
      %v5306 = vrot.slane %v5304, 5
      %v5307 = vsel %vm1745, %v5302, %v5306
      %v5309 = vshrl.u32 %v5239, 16
      %v5311 = vrot.slane %v5309, 4
      %v5312 = vshll.u32 %v5239, 16
      %v5314 = vrot.slane %v5312, 5
      %v5315 = vor.u32 %v5311, %v5314
      %v5316 = vrot.slane %v5315, 4
      %v5318 = vshll.u32 %v5240, 16
      %v5320 = vrot.slane %v5318, 5
      %v5321 = vsel %vm1745, %v5316, %v5320
      %v5322 = vshrl.u32 %v5240, 16
      %v5324 = vrot.slane %v5322, 4
      %v5325 = vor.u32 %v5324, %v5320
      %v5326 = vrot.slane %v5325, 4
      %v5328 = vshll.u32 %v5241, 16
      %v5330 = vrot.slane %v5328, 5
      %v5331 = vsel %vm1745, %v5326, %v5330
      %v5333 = vshrl.u32 %v5242, 16
      %v5335 = vrot.slane %v5333, 4
      %v5336 = vshll.u32 %v5242, 16
      %v5338 = vrot.slane %v5336, 5
      %v5339 = vor.u32 %v5335, %v5338
      %v5340 = vrot.slane %v5339, 4
      %v5342 = vshll.u32 %v5243, 16
      %v5344 = vrot.slane %v5342, 5
      %v5345 = vsel %vm1745, %v5340, %v5344
      %v5346 = vshrl.u32 %v5243, 16
      %v5348 = vrot.slane %v5346, 4
      %v5349 = vor.u32 %v5348, %v5344
      %v5350 = vrot.slane %v5349, 4
      %v5352 = vshll.u32 %v5244, 16
      %v5354 = vrot.slane %v5352, 5
      %v5355 = vsel %vm1745, %v5350, %v5354
      %v5357 = vshrl.u32 %v5245, 16
      %v5359 = vrot.slane %v5357, 4
      %v5360 = vshll.u32 %v5245, 16
      %v5362 = vrot.slane %v5360, 5
      %v5363 = vor.u32 %v5359, %v5362
      %v5364 = vrot.slane %v5363, 4
      %v5366 = vshll.u32 %v5246, 16
      %v5368 = vrot.slane %v5366, 5
      %v5369 = vsel %vm1745, %v5364, %v5368
      %v5370 = vshrl.u32 %v5246, 16
      %v5372 = vrot.slane %v5370, 4
      %v5373 = vor.u32 %v5372, %v5368
      %v5374 = vrot.slane %v5373, 4
      %v5376 = vshll.u32 %v5247, 16
      %v5378 = vrot.slane %v5376, 5
      %v5379 = vsel %vm1745, %v5374, %v5378
      %v5381 = vshrl.u32 %v5248, 16
      %v5383 = vrot.slane %v5381, 4
      %v5384 = vshll.u32 %v5248, 16
      %v5386 = vrot.slane %v5384, 5
      %v5387 = vor.u32 %v5383, %v5386
      %v5388 = vrot.slane %v5387, 4
      %v5390 = vshll.u32 %v5249, 16
      %v5392 = vrot.slane %v5390, 5
      %v5393 = vsel %vm1745, %v5388, %v5392
      %v5394 = vshrl.u32 %v5249, 16
      %v5396 = vrot.slane %v5394, 4
      %v5397 = vor.u32 %v5396, %v5392
      %v5398 = vrot.slane %v5397, 4
      %v5400 = vshll.u32 %v5250, 16
      %v5402 = vrot.slane %v5400, 5
      %v5403 = vsel %vm1745, %v5398, %v5402
      %v5405 = vshrl.u32 %v5251, 16
      %v5407 = vrot.slane %v5405, 4
      %v5408 = vshll.u32 %v5251, 16
      %v5410 = vrot.slane %v5408, 5
      %v5411 = vor.u32 %v5407, %v5410
      %v5412 = vrot.slane %v5411, 4
      %v5414 = vshll.u32 %v5252, 16
      %v5416 = vrot.slane %v5414, 5
      %v5417 = vsel %vm1745, %v5412, %v5416
      %v5418 = vshrl.u32 %v5252, 16
      %v5420 = vrot.slane %v5418, 4
      %v5421 = vor.u32 %v5420, %v5416
      %v5422 = vrot.slane %v5421, 4
      %v5424 = vshll.u32 %v5253, 16
      %v5426 = vrot.slane %v5424, 5
      %v5427 = vsel %vm1745, %v5422, %v5426
      %v5429 = vshrl.u32 %v5254, 16
      %v5431 = vrot.slane %v5429, 4
      %v5432 = vshll.u32 %v5254, 16
      %v5434 = vrot.slane %v5432, 5
      %v5435 = vor.u32 %v5431, %v5434
      %v5436 = vrot.slane %v5435, 4
      %v5438 = vshll.u32 %v5255, 16
      %v5440 = vrot.slane %v5438, 5
      %v5441 = vsel %vm1745, %v5436, %v5440
      %v5442 = vshrl.u32 %v5255, 16
      %v5444 = vrot.slane %v5442, 4
      %v5445 = vor.u32 %v5444, %v5440
      %v5446 = vrot.slane %v5445, 4
      %v5448 = vshll.u32 %v5256, 16
      %v5450 = vrot.slane %v5448, 5
      %v5451 = vsel %vm1745, %v5446, %v5450
      %v5453 = vshrl.u32 %v5257, 16
      %v5455 = vrot.slane %v5453, 4
      %v5456 = vshll.u32 %v5257, 16
      %v5458 = vrot.slane %v5456, 5
      %v5459 = vor.u32 %v5455, %v5458
      %v5460 = vrot.slane %v5459, 4
      %v5462 = vshll.u32 %v5258, 16
      %v5464 = vrot.slane %v5462, 5
      %v5465 = vsel %vm1745, %v5460, %v5464
      %v5466 = vshrl.u32 %v5258, 16
      %v5468 = vrot.slane %v5466, 4
      %v5469 = vor.u32 %v5468, %v5464
      %v5470 = vrot.slane %v5469, 4
      %v5472 = vshll.u32 %v5259, 16
      %v5474 = vrot.slane %v5472, 5
      %v5475 = vsel %vm1745, %v5470, %v5474
      %v5477 = vshrl.u32 %v5260, 16
      %v5479 = vrot.slane %v5477, 4
      %v5480 = vshll.u32 %v5260, 16
      %v5482 = vrot.slane %v5480, 5
      %v5483 = vor.u32 %v5479, %v5482
      %v5484 = vrot.slane %v5483, 4
      %v5486 = vshll.u32 %v5261, 16
      %v5488 = vrot.slane %v5486, 5
      %v5489 = vsel %vm1745, %v5484, %v5488
      %v5490 = vshrl.u32 %v5261, 16
      %v5492 = vrot.slane %v5490, 4
      %v5493 = vor.u32 %v5492, %v5488
      %v5494 = vrot.slane %v5493, 4
      %v5496 = vshll.u32 %v5262, 16
      %v5498 = vrot.slane %v5496, 5
      %v5499 = vsel %vm1745, %v5494, %v5498
      %v5501 = vshrl.u32 %v5263, 16
      %v5503 = vrot.slane %v5501, 4
      %v5504 = vshll.u32 %v5263, 16
      %v5506 = vrot.slane %v5504, 5
      %v5507 = vor.u32 %v5503, %v5506
      %v5508 = vrot.slane %v5507, 4
      %v5510 = vshll.u32 %v5264, 16
      %v5512 = vrot.slane %v5510, 5
      %v5513 = vsel %vm1745, %v5508, %v5512
      %v5514 = vshrl.u32 %v5264, 16
      %v5516 = vrot.slane %v5514, 4
      %v5517 = vor.u32 %v5516, %v5512
      %v5518 = vrot.slane %v5517, 4
      %v5520 = vshll.u32 %v5265, 16
      %v5522 = vrot.slane %v5520, 5
      %v5523 = vsel %vm1745, %v5518, %v5522
      %v5525 = vshrl.u32 %v5266, 16
      %v5527 = vrot.slane %v5525, 4
      %v5528 = vshll.u32 %v5266, 16
      %v5530 = vrot.slane %v5528, 5
      %v5531 = vor.u32 %v5527, %v5530
      %v5532 = vrot.slane %v5531, 4
      %v5534 = vshll.u32 %v5267, 16
      %v5536 = vrot.slane %v5534, 5
      %v5537 = vsel %vm1745, %v5532, %v5536
      %v5538 = vshrl.u32 %v5267, 16
      %v5540 = vrot.slane %v5538, 4
      %v5541 = vor.u32 %v5540, %v5536
      %v5542 = vrot.slane %v5541, 4
      %v5544 = vshll.u32 %v5268, 16
      %v5546 = vrot.slane %v5544, 5
      %v5547 = vsel %vm1745, %v5542, %v5546
      %v5549 = vshrl.u32 %v5269, 16
      %v5551 = vrot.slane %v5549, 4
      %v5552 = vshll.u32 %v5269, 16
      %v5554 = vrot.slane %v5552, 5
      %v5555 = vor.u32 %v5551, %v5554
      %v5556 = vrot.slane %v5555, 4
      %v5558 = vshll.u32 %v5270, 16
      %v5560 = vrot.slane %v5558, 5
      %v5561 = vsel %vm1745, %v5556, %v5560
      %v5562 = vshrl.u32 %v5270, 16
      %v5564 = vrot.slane %v5562, 4
      %v5565 = vor.u32 %v5564, %v5560
      %v5566 = vrot.slane %v5565, 4
      %v5568 = vshll.u32 %v5271, 16
      %v5570 = vrot.slane %v5568, 5
      %v5571 = vsel %vm1745, %v5566, %v5570
      %v5573 = vshrl.u32 %v5272, 16
      %v5575 = vrot.slane %v5573, 4
      %v5576 = vshll.u32 %v5272, 16
      %v5578 = vrot.slane %v5576, 5
      %v5579 = vor.u32 %v5575, %v5578
      %v5580 = vrot.slane %v5579, 4
      %v5582 = vshll.u32 %v5273, 16
      %v5584 = vrot.slane %v5582, 5
      %v5585 = vsel %vm1745, %v5580, %v5584
      %v5586 = vshrl.u32 %v5273, 16
      %v5588 = vrot.slane %v5586, 4
      %v5589 = vor.u32 %v5588, %v5584
      %v5590 = vrot.slane %v5589, 4
      %v5592 = vshll.u32 %v5274, 16
      %v5594 = vrot.slane %v5592, 5
      %v5595 = vsel %vm1745, %v5590, %v5594
      %v5597 = vshrl.u32 %v5275, 16
      %v5599 = vrot.slane %v5597, 4
      %v5600 = vshll.u32 %v5275, 16
      %v5602 = vrot.slane %v5600, 5
      %v5603 = vor.u32 %v5599, %v5602
      %v5604 = vrot.slane %v5603, 4
      %v5606 = vshll.u32 %v5276, 16
      %v5608 = vrot.slane %v5606, 5
      %v5609 = vsel %vm1745, %v5604, %v5608
      %v5610 = vshrl.u32 %v5276, 16
      %v5612 = vrot.slane %v5610, 4
      %v5613 = vor.u32 %v5612, %v5608
      %v5614 = vrot.slane %v5613, 4
      %v5616 = vshll.u32 %v5277, 16
      %v5618 = vrot.slane %v5616, 5
      %v5619 = vsel %vm1745, %v5614, %v5618
      %v5621 = vshrl.u32 %v5278, 16
      %v5623 = vrot.slane %v5621, 4
      %v5624 = vshll.u32 %v5278, 16
      %v5626 = vrot.slane %v5624, 5
      %v5627 = vor.u32 %v5623, %v5626
      %v5628 = vrot.slane %v5627, 4
      %v5630 = vshll.u32 %v5279, 16
      %v5632 = vrot.slane %v5630, 5
      %v5633 = vsel %vm1745, %v5628, %v5632
      %v5634 = vshrl.u32 %v5279, 16
      %v5636 = vrot.slane %v5634, 4
      %v5637 = vor.u32 %v5636, %v5632
      %v5638 = vrot.slane %v5637, 4
      %v5640 = vshll.u32 %v5280, 16
      %v5642 = vrot.slane %v5640, 5
      %v5643 = vsel %vm1745, %v5638, %v5642
      %v5645 = vshrl.u32 %v5281, 16
      %v5647 = vrot.slane %v5645, 4
      %v5648 = vshll.u32 %v5281, 16
      %v5650 = vrot.slane %v5648, 5
      %v5651 = vor.u32 %v5647, %v5650
      %v5652 = vrot.slane %v5651, 4
      %v5654 = vshll.u32 %v5282, 16
      %v5656 = vrot.slane %v5654, 5
      %v5657 = vsel %vm1745, %v5652, %v5656
      %v5658 = vshrl.u32 %v5282, 16
      %v5660 = vrot.slane %v5658, 4
      %v5661 = vor.u32 %v5660, %v5656
      %v5662 = vrot.slane %v5661, 4
      %v5664 = vshll.u32 %v5283, 16
      %v5666 = vrot.slane %v5664, 5
      %v5667 = vsel %vm1745, %v5662, %v5666
      %s5668 = scalar_lea.vmem %s4, 448
      %v5669 = vld [vmem:[%s5668] sm:$0xf]
      %v5670 = vld [vmem:[%s5668 + $0x4] sm:$0xf]
      %v5671 = vld [vmem:[%s5668 + $0x8] sm:$0xf]
      %v5672 = vld [vmem:[%s5668 + $0xc] sm:$0xf]
      %v5673 = vld [vmem:[%s5668 + $0x10] sm:$0xf]
      %v5674 = vld [vmem:[%s5668 + $0x14] sm:$0xf]
      %v5675 = vld [vmem:[%s5668 + $0x18] sm:$0xf]
      %v5676 = vld [vmem:[%s5668 + $0x1c] sm:$0xf]
      %v5677 = vld [vmem:[%s5668 + $0x20] sm:$0xf]
      %v5678 = vld [vmem:[%s5668 + $0x24] sm:$0xf]
      %v5679 = vld [vmem:[%s5668 + $0x28] sm:$0xf]
      %v5680 = vld [vmem:[%s5668 + $0x2c] sm:$0xf]
      %v5681 = vld [vmem:[%s5668 + $0x30] sm:$0xf]
      %v5682 = vld [vmem:[%s5668 + $0x34] sm:$0xf]
      %v5683 = vld [vmem:[%s5668 + $0x38] sm:$0xf]
      %v5684 = vld [vmem:[%s5668 + $0x3c] sm:$0xf]
      %v5685 = vunpack.c.l.b16 %v5297
      %v5686 = vunpack.c.l.b16 %v5307
      %v5687 = vunpack.c.l.b16 %v5321
      %v5688 = vunpack.c.l.b16 %v5331
      %v5689 = vunpack.c.l.b16 %v5345
      %v5690 = vunpack.c.l.b16 %v5355
      %v5691 = vunpack.c.l.b16 %v5369
      %v5692 = vunpack.c.l.b16 %v5379
      %v5693 = vunpack.c.l.b16 %v5393
      %v5694 = vunpack.c.l.b16 %v5403
      %v5695 = vunpack.c.l.b16 %v5417
      %v5696 = vunpack.c.l.b16 %v5427
      %v5697 = vunpack.c.l.b16 %v5441
      %v5698 = vunpack.c.l.b16 %v5451
      %v5699 = vunpack.c.l.b16 %v5465
      %v5700 = vunpack.c.l.b16 %v5475
      %v5701 = vunpack.c.l.b16 %v5489
      %v5702 = vunpack.c.l.b16 %v5499
      %v5703 = vunpack.c.l.b16 %v5513
      %v5704 = vunpack.c.l.b16 %v5523
      %v5705 = vunpack.c.l.b16 %v5537
      %v5706 = vunpack.c.l.b16 %v5547
      %v5707 = vunpack.c.l.b16 %v5561
      %v5708 = vunpack.c.l.b16 %v5571
      %v5709 = vunpack.c.l.b16 %v5585
      %v5710 = vunpack.c.l.b16 %v5595
      %v5711 = vunpack.c.l.b16 %v5609
      %v5712 = vunpack.c.l.b16 %v5619
      %v5713 = vunpack.c.l.b16 %v5633
      %v5714 = vunpack.c.l.b16 %v5643
      %v5715 = vunpack.c.l.b16 %v5657
      %v5716 = vunpack.c.l.b16 %v5667
      %v5717 = vpack.c.b16 %v5686, %v5685
      %v5718 = vpack.c.b16 %v5688, %v5687
      %v5719 = vpack.c.b16 %v5690, %v5689
      %v5720 = vpack.c.b16 %v5692, %v5691
      %v5721 = vpack.c.b16 %v5694, %v5693
      %v5722 = vpack.c.b16 %v5696, %v5695
      %v5723 = vpack.c.b16 %v5698, %v5697
      %v5724 = vpack.c.b16 %v5700, %v5699
      %v5725 = vpack.c.b16 %v5702, %v5701
      %v5726 = vpack.c.b16 %v5704, %v5703
      %v5727 = vpack.c.b16 %v5706, %v5705
      %v5728 = vpack.c.b16 %v5708, %v5707
      %v5729 = vpack.c.b16 %v5710, %v5709
      %v5730 = vpack.c.b16 %v5712, %v5711
      %v5731 = vpack.c.b16 %v5714, %v5713
      %v5732 = vpack.c.b16 %v5716, %v5715
      %v5765 = vunpack.c.l.b16 %v5669
      %v5766 = vunpack.c.l.b16 %v5670
      %v5767 = vunpack.c.l.b16 %v5671
      %v5768 = vunpack.c.l.b16 %v5672
      %v5769 = vunpack.c.l.b16 %v5673
      %v5770 = vunpack.c.l.b16 %v5674
      %v5771 = vunpack.c.l.b16 %v5675
      %v5772 = vunpack.c.l.b16 %v5676
      %v5773 = vunpack.c.l.b16 %v5677
      %v5774 = vunpack.c.l.b16 %v5678
      %v5775 = vunpack.c.l.b16 %v5679
      %v5776 = vunpack.c.l.b16 %v5680
      %v5777 = vunpack.c.l.b16 %v5681
      %v5778 = vunpack.c.l.b16 %v5682
      %v5779 = vunpack.c.l.b16 %v5683
      %v5780 = vunpack.c.l.b16 %v5684
      %v5781 = vpack.c.b16 %v5766, %v5765
      %v5782 = vpack.c.b16 %v5768, %v5767
      %v5783 = vpack.c.b16 %v5770, %v5769
      %v5784 = vpack.c.b16 %v5772, %v5771
      %v5785 = vpack.c.b16 %v5774, %v5773
      %v5786 = vpack.c.b16 %v5776, %v5775
      %v5787 = vpack.c.b16 %v5778, %v5777
      %v5788 = vpack.c.b16 %v5780, %v5779
      %5797 = vmatprep.subr.bf16.mxu0 0
      %5798 = vmatpush1.bf16.msra.mxu0 %v5788
      %5799 = vmatprep.subr.bf16.mxu0 0
      %5800 = vmatpush1.bf16.msra.mxu0 %v5787
      %5801 = vmatprep.subr.bf16.mxu0 0
      %5802 = vmatpush1.bf16.msra.mxu0 %v5786
      %5803 = vmatprep.subr.bf16.mxu0 0
      %5804 = vmatpush1.bf16.msra.mxu0 %v5785
      %5805 = vmatprep.subr.bf16.mxu0 0
      %5806 = vmatpush1.bf16.msra.mxu0 %v5784
      %5807 = vmatprep.subr.bf16.mxu0 0
      %5808 = vmatpush1.bf16.msra.mxu0 %v5783
      %5809 = vmatprep.subr.bf16.mxu0 0
      %5810 = vmatpush1.bf16.msra.mxu0 %v5782
      %5811 = vmatprep.subr.bf16.mxu0 0
      %5812 = vmatpush1.bf16.msra.mxu0 %v5781
      %5813 = vmatprep.subr.bf16.mxu0 0
      %5814 = vmatpush2.bf16.msra.mxu0 0
      %5815 = vmatprep.subr.bf16.mxu0 0
      %5816 = vmatpush2.bf16.msra.mxu0 0
      %5817 = vmatprep.subr.bf16.mxu0 0
      %5818 = vmatpush2.bf16.msra.mxu0 0
      %5819 = vmatprep.subr.bf16.mxu0 0
      %5820 = vmatpush2.bf16.msra.mxu0 0
      %5821 = vmatprep.subr.bf16.mxu0 0
      %5822 = vmatpush2.bf16.msra.mxu0 0
      %5823 = vmatprep.subr.bf16.mxu0 0
      %5824 = vmatpush2.bf16.msra.mxu0 0
      %5825 = vmatprep.subr.bf16.mxu0 0
      %5826 = vmatpush2.bf16.msra.mxu0 0
      %5827 = vmatprep.subr.bf16.mxu0 0
      %5828 = vmatpush2.bf16.msra.mxu0 0
      %5829 = vmatprep.mubr.bf16.mxu0 0
      %5830 = vmatmul.mubr.bf16.gmra.mxu0 %v5717
      %v5831 = vpop.f32.mrf.mxu0
      %v5832 = vadd.f32 0.0, %v5831
      %v5833 = vpop.f32.mrf.mxu0
      %v5834 = vpop.f32.mrf.mxu0
      %v5835 = vadd.f32 0.0, %v5834
      %v5836 = vpop.f32.mrf.mxu0
      %5837 = vmatprep.mubr.bf16.mxu0 0
      %5838 = vmatmul.mubr.bf16.gmra.mxu0 %v5718
      %v5839 = vpop.f32.mrf.mxu0
      %v5840 = vadd.f32 0.0, %v5839
      %v5841 = vpop.f32.mrf.mxu0
      %v5842 = vpop.f32.mrf.mxu0
      %v5843 = vadd.f32 0.0, %v5842
      %v5844 = vpop.f32.mrf.mxu0
      %5845 = vmatprep.mubr.bf16.mxu0 0
      %5846 = vmatmul.mubr.bf16.gmra.mxu0 %v5719
      %v5847 = vpop.f32.mrf.mxu0
      %v5848 = vadd.f32 0.0, %v5847
      %v5849 = vpop.f32.mrf.mxu0
      %v5850 = vpop.f32.mrf.mxu0
      %v5851 = vadd.f32 0.0, %v5850
      %v5852 = vpop.f32.mrf.mxu0
      %5853 = vmatprep.mubr.bf16.mxu0 0
      %5854 = vmatmul.mubr.bf16.gmra.mxu0 %v5720
      %v5855 = vpop.f32.mrf.mxu0
      %v5856 = vadd.f32 0.0, %v5855
      %v5857 = vpop.f32.mrf.mxu0
      %v5858 = vpop.f32.mrf.mxu0
      %v5859 = vadd.f32 0.0, %v5858
      %v5860 = vpop.f32.mrf.mxu0
      %5861 = vmatprep.mubr.bf16.mxu0 0
      %5862 = vmatmul.mubr.bf16.gmra.mxu0 %v5721
      %v5863 = vpop.f32.mrf.mxu0
      %v5864 = vadd.f32 0.0, %v5863
      %v5865 = vpop.f32.mrf.mxu0
      %v5866 = vpop.f32.mrf.mxu0
      %v5867 = vadd.f32 0.0, %v5866
      %v5868 = vpop.f32.mrf.mxu0
      %5869 = vmatprep.mubr.bf16.mxu0 0
      %5870 = vmatmul.mubr.bf16.gmra.mxu0 %v5722
      %v5871 = vpop.f32.mrf.mxu0
      %v5872 = vadd.f32 0.0, %v5871
      %v5873 = vpop.f32.mrf.mxu0
      %v5874 = vpop.f32.mrf.mxu0
      %v5875 = vadd.f32 0.0, %v5874
      %v5876 = vpop.f32.mrf.mxu0
      %5877 = vmatprep.mubr.bf16.mxu0 0
      %5878 = vmatmul.mubr.bf16.gmra.mxu0 %v5723
      %v5879 = vpop.f32.mrf.mxu0
      %v5880 = vadd.f32 0.0, %v5879
      %v5881 = vpop.f32.mrf.mxu0
      %v5882 = vpop.f32.mrf.mxu0
      %v5883 = vadd.f32 0.0, %v5882
      %v5884 = vpop.f32.mrf.mxu0
      %5885 = vmatprep.mubr.bf16.mxu0 0
      %5886 = vmatmul.mubr.bf16.gmra.mxu0 %v5724
      %v5887 = vpop.f32.mrf.mxu0
      %v5888 = vadd.f32 0.0, %v5887
      %v5889 = vpop.f32.mrf.mxu0
      %v5890 = vpop.f32.mrf.mxu0
      %v5891 = vadd.f32 0.0, %v5890
      %v5892 = vpop.f32.mrf.mxu0
      %5893 = vmatprep.mubr.bf16.mxu0 0
      %5894 = vmatmul.mubr.bf16.gmra.mxu0 %v5725
      %v5895 = vpop.f32.mrf.mxu0
      %v5896 = vadd.f32 0.0, %v5895
      %v5897 = vpop.f32.mrf.mxu0
      %v5898 = vpop.f32.mrf.mxu0
      %v5899 = vadd.f32 0.0, %v5898
      %v5900 = vpop.f32.mrf.mxu0
      %5901 = vmatprep.mubr.bf16.mxu0 0
      %5902 = vmatmul.mubr.bf16.gmra.mxu0 %v5726
      %v5903 = vpop.f32.mrf.mxu0
      %v5904 = vadd.f32 0.0, %v5903
      %v5905 = vpop.f32.mrf.mxu0
      %v5906 = vpop.f32.mrf.mxu0
      %v5907 = vadd.f32 0.0, %v5906
      %v5908 = vpop.f32.mrf.mxu0
      %5909 = vmatprep.mubr.bf16.mxu0 0
      %5910 = vmatmul.mubr.bf16.gmra.mxu0 %v5727
      %v5911 = vpop.f32.mrf.mxu0
      %v5912 = vadd.f32 0.0, %v5911
      %v5913 = vpop.f32.mrf.mxu0
      %v5914 = vpop.f32.mrf.mxu0
      %v5915 = vadd.f32 0.0, %v5914
      %v5916 = vpop.f32.mrf.mxu0
      %5917 = vmatprep.mubr.bf16.mxu0 0
      %5918 = vmatmul.mubr.bf16.gmra.mxu0 %v5728
      %v5919 = vpop.f32.mrf.mxu0
      %v5920 = vadd.f32 0.0, %v5919
      %v5921 = vpop.f32.mrf.mxu0
      %v5922 = vpop.f32.mrf.mxu0
      %v5923 = vadd.f32 0.0, %v5922
      %v5924 = vpop.f32.mrf.mxu0
      %5925 = vmatprep.mubr.bf16.mxu0 0
      %5926 = vmatmul.mubr.bf16.gmra.mxu0 %v5729
      %v5927 = vpop.f32.mrf.mxu0
      %v5928 = vadd.f32 0.0, %v5927
      %v5929 = vpop.f32.mrf.mxu0
      %v5930 = vpop.f32.mrf.mxu0
      %v5931 = vadd.f32 0.0, %v5930
      %v5932 = vpop.f32.mrf.mxu0
      %5933 = vmatprep.mubr.bf16.mxu0 0
      %5934 = vmatmul.mubr.bf16.gmra.mxu0 %v5730
      %v5935 = vpop.f32.mrf.mxu0
      %v5936 = vadd.f32 0.0, %v5935
      %v5937 = vpop.f32.mrf.mxu0
      %v5938 = vpop.f32.mrf.mxu0
      %v5939 = vadd.f32 0.0, %v5938
      %v5940 = vpop.f32.mrf.mxu0
      %5941 = vmatprep.mubr.bf16.mxu0 0
      %5942 = vmatmul.mubr.bf16.gmra.mxu0 %v5731
      %v5943 = vpop.f32.mrf.mxu0
      %v5944 = vadd.f32 0.0, %v5943
      %v5945 = vpop.f32.mrf.mxu0
      %v5946 = vpop.f32.mrf.mxu0
      %v5947 = vadd.f32 0.0, %v5946
      %v5948 = vpop.f32.mrf.mxu0
      %5949 = vmatprep.mubr.bf16.mxu0 0
      %5950 = vmatmul.mubr.bf16.gmra.mxu0 %v5732
      %v5951 = vpop.f32.mrf.mxu0
      %v5952 = vadd.f32 0.0, %v5951
      %v5953 = vpop.f32.mrf.mxu0
      %v5954 = vpop.f32.mrf.mxu0
      %v5955 = vadd.f32 0.0, %v5954
      %v5956 = vpop.f32.mrf.mxu0
      %5957 = vdwg.mxu0
      %v5958 = vadd.f32 %v5204, %v5832
      %v5959 = vadd.f32 %v5205, %v5835
      %v5960 = vadd.f32 %v5206, %v5840
      %v5961 = vadd.f32 %v5207, %v5843
      %v5962 = vadd.f32 %v5208, %v5848
      %v5963 = vadd.f32 %v5209, %v5851
      %v5964 = vadd.f32 %v5210, %v5856
      %v5965 = vadd.f32 %v5211, %v5859
      %v5966 = vadd.f32 %v5212, %v5864
      %v5967 = vadd.f32 %v5213, %v5867
      %v5968 = vadd.f32 %v5214, %v5872
      %v5969 = vadd.f32 %v5215, %v5875
      %v5970 = vadd.f32 %v5216, %v5880
      %v5971 = vadd.f32 %v5217, %v5883
      %v5972 = vadd.f32 %v5218, %v5888
      %v5973 = vadd.f32 %v5219, %v5891
      %v5974 = vadd.f32 %v5220, %v5896
      %v5975 = vadd.f32 %v5221, %v5899
      %v5976 = vadd.f32 %v5222, %v5904
      %v5977 = vadd.f32 %v5223, %v5907
      %v5978 = vadd.f32 %v5224, %v5912
      %v5979 = vadd.f32 %v5225, %v5915
      %v5980 = vadd.f32 %v5226, %v5920
      %v5981 = vadd.f32 %v5227, %v5923
      %v5982 = vadd.f32 %v5228, %v5928
      %v5983 = vadd.f32 %v5229, %v5931
      %v5984 = vadd.f32 %v5230, %v5936
      %v5985 = vadd.f32 %v5231, %v5939
      %v5986 = vadd.f32 %v5232, %v5944
      %v5987 = vadd.f32 %v5233, %v5947
      %v5988 = vadd.f32 %v5234, %v5952
      %v5989 = vadd.f32 %v5235, %v5955
      %v5990 = vld [vmem:[%s4849] sm:$0xe]
      %v5991 = vld [vmem:[%s4849 + $0xc] sm:$0xe]
      %v5992 = vld [vmem:[%s4849 + $0x18] sm:$0xe]
      %v5993 = vld [vmem:[%s4849 + $0x24] sm:$0xe]
      %v5994 = vld [vmem:[%s4849 + $0x30] sm:$0xe]
      %v5995 = vld [vmem:[%s4849 + $0x3c] sm:$0xe]
      %v5996 = vld [vmem:[%s4849 + $0x48] sm:$0xe]
      %v5997 = vld [vmem:[%s4849 + $0x54] sm:$0xe]
      %v5998 = vld [vmem:[%s4849 + $0x60] sm:$0xe]
      %v5999 = vld [vmem:[%s4849 + $0x6c] sm:$0xe]
      %v6000 = vld [vmem:[%s4849 + $0x78] sm:$0xe]
      %v6001 = vld [vmem:[%s4849 + $0x84] sm:$0xe]
      %v6002 = vld [vmem:[%s4849 + $0x90] sm:$0xe]
      %v6003 = vld [vmem:[%s4849 + $0x9c] sm:$0xe]
      %v6004 = vld [vmem:[%s4849 + $0xa8] sm:$0xe]
      %v6005 = vld [vmem:[%s4849 + $0xb4] sm:$0xe]
      %v6054 = vrot.slane %v5990, 5
      %v6055 = vrot.slane %v6054, 4
      %v6056 = vrot.slane %v5237, 5
      %v6057 = vsel %vm2775, %v6055, %v6056
      %v6058 = vrot.slane %v6056, 4
      %v6059 = vrot.slane %v5238, 5
      %v6060 = vsel %vm2775, %v6058, %v6059
      %v6061 = vrot.slane %v5991, 5
      %v6062 = vrot.slane %v6061, 4
      %v6063 = vrot.slane %v5240, 5
      %v6064 = vsel %vm2775, %v6062, %v6063
      %v6065 = vrot.slane %v6063, 4
      %v6066 = vrot.slane %v5241, 5
      %v6067 = vsel %vm2775, %v6065, %v6066
      %v6068 = vrot.slane %v5992, 5
      %v6069 = vrot.slane %v6068, 4
      %v6070 = vrot.slane %v5243, 5
      %v6071 = vsel %vm2775, %v6069, %v6070
      %v6072 = vrot.slane %v6070, 4
      %v6073 = vrot.slane %v5244, 5
      %v6074 = vsel %vm2775, %v6072, %v6073
      %v6075 = vrot.slane %v5993, 5
      %v6076 = vrot.slane %v6075, 4
      %v6077 = vrot.slane %v5246, 5
      %v6078 = vsel %vm2775, %v6076, %v6077
      %v6079 = vrot.slane %v6077, 4
      %v6080 = vrot.slane %v5247, 5
      %v6081 = vsel %vm2775, %v6079, %v6080
      %v6082 = vrot.slane %v5994, 5
      %v6083 = vrot.slane %v6082, 4
      %v6084 = vrot.slane %v5249, 5
      %v6085 = vsel %vm2775, %v6083, %v6084
      %v6086 = vrot.slane %v6084, 4
      %v6087 = vrot.slane %v5250, 5
      %v6088 = vsel %vm2775, %v6086, %v6087
      %v6089 = vrot.slane %v5995, 5
      %v6090 = vrot.slane %v6089, 4
      %v6091 = vrot.slane %v5252, 5
      %v6092 = vsel %vm2775, %v6090, %v6091
      %v6093 = vrot.slane %v6091, 4
      %v6094 = vrot.slane %v5253, 5
      %v6095 = vsel %vm2775, %v6093, %v6094
      %v6096 = vrot.slane %v5996, 5
      %v6097 = vrot.slane %v6096, 4
      %v6098 = vrot.slane %v5255, 5
      %v6099 = vsel %vm2775, %v6097, %v6098
      %v6100 = vrot.slane %v6098, 4
      %v6101 = vrot.slane %v5256, 5
      %v6102 = vsel %vm2775, %v6100, %v6101
      %v6103 = vrot.slane %v5997, 5
      %v6104 = vrot.slane %v6103, 4
      %v6105 = vrot.slane %v5258, 5
      %v6106 = vsel %vm2775, %v6104, %v6105
      %v6107 = vrot.slane %v6105, 4
      %v6108 = vrot.slane %v5259, 5
      %v6109 = vsel %vm2775, %v6107, %v6108
      %v6110 = vrot.slane %v5998, 5
      %v6111 = vrot.slane %v6110, 4
      %v6112 = vrot.slane %v5261, 5
      %v6113 = vsel %vm2775, %v6111, %v6112
      %v6114 = vrot.slane %v6112, 4
      %v6115 = vrot.slane %v5262, 5
      %v6116 = vsel %vm2775, %v6114, %v6115
      %v6117 = vrot.slane %v5999, 5
      %v6118 = vrot.slane %v6117, 4
      %v6119 = vrot.slane %v5264, 5
      %v6120 = vsel %vm2775, %v6118, %v6119
      %v6121 = vrot.slane %v6119, 4
      %v6122 = vrot.slane %v5265, 5
      %v6123 = vsel %vm2775, %v6121, %v6122
      %v6124 = vrot.slane %v6000, 5
      %v6125 = vrot.slane %v6124, 4
      %v6126 = vrot.slane %v5267, 5
      %v6127 = vsel %vm2775, %v6125, %v6126
      %v6128 = vrot.slane %v6126, 4
      %v6129 = vrot.slane %v5268, 5
      %v6130 = vsel %vm2775, %v6128, %v6129
      %v6131 = vrot.slane %v6001, 5
      %v6132 = vrot.slane %v6131, 4
      %v6133 = vrot.slane %v5270, 5
      %v6134 = vsel %vm2775, %v6132, %v6133
      %v6135 = vrot.slane %v6133, 4
      %v6136 = vrot.slane %v5271, 5
      %v6137 = vsel %vm2775, %v6135, %v6136
      %v6138 = vrot.slane %v6002, 5
      %v6139 = vrot.slane %v6138, 4
      %v6140 = vrot.slane %v5273, 5
      %v6141 = vsel %vm2775, %v6139, %v6140
      %v6142 = vrot.slane %v6140, 4
      %v6143 = vrot.slane %v5274, 5
      %v6144 = vsel %vm2775, %v6142, %v6143
      %v6145 = vrot.slane %v6003, 5
      %v6146 = vrot.slane %v6145, 4
      %v6147 = vrot.slane %v5276, 5
      %v6148 = vsel %vm2775, %v6146, %v6147
      %v6149 = vrot.slane %v6147, 4
      %v6150 = vrot.slane %v5277, 5
      %v6151 = vsel %vm2775, %v6149, %v6150
      %v6152 = vrot.slane %v6004, 5
      %v6153 = vrot.slane %v6152, 4
      %v6154 = vrot.slane %v5279, 5
      %v6155 = vsel %vm2775, %v6153, %v6154
      %v6156 = vrot.slane %v6154, 4
      %v6157 = vrot.slane %v5280, 5
      %v6158 = vsel %vm2775, %v6156, %v6157
      %v6159 = vrot.slane %v6005, 5
      %v6160 = vrot.slane %v6159, 4
      %v6161 = vrot.slane %v5282, 5
      %v6162 = vsel %vm2775, %v6160, %v6161
      %v6163 = vrot.slane %v6161, 4
      %v6164 = vrot.slane %v5283, 5
      %v6165 = vsel %vm2775, %v6163, %v6164
      %s6166 = scalar_lea.vmem %s4, 512
      %v6167 = vld [vmem:[%s6166] sm:$0xf]
      %v6168 = vld [vmem:[%s6166 + $0x4] sm:$0xf]
      %v6169 = vld [vmem:[%s6166 + $0x8] sm:$0xf]
      %v6170 = vld [vmem:[%s6166 + $0xc] sm:$0xf]
      %v6171 = vld [vmem:[%s6166 + $0x10] sm:$0xf]
      %v6172 = vld [vmem:[%s6166 + $0x14] sm:$0xf]
      %v6173 = vld [vmem:[%s6166 + $0x18] sm:$0xf]
      %v6174 = vld [vmem:[%s6166 + $0x1c] sm:$0xf]
      %v6175 = vld [vmem:[%s6166 + $0x20] sm:$0xf]
      %v6176 = vld [vmem:[%s6166 + $0x24] sm:$0xf]
      %v6177 = vld [vmem:[%s6166 + $0x28] sm:$0xf]
      %v6178 = vld [vmem:[%s6166 + $0x2c] sm:$0xf]
      %v6179 = vld [vmem:[%s6166 + $0x30] sm:$0xf]
      %v6180 = vld [vmem:[%s6166 + $0x34] sm:$0xf]
      %v6181 = vld [vmem:[%s6166 + $0x38] sm:$0xf]
      %v6182 = vld [vmem:[%s6166 + $0x3c] sm:$0xf]
      %v6183 = vunpack.c.l.b16 %v6057
      %v6184 = vunpack.c.l.b16 %v6060
      %v6185 = vunpack.c.l.b16 %v6064
      %v6186 = vunpack.c.l.b16 %v6067
      %v6187 = vunpack.c.l.b16 %v6071
      %v6188 = vunpack.c.l.b16 %v6074
      %v6189 = vunpack.c.l.b16 %v6078
      %v6190 = vunpack.c.l.b16 %v6081
      %v6191 = vunpack.c.l.b16 %v6085
      %v6192 = vunpack.c.l.b16 %v6088
      %v6193 = vunpack.c.l.b16 %v6092
      %v6194 = vunpack.c.l.b16 %v6095
      %v6195 = vunpack.c.l.b16 %v6099
      %v6196 = vunpack.c.l.b16 %v6102
      %v6197 = vunpack.c.l.b16 %v6106
      %v6198 = vunpack.c.l.b16 %v6109
      %v6199 = vunpack.c.l.b16 %v6113
      %v6200 = vunpack.c.l.b16 %v6116
      %v6201 = vunpack.c.l.b16 %v6120
      %v6202 = vunpack.c.l.b16 %v6123
      %v6203 = vunpack.c.l.b16 %v6127
      %v6204 = vunpack.c.l.b16 %v6130
      %v6205 = vunpack.c.l.b16 %v6134
      %v6206 = vunpack.c.l.b16 %v6137
      %v6207 = vunpack.c.l.b16 %v6141
      %v6208 = vunpack.c.l.b16 %v6144
      %v6209 = vunpack.c.l.b16 %v6148
      %v6210 = vunpack.c.l.b16 %v6151
      %v6211 = vunpack.c.l.b16 %v6155
      %v6212 = vunpack.c.l.b16 %v6158
      %v6213 = vunpack.c.l.b16 %v6162
      %v6214 = vunpack.c.l.b16 %v6165
      %v6215 = vpack.c.b16 %v6184, %v6183
      %v6216 = vpack.c.b16 %v6186, %v6185
      %v6217 = vpack.c.b16 %v6188, %v6187
      %v6218 = vpack.c.b16 %v6190, %v6189
      %v6219 = vpack.c.b16 %v6192, %v6191
      %v6220 = vpack.c.b16 %v6194, %v6193
      %v6221 = vpack.c.b16 %v6196, %v6195
      %v6222 = vpack.c.b16 %v6198, %v6197
      %v6223 = vpack.c.b16 %v6200, %v6199
      %v6224 = vpack.c.b16 %v6202, %v6201
      %v6225 = vpack.c.b16 %v6204, %v6203
      %v6226 = vpack.c.b16 %v6206, %v6205
      %v6227 = vpack.c.b16 %v6208, %v6207
      %v6228 = vpack.c.b16 %v6210, %v6209
      %v6229 = vpack.c.b16 %v6212, %v6211
      %v6230 = vpack.c.b16 %v6214, %v6213
      %v6263 = vunpack.c.l.b16 %v6167
      %v6264 = vunpack.c.l.b16 %v6168
      %v6265 = vunpack.c.l.b16 %v6169
      %v6266 = vunpack.c.l.b16 %v6170
      %v6267 = vunpack.c.l.b16 %v6171
      %v6268 = vunpack.c.l.b16 %v6172
      %v6269 = vunpack.c.l.b16 %v6173
      %v6270 = vunpack.c.l.b16 %v6174
      %v6271 = vunpack.c.l.b16 %v6175
      %v6272 = vunpack.c.l.b16 %v6176
      %v6273 = vunpack.c.l.b16 %v6177
      %v6274 = vunpack.c.l.b16 %v6178
      %v6275 = vunpack.c.l.b16 %v6179
      %v6276 = vunpack.c.l.b16 %v6180
      %v6277 = vunpack.c.l.b16 %v6181
      %v6278 = vunpack.c.l.b16 %v6182
      %v6279 = vpack.c.b16 %v6264, %v6263
      %v6280 = vpack.c.b16 %v6266, %v6265
      %v6281 = vpack.c.b16 %v6268, %v6267
      %v6282 = vpack.c.b16 %v6270, %v6269
      %v6283 = vpack.c.b16 %v6272, %v6271
      %v6284 = vpack.c.b16 %v6274, %v6273
      %v6285 = vpack.c.b16 %v6276, %v6275
      %v6286 = vpack.c.b16 %v6278, %v6277
      %6295 = vmatprep.subr.bf16.mxu0 0
      %6296 = vmatpush1.bf16.msra.mxu0 %v6286
      %6297 = vmatprep.subr.bf16.mxu0 0
      %6298 = vmatpush1.bf16.msra.mxu0 %v6285
      %6299 = vmatprep.subr.bf16.mxu0 0
      %6300 = vmatpush1.bf16.msra.mxu0 %v6284
      %6301 = vmatprep.subr.bf16.mxu0 0
      %6302 = vmatpush1.bf16.msra.mxu0 %v6283
      %6303 = vmatprep.subr.bf16.mxu0 0
      %6304 = vmatpush1.bf16.msra.mxu0 %v6282
      %6305 = vmatprep.subr.bf16.mxu0 0
      %6306 = vmatpush1.bf16.msra.mxu0 %v6281
      %6307 = vmatprep.subr.bf16.mxu0 0
      %6308 = vmatpush1.bf16.msra.mxu0 %v6280
      %6309 = vmatprep.subr.bf16.mxu0 0
      %6310 = vmatpush1.bf16.msra.mxu0 %v6279
      %6311 = vmatprep.subr.bf16.mxu0 0
      %6312 = vmatpush2.bf16.msra.mxu0 0
      %6313 = vmatprep.subr.bf16.mxu0 0
      %6314 = vmatpush2.bf16.msra.mxu0 0
      %6315 = vmatprep.subr.bf16.mxu0 0
      %6316 = vmatpush2.bf16.msra.mxu0 0
      %6317 = vmatprep.subr.bf16.mxu0 0
      %6318 = vmatpush2.bf16.msra.mxu0 0
      %6319 = vmatprep.subr.bf16.mxu0 0
      %6320 = vmatpush2.bf16.msra.mxu0 0
      %6321 = vmatprep.subr.bf16.mxu0 0
      %6322 = vmatpush2.bf16.msra.mxu0 0
      %6323 = vmatprep.subr.bf16.mxu0 0
      %6324 = vmatpush2.bf16.msra.mxu0 0
      %6325 = vmatprep.subr.bf16.mxu0 0
      %6326 = vmatpush2.bf16.msra.mxu0 0
      %6327 = vmatprep.mubr.bf16.mxu0 0
      %6328 = vmatmul.mubr.bf16.gmra.mxu0 %v6215
      %v6329 = vpop.f32.mrf.mxu0
      %v6330 = vadd.f32 0.0, %v6329
      %v6331 = vpop.f32.mrf.mxu0
      %v6332 = vpop.f32.mrf.mxu0
      %v6333 = vadd.f32 0.0, %v6332
      %v6334 = vpop.f32.mrf.mxu0
      %6335 = vmatprep.mubr.bf16.mxu0 0
      %6336 = vmatmul.mubr.bf16.gmra.mxu0 %v6216
      %v6337 = vpop.f32.mrf.mxu0
      %v6338 = vadd.f32 0.0, %v6337
      %v6339 = vpop.f32.mrf.mxu0
      %v6340 = vpop.f32.mrf.mxu0
      %v6341 = vadd.f32 0.0, %v6340
      %v6342 = vpop.f32.mrf.mxu0
      %6343 = vmatprep.mubr.bf16.mxu0 0
      %6344 = vmatmul.mubr.bf16.gmra.mxu0 %v6217
      %v6345 = vpop.f32.mrf.mxu0
      %v6346 = vadd.f32 0.0, %v6345
      %v6347 = vpop.f32.mrf.mxu0
      %v6348 = vpop.f32.mrf.mxu0
      %v6349 = vadd.f32 0.0, %v6348
      %v6350 = vpop.f32.mrf.mxu0
      %6351 = vmatprep.mubr.bf16.mxu0 0
      %6352 = vmatmul.mubr.bf16.gmra.mxu0 %v6218
      %v6353 = vpop.f32.mrf.mxu0
      %v6354 = vadd.f32 0.0, %v6353
      %v6355 = vpop.f32.mrf.mxu0
      %v6356 = vpop.f32.mrf.mxu0
      %v6357 = vadd.f32 0.0, %v6356
      %v6358 = vpop.f32.mrf.mxu0
      %6359 = vmatprep.mubr.bf16.mxu0 0
      %6360 = vmatmul.mubr.bf16.gmra.mxu0 %v6219
      %v6361 = vpop.f32.mrf.mxu0
      %v6362 = vadd.f32 0.0, %v6361
      %v6363 = vpop.f32.mrf.mxu0
      %v6364 = vpop.f32.mrf.mxu0
      %v6365 = vadd.f32 0.0, %v6364
      %v6366 = vpop.f32.mrf.mxu0
      %6367 = vmatprep.mubr.bf16.mxu0 0
      %6368 = vmatmul.mubr.bf16.gmra.mxu0 %v6220
      %v6369 = vpop.f32.mrf.mxu0
      %v6370 = vadd.f32 0.0, %v6369
      %v6371 = vpop.f32.mrf.mxu0
      %v6372 = vpop.f32.mrf.mxu0
      %v6373 = vadd.f32 0.0, %v6372
      %v6374 = vpop.f32.mrf.mxu0
      %6375 = vmatprep.mubr.bf16.mxu0 0
      %6376 = vmatmul.mubr.bf16.gmra.mxu0 %v6221
      %v6377 = vpop.f32.mrf.mxu0
      %v6378 = vadd.f32 0.0, %v6377
      %v6379 = vpop.f32.mrf.mxu0
      %v6380 = vpop.f32.mrf.mxu0
      %v6381 = vadd.f32 0.0, %v6380
      %v6382 = vpop.f32.mrf.mxu0
      %6383 = vmatprep.mubr.bf16.mxu0 0
      %6384 = vmatmul.mubr.bf16.gmra.mxu0 %v6222
      %v6385 = vpop.f32.mrf.mxu0
      %v6386 = vadd.f32 0.0, %v6385
      %v6387 = vpop.f32.mrf.mxu0
      %v6388 = vpop.f32.mrf.mxu0
      %v6389 = vadd.f32 0.0, %v6388
      %v6390 = vpop.f32.mrf.mxu0
      %6391 = vmatprep.mubr.bf16.mxu0 0
      %6392 = vmatmul.mubr.bf16.gmra.mxu0 %v6223
      %v6393 = vpop.f32.mrf.mxu0
      %v6394 = vadd.f32 0.0, %v6393
      %v6395 = vpop.f32.mrf.mxu0
      %v6396 = vpop.f32.mrf.mxu0
      %v6397 = vadd.f32 0.0, %v6396
      %v6398 = vpop.f32.mrf.mxu0
      %6399 = vmatprep.mubr.bf16.mxu0 0
      %6400 = vmatmul.mubr.bf16.gmra.mxu0 %v6224
      %v6401 = vpop.f32.mrf.mxu0
      %v6402 = vadd.f32 0.0, %v6401
      %v6403 = vpop.f32.mrf.mxu0
      %v6404 = vpop.f32.mrf.mxu0
      %v6405 = vadd.f32 0.0, %v6404
      %v6406 = vpop.f32.mrf.mxu0
      %6407 = vmatprep.mubr.bf16.mxu0 0
      %6408 = vmatmul.mubr.bf16.gmra.mxu0 %v6225
      %v6409 = vpop.f32.mrf.mxu0
      %v6410 = vadd.f32 0.0, %v6409
      %v6411 = vpop.f32.mrf.mxu0
      %v6412 = vpop.f32.mrf.mxu0
      %v6413 = vadd.f32 0.0, %v6412
      %v6414 = vpop.f32.mrf.mxu0
      %6415 = vmatprep.mubr.bf16.mxu0 0
      %6416 = vmatmul.mubr.bf16.gmra.mxu0 %v6226
      %v6417 = vpop.f32.mrf.mxu0
      %v6418 = vadd.f32 0.0, %v6417
      %v6419 = vpop.f32.mrf.mxu0
      %v6420 = vpop.f32.mrf.mxu0
      %v6421 = vadd.f32 0.0, %v6420
      %v6422 = vpop.f32.mrf.mxu0
      %6423 = vmatprep.mubr.bf16.mxu0 0
      %6424 = vmatmul.mubr.bf16.gmra.mxu0 %v6227
      %v6425 = vpop.f32.mrf.mxu0
      %v6426 = vadd.f32 0.0, %v6425
      %v6427 = vpop.f32.mrf.mxu0
      %v6428 = vpop.f32.mrf.mxu0
      %v6429 = vadd.f32 0.0, %v6428
      %v6430 = vpop.f32.mrf.mxu0
      %6431 = vmatprep.mubr.bf16.mxu0 0
      %6432 = vmatmul.mubr.bf16.gmra.mxu0 %v6228
      %v6433 = vpop.f32.mrf.mxu0
      %v6434 = vadd.f32 0.0, %v6433
      %v6435 = vpop.f32.mrf.mxu0
      %v6436 = vpop.f32.mrf.mxu0
      %v6437 = vadd.f32 0.0, %v6436
      %v6438 = vpop.f32.mrf.mxu0
      %6439 = vmatprep.mubr.bf16.mxu0 0
      %6440 = vmatmul.mubr.bf16.gmra.mxu0 %v6229
      %v6441 = vpop.f32.mrf.mxu0
      %v6442 = vadd.f32 0.0, %v6441
      %v6443 = vpop.f32.mrf.mxu0
      %v6444 = vpop.f32.mrf.mxu0
      %v6445 = vadd.f32 0.0, %v6444
      %v6446 = vpop.f32.mrf.mxu0
      %6447 = vmatprep.mubr.bf16.mxu0 0
      %6448 = vmatmul.mubr.bf16.gmra.mxu0 %v6230
      %v6449 = vpop.f32.mrf.mxu0
      %v6450 = vadd.f32 0.0, %v6449
      %v6451 = vpop.f32.mrf.mxu0
      %v6452 = vpop.f32.mrf.mxu0
      %v6453 = vadd.f32 0.0, %v6452
      %v6454 = vpop.f32.mrf.mxu0
      %6455 = vdwg.mxu0
      %v6456 = vadd.f32 %v5958, %v6330
      %v6457 = vadd.f32 %v5959, %v6333
      %v6458 = vadd.f32 %v5960, %v6338
      %v6459 = vadd.f32 %v5961, %v6341
      %v6460 = vadd.f32 %v5962, %v6346
      %v6461 = vadd.f32 %v5963, %v6349
      %v6462 = vadd.f32 %v5964, %v6354
      %v6463 = vadd.f32 %v5965, %v6357
      %v6464 = vadd.f32 %v5966, %v6362
      %v6465 = vadd.f32 %v5967, %v6365
      %v6466 = vadd.f32 %v5968, %v6370
      %v6467 = vadd.f32 %v5969, %v6373
      %v6468 = vadd.f32 %v5970, %v6378
      %v6469 = vadd.f32 %v5971, %v6381
      %v6470 = vadd.f32 %v5972, %v6386
      %v6471 = vadd.f32 %v5973, %v6389
      %v6472 = vadd.f32 %v5974, %v6394
      %v6473 = vadd.f32 %v5975, %v6397
      %v6474 = vadd.f32 %v5976, %v6402
      %v6475 = vadd.f32 %v5977, %v6405
      %v6476 = vadd.f32 %v5978, %v6410
      %v6477 = vadd.f32 %v5979, %v6413
      %v6478 = vadd.f32 %v5980, %v6418
      %v6479 = vadd.f32 %v5981, %v6421
      %v6480 = vadd.f32 %v5982, %v6426
      %v6481 = vadd.f32 %v5983, %v6429
      %v6482 = vadd.f32 %v5984, %v6434
      %v6483 = vadd.f32 %v5985, %v6437
      %v6484 = vadd.f32 %v5986, %v6442
      %v6485 = vadd.f32 %v5987, %v6445
      %v6486 = vadd.f32 %v5988, %v6450
      %v6487 = vadd.f32 %v5989, %v6453
      %v6488 = vld [vmem:[%s5] sm:$0x1]
      %v6490 = vlaneseq
      %v6491 = vshrl.u32 %v6490, 7
      %v6492 = vsub.s32 0, %v6491
      %v6493 = vrot.slane %v6488, %v6492
      %v6495 = vmul.f32 %v6456, %v6493
      %v6496 = vmul.f32 %v6457, %v6493
      %v6497 = vmul.f32 %v6458, %v6493
      %v6498 = vmul.f32 %v6459, %v6493
      %v6499 = vmul.f32 %v6460, %v6493
      %v6500 = vmul.f32 %v6461, %v6493
      %v6501 = vmul.f32 %v6462, %v6493
      %v6502 = vmul.f32 %v6463, %v6493
      %v6503 = vmul.f32 %v6464, %v6493
      %v6504 = vmul.f32 %v6465, %v6493
      %v6505 = vmul.f32 %v6466, %v6493
      %v6506 = vmul.f32 %v6467, %v6493
      %v6507 = vmul.f32 %v6468, %v6493
      %v6508 = vmul.f32 %v6469, %v6493
      %v6509 = vmul.f32 %v6470, %v6493
      %v6510 = vmul.f32 %v6471, %v6493
      %v6511 = vmul.f32 %v6472, %v6493
      %v6512 = vmul.f32 %v6473, %v6493
      %v6513 = vmul.f32 %v6474, %v6493
      %v6514 = vmul.f32 %v6475, %v6493
      %v6515 = vmul.f32 %v6476, %v6493
      %v6516 = vmul.f32 %v6477, %v6493
      %v6517 = vmul.f32 %v6478, %v6493
      %v6518 = vmul.f32 %v6479, %v6493
      %v6519 = vmul.f32 %v6480, %v6493
      %v6520 = vmul.f32 %v6481, %v6493
      %v6521 = vmul.f32 %v6482, %v6493
      %v6522 = vmul.f32 %v6483, %v6493
      %v6523 = vmul.f32 %v6484, %v6493
      %v6524 = vmul.f32 %v6485, %v6493
      %v6525 = vmul.f32 %v6486, %v6493
      %v6526 = vmul.f32 %v6487, %v6493
      %v6527 = vld [vmem:[%s6] sm:$0x1]
      %v6529 = vlaneseq
      %v6530 = vshrl.u32 %v6529, 7
      %v6531 = vsub.s32 0, %v6530
      %v6532 = vrot.slane %v6527, %v6531
      %v6534 = vadd.f32 %v6495, %v6532
      %v6535 = vadd.f32 %v6496, %v6532
      %v6536 = vadd.f32 %v6497, %v6532
      %v6537 = vadd.f32 %v6498, %v6532
      %v6538 = vadd.f32 %v6499, %v6532
      %v6539 = vadd.f32 %v6500, %v6532
      %v6540 = vadd.f32 %v6501, %v6532
      %v6541 = vadd.f32 %v6502, %v6532
      %v6542 = vadd.f32 %v6503, %v6532
      %v6543 = vadd.f32 %v6504, %v6532
      %v6544 = vadd.f32 %v6505, %v6532
      %v6545 = vadd.f32 %v6506, %v6532
      %v6546 = vadd.f32 %v6507, %v6532
      %v6547 = vadd.f32 %v6508, %v6532
      %v6548 = vadd.f32 %v6509, %v6532
      %v6549 = vadd.f32 %v6510, %v6532
      %v6550 = vadd.f32 %v6511, %v6532
      %v6551 = vadd.f32 %v6512, %v6532
      %v6552 = vadd.f32 %v6513, %v6532
      %v6553 = vadd.f32 %v6514, %v6532
      %v6554 = vadd.f32 %v6515, %v6532
      %v6555 = vadd.f32 %v6516, %v6532
      %v6556 = vadd.f32 %v6517, %v6532
      %v6557 = vadd.f32 %v6518, %v6532
      %v6558 = vadd.f32 %v6519, %v6532
      %v6559 = vadd.f32 %v6520, %v6532
      %v6560 = vadd.f32 %v6521, %v6532
      %v6561 = vadd.f32 %v6522, %v6532
      %v6562 = vadd.f32 %v6523, %v6532
      %v6563 = vadd.f32 %v6524, %v6532
      %v6564 = vadd.f32 %v6525, %v6532
      %v6565 = vadd.f32 %v6526, %v6532
      %v6566 = vmax.f32 %v6534, 0.0
      %v6567 = vmax.f32 %v6535, 0.0
      %v6568 = vmax.f32 %v6536, 0.0
      %v6569 = vmax.f32 %v6537, 0.0
      %v6570 = vmax.f32 %v6538, 0.0
      %v6571 = vmax.f32 %v6539, 0.0
      %v6572 = vmax.f32 %v6540, 0.0
      %v6573 = vmax.f32 %v6541, 0.0
      %v6574 = vmax.f32 %v6542, 0.0
      %v6575 = vmax.f32 %v6543, 0.0
      %v6576 = vmax.f32 %v6544, 0.0
      %v6577 = vmax.f32 %v6545, 0.0
      %v6578 = vmax.f32 %v6546, 0.0
      %v6579 = vmax.f32 %v6547, 0.0
      %v6580 = vmax.f32 %v6548, 0.0
      %v6581 = vmax.f32 %v6549, 0.0
      %v6582 = vmax.f32 %v6550, 0.0
      %v6583 = vmax.f32 %v6551, 0.0
      %v6584 = vmax.f32 %v6552, 0.0
      %v6585 = vmax.f32 %v6553, 0.0
      %v6586 = vmax.f32 %v6554, 0.0
      %v6587 = vmax.f32 %v6555, 0.0
      %v6588 = vmax.f32 %v6556, 0.0
      %v6589 = vmax.f32 %v6557, 0.0
      %v6590 = vmax.f32 %v6558, 0.0
      %v6591 = vmax.f32 %v6559, 0.0
      %v6592 = vmax.f32 %v6560, 0.0
      %v6593 = vmax.f32 %v6561, 0.0
      %v6594 = vmax.f32 %v6562, 0.0
      %v6595 = vmax.f32 %v6563, 0.0
      %v6596 = vmax.f32 %v6564, 0.0
      %v6597 = vmax.f32 %v6565, 0.0
      %6598 = vxpose.xlu0.b32.start [1/16] %v6566, 128
      %6599 = vxpose.xlu0.b32.cont [2/16] %v6567, 128
      %6600 = vxpose.xlu0.b32.cont [3/16] %v6568, 128
      %6601 = vxpose.xlu0.b32.cont [4/16] %v6569, 128
      %6602 = vxpose.xlu0.b32.cont [5/16] %v6570, 128
      %6603 = vxpose.xlu0.b32.cont [6/16] %v6571, 128
      %6604 = vxpose.xlu0.b32.cont [7/16] %v6572, 128
      %6605 = vxpose.xlu0.b32.cont [8/16] %v6573, 128
      %6606 = vxpose.xlu0.b32.cont [9/16] %v6574, 128
      %6607 = vxpose.xlu0.b32.cont [10/16] %v6575, 128
      %6608 = vxpose.xlu0.b32.cont [11/16] %v6576, 128
      %6609 = vxpose.xlu0.b32.cont [12/16] %v6577, 128
      %6610 = vxpose.xlu0.b32.cont [13/16] %v6578, 128
      %6611 = vxpose.xlu0.b32.cont [14/16] %v6579, 128
      %6612 = vxpose.xlu0.b32.cont [15/16] %v6580, 128
      %6613 = vxpose.xlu0.b32.end [16/16] %v6581, 128
      %v6614 = vpop.trf.xlu0
      %v6615 = vpop.trf.xlu0
      %v6616 = vpop.trf.xlu0
      %v6617 = vpop.trf.xlu0
      %v6618 = vpop.trf.xlu0
      %v6619 = vpop.trf.xlu0
      %v6620 = vpop.trf.xlu0
      %v6621 = vpop.trf.xlu0
      %v6622 = vpop.trf.xlu0
      %v6623 = vpop.trf.xlu0
      %v6624 = vpop.trf.xlu0
      %v6625 = vpop.trf.xlu0
      %v6626 = vpop.trf.xlu0
      %v6627 = vpop.trf.xlu0
      %v6628 = vpop.trf.xlu0
      %v6629 = vpop.trf.xlu0
      %6630 = vxpose.xlu0.b32.start [1/16] %v6582, 128
      %6631 = vxpose.xlu0.b32.cont [2/16] %v6583, 128
      %6632 = vxpose.xlu0.b32.cont [3/16] %v6584, 128
      %6633 = vxpose.xlu0.b32.cont [4/16] %v6585, 128
      %6634 = vxpose.xlu0.b32.cont [5/16] %v6586, 128
      %6635 = vxpose.xlu0.b32.cont [6/16] %v6587, 128
      %6636 = vxpose.xlu0.b32.cont [7/16] %v6588, 128
      %6637 = vxpose.xlu0.b32.cont [8/16] %v6589, 128
      %6638 = vxpose.xlu0.b32.cont [9/16] %v6590, 128
      %6639 = vxpose.xlu0.b32.cont [10/16] %v6591, 128
      %6640 = vxpose.xlu0.b32.cont [11/16] %v6592, 128
      %6641 = vxpose.xlu0.b32.cont [12/16] %v6593, 128
      %6642 = vxpose.xlu0.b32.cont [13/16] %v6594, 128
      %6643 = vxpose.xlu0.b32.cont [14/16] %v6595, 128
      %6644 = vxpose.xlu0.b32.cont [15/16] %v6596, 128
      %6645 = vxpose.xlu0.b32.end [16/16] %v6597, 128
      %v6646 = vpop.trf.xlu0
      %v6647 = vpop.trf.xlu0
      %v6648 = vpop.trf.xlu0
      %v6649 = vpop.trf.xlu0
      %v6650 = vpop.trf.xlu0
      %v6651 = vpop.trf.xlu0
      %v6652 = vpop.trf.xlu0
      %v6653 = vpop.trf.xlu0
      %v6654 = vpop.trf.xlu0
      %v6655 = vpop.trf.xlu0
      %v6656 = vpop.trf.xlu0
      %v6657 = vpop.trf.xlu0
      %v6658 = vpop.trf.xlu0
      %v6659 = vpop.trf.xlu0
      %v6660 = vpop.trf.xlu0
      %v6661 = vpop.trf.xlu0
      %6662 = vst [vmem:[%s314] sm:$0xff] %v6614
      %6663 = vst [vmem:[%s314 + $0x8] sm:$0xff] %v6646
      %s6664 = smul.u32 2, %s23
      %p6665 = scmp.lt.s32.totalorder %s22, 1
      %s6666 = scalar_select %p6665, %s22, 1
      %p6667 = scmp.lt.s32.totalorder %s6664, 1
      %s6668 = scalar_select %p6667, %s6664, 1
      %s6669 = smul.addr %s6666, 2
      %s6670 = sadd.s32 %s6668, %s6669
      %s6671 = smul.addr %s6670, 8
      %s6672 = scalar_lea.vmem %s7, %s6671
      // Predicated region
      $region49: #{inconv_forward.1} parent=47 // pred_check
        %p6673 = pneg %p204
      $region50: #{inconv_forward.1} parent=47 // pred_check_branch
        %6675 = sbr.rel (%p6673) target = $region52
      $region51: #{inconv_forward.1} parent=47 // pred_region
        %s6676 = smul.u32 2, %s23
      $region52: #{inconv_forward.1} parent=47 // pred_fallthru
        _
    $region48: #{inconv_forward.1} parent=5 // pred_fallthru
      _
    %p6677 = scmp.le.s32.totalorder 2, %s13
    // Predicated region
    $region53: #{inconv_forward.1} parent=5 // pred_check
      %p6678 = pneg %p6677
    $region54: #{inconv_forward.1} parent=5 // pred_check_branch
      %6680 = sbr.rel (%p6678) target = $region56
    $region55: #{inconv_forward.1} parent=5 // pred_region
      %s6681 = ssub.s32 %s13, 2
      // Predicated region
      $region57: #{inconv_forward.1} parent=55 // pred_check
        %p6682 = pneg %p210
      $region58: #{inconv_forward.1} parent=55 // pred_check_branch
        %6684 = sbr.rel (%p6682) target = $region60
      $region59: #{inconv_forward.1} parent=55 // pred_region
        %s6685 = smul.u32 2, %s25
        %p6686 = scmp.lt.s32.totalorder %s24, 1
        %s6687 = scalar_select %p6686, %s24, 1
        %p6688 = scmp.lt.s32.totalorder %s6685, 1
        %s6689 = scalar_select %p6688, %s6685, 1
        %s6690 = smul.addr %s6687, 2
        %s6691 = sadd.s32 %s6689, %s6690
        %s6692 = smul.addr %s6691, 8
        %s6693 = scalar_lea.vmem %s7, %s6692
      $region60: #{inconv_forward.1} parent=55 // pred_fallthru
        _
    $region56: #{inconv_forward.1} parent=5 // pred_fallthru
      _
  $region6: #{inconv_forward.1} parent=0 // loop_footer
    %s17 = sadd.s32 1, %s13
  $region7: #{inconv_forward.1} parent=0 // loop_footer_branch
    %12 = sbr.rel target = $region3
  $region8: #{inconv_forward.1} parent=0 // loop_exit
    _

</llo_original>
